<compile_context>
chip_gen: v7x
topology: tpu7x:2x2x1
jax: 0.10.0
libtpu: 0.0.40
codegen_flags: <defaults>
</compile_context>

<pallas_src>
import jax
import jax.numpy as jnp
from jax import lax
from jax.experimental import pallas as pl
from jax.experimental.pallas import tpu as pltpu

EPS = 1e-5  # nn.InstanceNorm2d default (affine=False, biased variance)


def _round_up(x, m):
    return ((x + m - 1) // m) * m


def _reflect_pad1(x):
    # nn.ReflectionPad2d(1) on NCHW input (JAX-side index manipulation only).
    return jnp.pad(x, ((0, 0), (0, 0), (1, 1), (1, 1)), mode="reflect")


# ---------------- Pallas kernel (entire residual block, hot path) ----------------

def _make_kernel(C, H, W, LP, OUT_L):
    Hp, Wp = H + 2, W + 2
    inv_hw = 1.0 / float(H * W)

    def kernel(xp_ref, w1_ref, w2_ref, col_ref, o_ref, hp_ref):
        # xp_ref : (C, LP)    reflection-padded input, flat rows of length Wp
        # w*_ref : (9, C, C)  per-tap weights, tap t = kh*3 + kw, [t, c_out, c_in]
        # col_ref: (1, OUT_L) int32 column-within-row index j in [0, Wp)
        # o_ref  : (C, OUT_L) output on the (H, Wp) row layout (cols >= W unused)
        # hp_ref : (C, LP)    VMEM scratch holding the reflection-padded h
        col = col_ref[...]                 # (1, OUT_L)
        valid = col < W                    # real spatial positions (j < W)

        def conv3x3(src_ref, w_ref):
            # 9 accumulated tap matmuls; each tap is a shifted contiguous
            # window of the flat padded activation (static slice, no im2col).
            acc = jnp.zeros((C, OUT_L), jnp.float32)
            for kh in range(3):
                for kw in range(3):
                    t = kh * 3 + kw
                    off = kh * Wp + kw
                    acc = acc + jnp.dot(
                        w_ref[t],
                        src_ref[:, off:off + OUT_L],
                        preferred_element_type=jnp.float32)
            return acc

        def inst_norm(y):
            # One-pass masked InstanceNorm: var = E[y^2] - mean^2 over valid lanes.
            ym = jnp.where(valid, y, 0.0)
            s1 = jnp.sum(ym, axis=1, keepdims=True)
            s2 = jnp.sum(ym * ym, axis=1, keepdims=True)
            mean = s1 * inv_hw
            var = s2 * inv_hw - mean * mean
            return (y - mean) * lax.rsqrt(var + EPS)

        # ---- stage 1: conv1 + InstanceNorm + ReLU (bias cancelled by IN) ----
        h = jnp.maximum(inst_norm(conv3x3(xp_ref, w1_ref)), 0.0)

        # ---- rebuild reflection-padded h in VMEM (h never leaves VMEM) ------
        hp_ref[...] = jnp.zeros((C, LP), jnp.float32)
        hp_ref[:, Wp + 1:Wp + 1 + OUT_L] = h           # interior (rows 1..H)
        # Left/right border columns of rows 1..H: col 0 <- col 2, col W+1 <- col W-1.
        win = hp_ref[:, Wp:Wp + OUT_L]
        win_l = hp_ref[:, Wp + 2:Wp + 2 + OUT_L]
        win_r = hp_ref[:, Wp - 2:Wp - 2 + OUT_L]
        hp_ref[:, Wp:Wp + OUT_L] = jnp.where(
            col == 0, win_l, jnp.where(col == W + 1, win_r, win))
        # Top/bottom border rows: row 0 <- row 2, row H+1 <- row H-1.
        hp_ref[:, 0:Wp] = hp_ref[:, 2 * Wp:3 * Wp]
        hp_ref[:, (H + 1) * Wp:(H + 2) * Wp] = hp_ref[:, (H - 1) * Wp:H * Wp]

        # ---- stage 2: conv2 + InstanceNorm + residual add -------------------
        y2 = inst_norm(conv3x3(hp_ref, w2_ref))
        # Residual x(i, j) == xp[i+1, j+1] == xp_flat[p + Wp + 1]: a single slice,
        # so no separate x input stream is needed.
        o_ref[...] = xp_ref[:, Wp + 1:Wp + 1 + OUT_L] + y2

    return kernel


def residual_block(x, w1, b1, w2, b2):
    # x: (N, C, H, W) f32; w*: (C, C, 3, 3); b*: (C,)
    # Biases are accepted for API parity but are mathematically a no-op through
    # the affine-free InstanceNorm (mean subtraction cancels them exactly).
    del b1, b2
    N, C, H, W = x.shape
    Hp, Wp = H + 2, W + 2
    OUT_L = H * Wp                                   # output row layout (H, Wp)
    LP = _round_up(Hp * Wp + 2, 128)                 # +2 slack for the (2,2) tap

    xp = _reflect_pad1(x).reshape(N, C, Hp * Wp)
    xp = jnp.pad(xp, ((0, 0), (0, 0), (0, LP - Hp * Wp)))
    # Per-tap weight layout: (kh, kw, c_out, c_in) -> (9, C, C).
    w1t = jnp.transpose(w1, (2, 3, 0, 1)).reshape(9, C, C)
    w2t = jnp.transpose(w2, (2, 3, 0, 1)).reshape(9, C, C)
    colpos = (jnp.arange(OUT_L, dtype=jnp.int32) % Wp).reshape(1, OUT_L)

    kernel = _make_kernel(C, H, W, LP, OUT_L)
    out_flat = pl.pallas_call(
        kernel,
        out_shape=jax.ShapeDtypeStruct((N, C, OUT_L), jnp.float32),
        grid_spec=pltpu.PrefetchScalarGridSpec(
            num_scalar_prefetch=0,
            grid=(N,),
            in_specs=[
                pl.BlockSpec((None, C, LP), lambda n: (n, 0, 0)),
                pl.BlockSpec((9, C, C), lambda n: (0, 0, 0)),
                pl.BlockSpec((9, C, C), lambda n: (0, 0, 0)),
                pl.BlockSpec((1, OUT_L), lambda n: (0, 0)),
            ],
            out_specs=pl.BlockSpec((None, C, OUT_L), lambda n: (n, 0, 0)),
            scratch_shapes=[pltpu.VMEM((C, LP), jnp.float32)],
        ),
        compiler_params=pltpu.CompilerParams(
            dimension_semantics=("parallel",)),
    )(xp, w1t, w2t, colpos)

    # Drop the 2 padding columns per row and restore NCHW.
    return out_flat.reshape(N, C, H, Wp)[:, :, :, :W]


# ---------------- Pure-JAX reference (PyTorch semantics) ----------------

def _reference(x, w1, b1, w2, b2):
    def conv(a, w, b):
        out = lax.conv_general_dilated(
            a, w, window_strides=(1, 1), padding="VALID",
            dimension_numbers=("NCHW", "OIHW", "NCHW"))
        return out + b[None, :, None, None]

    def inorm(a):
        m = jnp.mean(a, axis=(2, 3), keepdims=True)
        v = jnp.mean((a - m) ** 2, axis=(2, 3), keepdims=True)
        return (a - m) / jnp.sqrt(v + EPS)

    h = jnp.maximum(inorm(conv(_reflect_pad1(x), w1, b1)), 0.0)
    return x + inorm(conv(_reflect_pad1(h), w2, b2))


if __name__ == "__main__":
    N, C, H, W = 2, 4, 16, 16
    key = jax.random.PRNGKey(0)
    kx, k1, k2, k3, k4 = jax.random.split(key, 5)

    x = jax.random.normal(kx, (N, C, H, W), jnp.float32)
    # Deterministic Conv2d-style uniform init: bound = 1/sqrt(fan_in), fan_in = C*3*3.
    bound = 1.0 / float((C * 9) ** 0.5)
    w1 = jax.random.uniform(k1, (C, C, 3, 3), jnp.float32, -bound, bound)
    b1 = jax.random.uniform(k2, (C,), jnp.float32, -bound, bound)
    w2 = jax.random.uniform(k3, (C, C, 3, 3), jnp.float32, -bound, bound)
    b2 = jax.random.uniform(k4, (C,), jnp.float32, -bound, bound)

    fn = jax.jit(residual_block)
    out = jax.block_until_ready(fn(x, w1, b1, w2, b2))
    ref = jax.block_until_ready(_reference(x, w1, b1, w2, b2))

    assert out.shape == (N, C, H, W)
    max_err = float(jnp.max(jnp.abs(out - ref)))
    assert jnp.allclose(out, ref, atol=1e-4, rtol=1e-4), f"max_err={max_err}"
    print("KERNEL_OK")
</pallas_src>

<mosaic_0001>
module attributes {stable_mosaic.version = 11 : i64} {
  func.func @kernel(%arg0: i32, %arg1: memref<1x4x384xf32, #tpu.memory_space<vmem>>, %arg2: memref<9x4x4xf32, #tpu.memory_space<vmem>>, %arg3: memref<9x4x4xf32, #tpu.memory_space<vmem>>, %arg4: memref<1x288xi32, #tpu.memory_space<vmem>>, %arg5: memref<1x4x288xf32, #tpu.memory_space<vmem>>, %arg6: memref<4x384xf32, #tpu.memory_space<vmem>>) attributes {dimension_semantics = [#tpu.dimension_semantics<parallel>], iteration_bounds = array<i64: 2>, scalar_prefetch = 0 : i64, scratch_operands = 1 : i64, tpu.core_type = #tpu.core_type<tc>, window_params = [{transform_indices = @transform_0, window_bounds = array<i64: 1, 4, 384>}, {pipeline_mode = #tpu.pipeline_mode<synchronous>, transform_indices = @transform_1, window_bounds = array<i64: 9, 4, 4>}, {pipeline_mode = #tpu.pipeline_mode<synchronous>, transform_indices = @transform_2, window_bounds = array<i64: 9, 4, 4>}, {pipeline_mode = #tpu.pipeline_mode<synchronous>, transform_indices = @transform_3, window_bounds = array<i64: 1, 288>}, {transform_indices = @transform_4, window_bounds = array<i64: 1, 4, 288>}]} {
    %c0 = arith.constant 0 : index
    %c0_0 = arith.constant 0 : index
    %0 = vector.load %arg4[%c0, %c0_0] : memref<1x288xi32, #tpu.memory_space<vmem>>, vector<1x288xi32>
    %c16_i32 = arith.constant 16 : i32
    %1 = vector.broadcast %c16_i32 : i32 to vector<1x288xi32>
    %2 = arith.cmpi slt, %0, %1 : vector<1x288xi32>
    %cst = arith.constant 0.000000e+00 : f32
    %3 = vector.broadcast %cst : f32 to vector<4x288xf32>
    %c0_1 = arith.constant 0 : index
    %c0_2 = arith.constant 0 : index
    %c0_3 = arith.constant 0 : index
    %4 = vector.load %arg2[%c0_1, %c0_2, %c0_3] : memref<9x4x4xf32, #tpu.memory_space<vmem>>, vector<1x4x4xf32>
    %5 = vector.shape_cast %4 : vector<1x4x4xf32> to vector<4x4xf32>
    %c0_4 = arith.constant 0 : index
    %c0_5 = arith.constant 0 : index
    %c0_6 = arith.constant 0 : index
    %6 = vector.load %arg1[%c0_4, %c0_5, %c0_6] : memref<1x4x384xf32, #tpu.memory_space<vmem>>, vector<1x4x288xf32>
    %7 = vector.shape_cast %6 : vector<1x4x288xf32> to vector<4x288xf32>
    %cst_7 = arith.constant dense<0.000000e+00> : vector<4x288xf32>
    %8 = tpu.matmul %5, %7, %cst_7 {dimension_numbers = #tpu.dot_dimension_numbers<[1], [0], [0], [1], [0, 0, 1, 1], [], []>} : vector<4x4xf32>, vector<4x288xf32>, vector<4x288xf32> -> vector<4x288xf32>
    %9 = arith.addf %3, %8 : vector<4x288xf32>
    %c1 = arith.constant 1 : index
    %c0_8 = arith.constant 0 : index
    %c0_9 = arith.constant 0 : index
    %10 = vector.load %arg2[%c1, %c0_8, %c0_9] : memref<9x4x4xf32, #tpu.memory_space<vmem>>, vector<1x4x4xf32>
    %11 = vector.shape_cast %10 : vector<1x4x4xf32> to vector<4x4xf32>
    %c0_10 = arith.constant 0 : index
    %c0_11 = arith.constant 0 : index
    %c1_12 = arith.constant 1 : index
    %12 = vector.load %arg1[%c0_10, %c0_11, %c1_12] : memref<1x4x384xf32, #tpu.memory_space<vmem>>, vector<1x4x288xf32>
    %13 = vector.shape_cast %12 : vector<1x4x288xf32> to vector<4x288xf32>
    %cst_13 = arith.constant dense<0.000000e+00> : vector<4x288xf32>
    %14 = tpu.matmul %11, %13, %cst_13 {dimension_numbers = #tpu.dot_dimension_numbers<[1], [0], [0], [1], [0, 0, 1, 1], [], []>} : vector<4x4xf32>, vector<4x288xf32>, vector<4x288xf32> -> vector<4x288xf32>
    %15 = arith.addf %9, %14 : vector<4x288xf32>
    %c2 = arith.constant 2 : index
    %c0_14 = arith.constant 0 : index
    %c0_15 = arith.constant 0 : index
    %16 = vector.load %arg2[%c2, %c0_14, %c0_15] : memref<9x4x4xf32, #tpu.memory_space<vmem>>, vector<1x4x4xf32>
    %17 = vector.shape_cast %16 : vector<1x4x4xf32> to vector<4x4xf32>
    %c0_16 = arith.constant 0 : index
    %c0_17 = arith.constant 0 : index
    %c2_18 = arith.constant 2 : index
    %18 = vector.load %arg1[%c0_16, %c0_17, %c2_18] : memref<1x4x384xf32, #tpu.memory_space<vmem>>, vector<1x4x288xf32>
    %19 = vector.shape_cast %18 : vector<1x4x288xf32> to vector<4x288xf32>
    %cst_19 = arith.constant dense<0.000000e+00> : vector<4x288xf32>
    %20 = tpu.matmul %17, %19, %cst_19 {dimension_numbers = #tpu.dot_dimension_numbers<[1], [0], [0], [1], [0, 0, 1, 1], [], []>} : vector<4x4xf32>, vector<4x288xf32>, vector<4x288xf32> -> vector<4x288xf32>
    %21 = arith.addf %15, %20 : vector<4x288xf32>
    %c3 = arith.constant 3 : index
    %c0_20 = arith.constant 0 : index
    %c0_21 = arith.constant 0 : index
    %22 = vector.load %arg2[%c3, %c0_20, %c0_21] : memref<9x4x4xf32, #tpu.memory_space<vmem>>, vector<1x4x4xf32>
    %23 = vector.shape_cast %22 : vector<1x4x4xf32> to vector<4x4xf32>
    %c0_22 = arith.constant 0 : index
    %c0_23 = arith.constant 0 : index
    %c18 = arith.constant 18 : index
    %24 = vector.load %arg1[%c0_22, %c0_23, %c18] : memref<1x4x384xf32, #tpu.memory_space<vmem>>, vector<1x4x288xf32>
    %25 = vector.shape_cast %24 : vector<1x4x288xf32> to vector<4x288xf32>
    %cst_24 = arith.constant dense<0.000000e+00> : vector<4x288xf32>
    %26 = tpu.matmul %23, %25, %cst_24 {dimension_numbers = #tpu.dot_dimension_numbers<[1], [0], [0], [1], [0, 0, 1, 1], [], []>} : vector<4x4xf32>, vector<4x288xf32>, vector<4x288xf32> -> vector<4x288xf32>
    %27 = arith.addf %21, %26 : vector<4x288xf32>
    %c4 = arith.constant 4 : index
    %c0_25 = arith.constant 0 : index
    %c0_26 = arith.constant 0 : index
    %28 = vector.load %arg2[%c4, %c0_25, %c0_26] : memref<9x4x4xf32, #tpu.memory_space<vmem>>, vector<1x4x4xf32>
    %29 = vector.shape_cast %28 : vector<1x4x4xf32> to vector<4x4xf32>
    %c0_27 = arith.constant 0 : index
    %c0_28 = arith.constant 0 : index
    %c19 = arith.constant 19 : index
    %30 = vector.load %arg1[%c0_27, %c0_28, %c19] : memref<1x4x384xf32, #tpu.memory_space<vmem>>, vector<1x4x288xf32>
    %31 = vector.shape_cast %30 : vector<1x4x288xf32> to vector<4x288xf32>
    %cst_29 = arith.constant dense<0.000000e+00> : vector<4x288xf32>
    %32 = tpu.matmul %29, %31, %cst_29 {dimension_numbers = #tpu.dot_dimension_numbers<[1], [0], [0], [1], [0, 0, 1, 1], [], []>} : vector<4x4xf32>, vector<4x288xf32>, vector<4x288xf32> -> vector<4x288xf32>
    %33 = arith.addf %27, %32 : vector<4x288xf32>
    %c5 = arith.constant 5 : index
    %c0_30 = arith.constant 0 : index
    %c0_31 = arith.constant 0 : index
    %34 = vector.load %arg2[%c5, %c0_30, %c0_31] : memref<9x4x4xf32, #tpu.memory_space<vmem>>, vector<1x4x4xf32>
    %35 = vector.shape_cast %34 : vector<1x4x4xf32> to vector<4x4xf32>
    %c0_32 = arith.constant 0 : index
    %c0_33 = arith.constant 0 : index
    %c20 = arith.constant 20 : index
    %36 = vector.load %arg1[%c0_32, %c0_33, %c20] : memref<1x4x384xf32, #tpu.memory_space<vmem>>, vector<1x4x288xf32>
    %37 = vector.shape_cast %36 : vector<1x4x288xf32> to vector<4x288xf32>
    %cst_34 = arith.constant dense<0.000000e+00> : vector<4x288xf32>
    %38 = tpu.matmul %35, %37, %cst_34 {dimension_numbers = #tpu.dot_dimension_numbers<[1], [0], [0], [1], [0, 0, 1, 1], [], []>} : vector<4x4xf32>, vector<4x288xf32>, vector<4x288xf32> -> vector<4x288xf32>
    %39 = arith.addf %33, %38 : vector<4x288xf32>
    %c6 = arith.constant 6 : index
    %c0_35 = arith.constant 0 : index
    %c0_36 = arith.constant 0 : index
    %40 = vector.load %arg2[%c6, %c0_35, %c0_36] : memref<9x4x4xf32, #tpu.memory_space<vmem>>, vector<1x4x4xf32>
    %41 = vector.shape_cast %40 : vector<1x4x4xf32> to vector<4x4xf32>
    %c0_37 = arith.constant 0 : index
    %c0_38 = arith.constant 0 : index
    %c36 = arith.constant 36 : index
    %42 = vector.load %arg1[%c0_37, %c0_38, %c36] : memref<1x4x384xf32, #tpu.memory_space<vmem>>, vector<1x4x288xf32>
    %43 = vector.shape_cast %42 : vector<1x4x288xf32> to vector<4x288xf32>
    %cst_39 = arith.constant dense<0.000000e+00> : vector<4x288xf32>
    %44 = tpu.matmul %41, %43, %cst_39 {dimension_numbers = #tpu.dot_dimension_numbers<[1], [0], [0], [1], [0, 0, 1, 1], [], []>} : vector<4x4xf32>, vector<4x288xf32>, vector<4x288xf32> -> vector<4x288xf32>
    %45 = arith.addf %39, %44 : vector<4x288xf32>
    %c7 = arith.constant 7 : index
    %c0_40 = arith.constant 0 : index
    %c0_41 = arith.constant 0 : index
    %46 = vector.load %arg2[%c7, %c0_40, %c0_41] : memref<9x4x4xf32, #tpu.memory_space<vmem>>, vector<1x4x4xf32>
    %47 = vector.shape_cast %46 : vector<1x4x4xf32> to vector<4x4xf32>
    %c0_42 = arith.constant 0 : index
    %c0_43 = arith.constant 0 : index
    %c37 = arith.constant 37 : index
    %48 = vector.load %arg1[%c0_42, %c0_43, %c37] : memref<1x4x384xf32, #tpu.memory_space<vmem>>, vector<1x4x288xf32>
    %49 = vector.shape_cast %48 : vector<1x4x288xf32> to vector<4x288xf32>
    %cst_44 = arith.constant dense<0.000000e+00> : vector<4x288xf32>
    %50 = tpu.matmul %47, %49, %cst_44 {dimension_numbers = #tpu.dot_dimension_numbers<[1], [0], [0], [1], [0, 0, 1, 1], [], []>} : vector<4x4xf32>, vector<4x288xf32>, vector<4x288xf32> -> vector<4x288xf32>
    %51 = arith.addf %45, %50 : vector<4x288xf32>
    %c8 = arith.constant 8 : index
    %c0_45 = arith.constant 0 : index
    %c0_46 = arith.constant 0 : index
    %52 = vector.load %arg2[%c8, %c0_45, %c0_46] : memref<9x4x4xf32, #tpu.memory_space<vmem>>, vector<1x4x4xf32>
    %53 = vector.shape_cast %52 : vector<1x4x4xf32> to vector<4x4xf32>
    %c0_47 = arith.constant 0 : index
    %c0_48 = arith.constant 0 : index
    %c38 = arith.constant 38 : index
    %54 = vector.load %arg1[%c0_47, %c0_48, %c38] : memref<1x4x384xf32, #tpu.memory_space<vmem>>, vector<1x4x288xf32>
    %55 = vector.shape_cast %54 : vector<1x4x288xf32> to vector<4x288xf32>
    %cst_49 = arith.constant dense<0.000000e+00> : vector<4x288xf32>
    %56 = tpu.matmul %53, %55, %cst_49 {dimension_numbers = #tpu.dot_dimension_numbers<[1], [0], [0], [1], [0, 0, 1, 1], [], []>} : vector<4x4xf32>, vector<4x288xf32>, vector<4x288xf32> -> vector<4x288xf32>
    %57 = arith.addf %51, %56 : vector<4x288xf32>
    %cst_50 = arith.constant 0.000000e+00 : f32
    %58 = vector.shape_cast %2 : vector<1x288xi1> to vector<1x288xi1>
    %59 = vector.broadcast %58 : vector<1x288xi1> to vector<4x288xi1>
    %60 = vector.broadcast %cst_50 : f32 to vector<4x288xf32>
    %61 = arith.select %59, %57, %60 : vector<4x288xi1>, vector<4x288xf32>
    %cst_51 = arith.constant dense<0.000000e+00> : vector<4xf32>
    %62 = vector.multi_reduction <add>, %61, %cst_51 [1] : vector<4x288xf32> to vector<4xf32>
    %63 = vector.shape_cast %62 : vector<4xf32> to vector<4x1xf32>
    %64 = arith.mulf %61, %61 : vector<4x288xf32>
    %cst_52 = arith.constant dense<0.000000e+00> : vector<4xf32>
    %65 = vector.multi_reduction <add>, %64, %cst_52 [1] : vector<4x288xf32> to vector<4xf32>
    %66 = vector.shape_cast %65 : vector<4xf32> to vector<4x1xf32>
    %cst_53 = arith.constant 3.906250e-03 : f32
    %67 = vector.broadcast %cst_53 : f32 to vector<4x1xf32>
    %68 = arith.mulf %63, %67 : vector<4x1xf32>
    %cst_54 = arith.constant 3.906250e-03 : f32
    %69 = vector.broadcast %cst_54 : f32 to vector<4x1xf32>
    %70 = arith.mulf %66, %69 : vector<4x1xf32>
    %71 = arith.mulf %68, %68 : vector<4x1xf32>
    %72 = arith.subf %70, %71 : vector<4x1xf32>
    %73 = vector.broadcast %68 : vector<4x1xf32> to vector<4x288xf32>
    %74 = arith.subf %57, %73 : vector<4x288xf32>
    %cst_55 = arith.constant 9.99999974E-6 : f32
    %75 = vector.broadcast %cst_55 : f32 to vector<4x1xf32>
    %76 = arith.addf %72, %75 : vector<4x1xf32>
    %77 = math.rsqrt %76 : vector<4x1xf32>
    %78 = vector.broadcast %77 : vector<4x1xf32> to vector<4x288xf32>
    %79 = arith.mulf %74, %78 : vector<4x288xf32>
    %cst_56 = arith.constant 0.000000e+00 : f32
    %80 = vector.broadcast %cst_56 : f32 to vector<4x288xf32>
    %81 = arith.maximumf %79, %80 : vector<4x288xf32>
    %cst_57 = arith.constant 0.000000e+00 : f32
    %82 = vector.broadcast %cst_57 : f32 to vector<4x384xf32>
    %c0_58 = arith.constant 0 : index
    %c0_59 = arith.constant 0 : index
    %83 = vector.load %arg6[%c0_58, %c0_59] : memref<4x384xf32, #tpu.memory_space<vmem>>, vector<4x384xf32>
    tpu.vector_store %arg6[%c0_58, %c0_59], %82 {strides = array<i32>} : memref<4x384xf32, #tpu.memory_space<vmem>>, vector<4x384xf32>,
    %c0_60 = arith.constant 0 : index
    %c19_61 = arith.constant 19 : index
    %84 = vector.load %arg6[%c0_60, %c19_61] : memref<4x384xf32, #tpu.memory_space<vmem>>, vector<4x288xf32>
    tpu.vector_store %arg6[%c0_60, %c19_61], %81 {strides = array<i32>} : memref<4x384xf32, #tpu.memory_space<vmem>>, vector<4x288xf32>,
    %c0_62 = arith.constant 0 : index
    %c18_63 = arith.constant 18 : index
    %85 = vector.load %arg6[%c0_62, %c18_63] : memref<4x384xf32, #tpu.memory_space<vmem>>, vector<4x288xf32>
    %c0_64 = arith.constant 0 : index
    %c20_65 = arith.constant 20 : index
    %86 = vector.load %arg6[%c0_64, %c20_65] : memref<4x384xf32, #tpu.memory_space<vmem>>, vector<4x288xf32>
    %c0_66 = arith.constant 0 : index
    %c16 = arith.constant 16 : index
    %87 = vector.load %arg6[%c0_66, %c16] : memref<4x384xf32, #tpu.memory_space<vmem>>, vector<4x288xf32>
    %c0_i32 = arith.constant 0 : i32
    %88 = vector.broadcast %c0_i32 : i32 to vector<1x288xi32>
    %89 = arith.cmpi eq, %0, %88 : vector<1x288xi32>
    %c17_i32 = arith.constant 17 : i32
    %90 = vector.broadcast %c17_i32 : i32 to vector<1x288xi32>
    %91 = arith.cmpi eq, %0, %90 : vector<1x288xi32>
    %92 = vector.shape_cast %91 : vector<1x288xi1> to vector<1x288xi1>
    %93 = vector.broadcast %92 : vector<1x288xi1> to vector<4x288xi1>
    %94 = arith.select %93, %87, %85 : vector<4x288xi1>, vector<4x288xf32>
    %95 = vector.shape_cast %89 : vector<1x288xi1> to vector<1x288xi1>
    %96 = vector.broadcast %95 : vector<1x288xi1> to vector<4x288xi1>
    %97 = arith.select %96, %86, %94 : vector<4x288xi1>, vector<4x288xf32>
    %c0_67 = arith.constant 0 : index
    %c18_68 = arith.constant 18 : index
    %98 = vector.load %arg6[%c0_67, %c18_68] : memref<4x384xf32, #tpu.memory_space<vmem>>, vector<4x288xf32>
    tpu.vector_store %arg6[%c0_67, %c18_68], %97 {strides = array<i32>} : memref<4x384xf32, #tpu.memory_space<vmem>>, vector<4x288xf32>,
    %c0_69 = arith.constant 0 : index
    %c36_70 = arith.constant 36 : index
    %99 = vector.load %arg6[%c0_69, %c36_70] : memref<4x384xf32, #tpu.memory_space<vmem>>, vector<4x18xf32>
    %c0_71 = arith.constant 0 : index
    %c0_72 = arith.constant 0 : index
    %100 = vector.load %arg6[%c0_71, %c0_72] : memref<4x384xf32, #tpu.memory_space<vmem>>, vector<4x18xf32>
    tpu.vector_store %arg6[%c0_71, %c0_72], %99 {strides = array<i32>} : memref<4x384xf32, #tpu.memory_space<vmem>>, vector<4x18xf32>,
    %c0_73 = arith.constant 0 : index
    %c270 = arith.constant 270 : index
    %101 = vector.load %arg6[%c0_73, %c270] : memref<4x384xf32, #tpu.memory_space<vmem>>, vector<4x18xf32>
    %c0_74 = arith.constant 0 : index
    %c306 = arith.constant 306 : index
    %102 = vector.load %arg6[%c0_74, %c306] : memref<4x384xf32, #tpu.memory_space<vmem>>, vector<4x18xf32>
    tpu.vector_store %arg6[%c0_74, %c306], %101 {strides = array<i32>} : memref<4x384xf32, #tpu.memory_space<vmem>>, vector<4x18xf32>,
    %cst_75 = arith.constant 0.000000e+00 : f32
    %103 = vector.broadcast %cst_75 : f32 to vector<4x288xf32>
    %c0_76 = arith.constant 0 : index
    %c0_77 = arith.constant 0 : index
    %c0_78 = arith.constant 0 : index
    %104 = vector.load %arg3[%c0_76, %c0_77, %c0_78] : memref<9x4x4xf32, #tpu.memory_space<vmem>>, vector<1x4x4xf32>
    %105 = vector.shape_cast %104 : vector<1x4x4xf32> to vector<4x4xf32>
    %c0_79 = arith.constant 0 : index
    %c0_80 = arith.constant 0 : index
    %106 = vector.load %arg6[%c0_79, %c0_80] : memref<4x384xf32, #tpu.memory_space<vmem>>, vector<4x288xf32>
    %cst_81 = arith.constant dense<0.000000e+00> : vector<4x288xf32>
    %107 = tpu.matmul %105, %106, %cst_81 {dimension_numbers = #tpu.dot_dimension_numbers<[1], [0], [0], [1], [0, 0, 1, 1], [], []>} : vector<4x4xf32>, vector<4x288xf32>, vector<4x288xf32> -> vector<4x288xf32>
    %108 = arith.addf %103, %107 : vector<4x288xf32>
    %c1_82 = arith.constant 1 : index
    %c0_83 = arith.constant 0 : index
    %c0_84 = arith.constant 0 : index
    %109 = vector.load %arg3[%c1_82, %c0_83, %c0_84] : memref<9x4x4xf32, #tpu.memory_space<vmem>>, vector<1x4x4xf32>
    %110 = vector.shape_cast %109 : vector<1x4x4xf32> to vector<4x4xf32>
    %c0_85 = arith.constant 0 : index
    %c1_86 = arith.constant 1 : index
    %111 = vector.load %arg6[%c0_85, %c1_86] : memref<4x384xf32, #tpu.memory_space<vmem>>, vector<4x288xf32>
    %cst_87 = arith.constant dense<0.000000e+00> : vector<4x288xf32>
    %112 = tpu.matmul %110, %111, %cst_87 {dimension_numbers = #tpu.dot_dimension_numbers<[1], [0], [0], [1], [0, 0, 1, 1], [], []>} : vector<4x4xf32>, vector<4x288xf32>, vector<4x288xf32> -> vector<4x288xf32>
    %113 = arith.addf %108, %112 : vector<4x288xf32>
    %c2_88 = arith.constant 2 : index
    %c0_89 = arith.constant 0 : index
    %c0_90 = arith.constant 0 : index
    %114 = vector.load %arg3[%c2_88, %c0_89, %c0_90] : memref<9x4x4xf32, #tpu.memory_space<vmem>>, vector<1x4x4xf32>
    %115 = vector.shape_cast %114 : vector<1x4x4xf32> to vector<4x4xf32>
    %c0_91 = arith.constant 0 : index
    %c2_92 = arith.constant 2 : index
    %116 = vector.load %arg6[%c0_91, %c2_92] : memref<4x384xf32, #tpu.memory_space<vmem>>, vector<4x288xf32>
    %cst_93 = arith.constant dense<0.000000e+00> : vector<4x288xf32>
    %117 = tpu.matmul %115, %116, %cst_93 {dimension_numbers = #tpu.dot_dimension_numbers<[1], [0], [0], [1], [0, 0, 1, 1], [], []>} : vector<4x4xf32>, vector<4x288xf32>, vector<4x288xf32> -> vector<4x288xf32>
    %118 = arith.addf %113, %117 : vector<4x288xf32>
    %c3_94 = arith.constant 3 : index
    %c0_95 = arith.constant 0 : index
    %c0_96 = arith.constant 0 : index
    %119 = vector.load %arg3[%c3_94, %c0_95, %c0_96] : memref<9x4x4xf32, #tpu.memory_space<vmem>>, vector<1x4x4xf32>
    %120 = vector.shape_cast %119 : vector<1x4x4xf32> to vector<4x4xf32>
    %c0_97 = arith.constant 0 : index
    %c18_98 = arith.constant 18 : index
    %121 = vector.load %arg6[%c0_97, %c18_98] : memref<4x384xf32, #tpu.memory_space<vmem>>, vector<4x288xf32>
    %cst_99 = arith.constant dense<0.000000e+00> : vector<4x288xf32>
    %122 = tpu.matmul %120, %121, %cst_99 {dimension_numbers = #tpu.dot_dimension_numbers<[1], [0], [0], [1], [0, 0, 1, 1], [], []>} : vector<4x4xf32>, vector<4x288xf32>, vector<4x288xf32> -> vector<4x288xf32>
    %123 = arith.addf %118, %122 : vector<4x288xf32>
    %c4_100 = arith.constant 4 : index
    %c0_101 = arith.constant 0 : index
    %c0_102 = arith.constant 0 : index
    %124 = vector.load %arg3[%c4_100, %c0_101, %c0_102] : memref<9x4x4xf32, #tpu.memory_space<vmem>>, vector<1x4x4xf32>
    %125 = vector.shape_cast %124 : vector<1x4x4xf32> to vector<4x4xf32>
    %c0_103 = arith.constant 0 : index
    %c19_104 = arith.constant 19 : index
    %126 = vector.load %arg6[%c0_103, %c19_104] : memref<4x384xf32, #tpu.memory_space<vmem>>, vector<4x288xf32>
    %cst_105 = arith.constant dense<0.000000e+00> : vector<4x288xf32>
    %127 = tpu.matmul %125, %126, %cst_105 {dimension_numbers = #tpu.dot_dimension_numbers<[1], [0], [0], [1], [0, 0, 1, 1], [], []>} : vector<4x4xf32>, vector<4x288xf32>, vector<4x288xf32> -> vector<4x288xf32>
    %128 = arith.addf %123, %127 : vector<4x288xf32>
    %c5_106 = arith.constant 5 : index
    %c0_107 = arith.constant 0 : index
    %c0_108 = arith.constant 0 : index
    %129 = vector.load %arg3[%c5_106, %c0_107, %c0_108] : memref<9x4x4xf32, #tpu.memory_space<vmem>>, vector<1x4x4xf32>
    %130 = vector.shape_cast %129 : vector<1x4x4xf32> to vector<4x4xf32>
    %c0_109 = arith.constant 0 : index
    %c20_110 = arith.constant 20 : index
    %131 = vector.load %arg6[%c0_109, %c20_110] : memref<4x384xf32, #tpu.memory_space<vmem>>, vector<4x288xf32>
    %cst_111 = arith.constant dense<0.000000e+00> : vector<4x288xf32>
    %132 = tpu.matmul %130, %131, %cst_111 {dimension_numbers = #tpu.dot_dimension_numbers<[1], [0], [0], [1], [0, 0, 1, 1], [], []>} : vector<4x4xf32>, vector<4x288xf32>, vector<4x288xf32> -> vector<4x288xf32>
    %133 = arith.addf %128, %132 : vector<4x288xf32>
    %c6_112 = arith.constant 6 : index
    %c0_113 = arith.constant 0 : index
    %c0_114 = arith.constant 0 : index
    %134 = vector.load %arg3[%c6_112, %c0_113, %c0_114] : memref<9x4x4xf32, #tpu.memory_space<vmem>>, vector<1x4x4xf32>
    %135 = vector.shape_cast %134 : vector<1x4x4xf32> to vector<4x4xf32>
    %c0_115 = arith.constant 0 : index
    %c36_116 = arith.constant 36 : index
    %136 = vector.load %arg6[%c0_115, %c36_116] : memref<4x384xf32, #tpu.memory_space<vmem>>, vector<4x288xf32>
    %cst_117 = arith.constant dense<0.000000e+00> : vector<4x288xf32>
    %137 = tpu.matmul %135, %136, %cst_117 {dimension_numbers = #tpu.dot_dimension_numbers<[1], [0], [0], [1], [0, 0, 1, 1], [], []>} : vector<4x4xf32>, vector<4x288xf32>, vector<4x288xf32> -> vector<4x288xf32>
    %138 = arith.addf %133, %137 : vector<4x288xf32>
    %c7_118 = arith.constant 7 : index
    %c0_119 = arith.constant 0 : index
    %c0_120 = arith.constant 0 : index
    %139 = vector.load %arg3[%c7_118, %c0_119, %c0_120] : memref<9x4x4xf32, #tpu.memory_space<vmem>>, vector<1x4x4xf32>
    %140 = vector.shape_cast %139 : vector<1x4x4xf32> to vector<4x4xf32>
    %c0_121 = arith.constant 0 : index
    %c37_122 = arith.constant 37 : index
    %141 = vector.load %arg6[%c0_121, %c37_122] : memref<4x384xf32, #tpu.memory_space<vmem>>, vector<4x288xf32>
    %cst_123 = arith.constant dense<0.000000e+00> : vector<4x288xf32>
    %142 = tpu.matmul %140, %141, %cst_123 {dimension_numbers = #tpu.dot_dimension_numbers<[1], [0], [0], [1], [0, 0, 1, 1], [], []>} : vector<4x4xf32>, vector<4x288xf32>, vector<4x288xf32> -> vector<4x288xf32>
    %143 = arith.addf %138, %142 : vector<4x288xf32>
    %c8_124 = arith.constant 8 : index
    %c0_125 = arith.constant 0 : index
    %c0_126 = arith.constant 0 : index
    %144 = vector.load %arg3[%c8_124, %c0_125, %c0_126] : memref<9x4x4xf32, #tpu.memory_space<vmem>>, vector<1x4x4xf32>
    %145 = vector.shape_cast %144 : vector<1x4x4xf32> to vector<4x4xf32>
    %c0_127 = arith.constant 0 : index
    %c38_128 = arith.constant 38 : index
    %146 = vector.load %arg6[%c0_127, %c38_128] : memref<4x384xf32, #tpu.memory_space<vmem>>, vector<4x288xf32>
    %cst_129 = arith.constant dense<0.000000e+00> : vector<4x288xf32>
    %147 = tpu.matmul %145, %146, %cst_129 {dimension_numbers = #tpu.dot_dimension_numbers<[1], [0], [0], [1], [0, 0, 1, 1], [], []>} : vector<4x4xf32>, vector<4x288xf32>, vector<4x288xf32> -> vector<4x288xf32>
    %148 = arith.addf %143, %147 : vector<4x288xf32>
    %cst_130 = arith.constant 0.000000e+00 : f32
    %149 = vector.shape_cast %2 : vector<1x288xi1> to vector<1x288xi1>
    %150 = vector.broadcast %149 : vector<1x288xi1> to vector<4x288xi1>
    %151 = vector.broadcast %cst_130 : f32 to vector<4x288xf32>
    %152 = arith.select %150, %148, %151 : vector<4x288xi1>, vector<4x288xf32>
    %cst_131 = arith.constant dense<0.000000e+00> : vector<4xf32>
    %153 = vector.multi_reduction <add>, %152, %cst_131 [1] : vector<4x288xf32> to vector<4xf32>
    %154 = vector.shape_cast %153 : vector<4xf32> to vector<4x1xf32>
    %155 = arith.mulf %152, %152 : vector<4x288xf32>
    %cst_132 = arith.constant dense<0.000000e+00> : vector<4xf32>
    %156 = vector.multi_reduction <add>, %155, %cst_132 [1] : vector<4x288xf32> to vector<4xf32>
    %157 = vector.shape_cast %156 : vector<4xf32> to vector<4x1xf32>
    %cst_133 = arith.constant 3.906250e-03 : f32
    %158 = vector.broadcast %cst_133 : f32 to vector<4x1xf32>
    %159 = arith.mulf %154, %158 : vector<4x1xf32>
    %cst_134 = arith.constant 3.906250e-03 : f32
    %160 = vector.broadcast %cst_134 : f32 to vector<4x1xf32>
    %161 = arith.mulf %157, %160 : vector<4x1xf32>
    %162 = arith.mulf %159, %159 : vector<4x1xf32>
    %163 = arith.subf %161, %162 : vector<4x1xf32>
    %164 = vector.broadcast %159 : vector<4x1xf32> to vector<4x288xf32>
    %165 = arith.subf %148, %164 : vector<4x288xf32>
    %cst_135 = arith.constant 9.99999974E-6 : f32
    %166 = vector.broadcast %cst_135 : f32 to vector<4x1xf32>
    %167 = arith.addf %163, %166 : vector<4x1xf32>
    %168 = math.rsqrt %167 : vector<4x1xf32>
    %169 = vector.broadcast %168 : vector<4x1xf32> to vector<4x288xf32>
    %170 = arith.mulf %165, %169 : vector<4x288xf32>
    %c0_136 = arith.constant 0 : index
    %c0_137 = arith.constant 0 : index
    %c19_138 = arith.constant 19 : index
    %171 = vector.load %arg1[%c0_136, %c0_137, %c19_138] : memref<1x4x384xf32, #tpu.memory_space<vmem>>, vector<1x4x288xf32>
    %172 = vector.shape_cast %171 : vector<1x4x288xf32> to vector<4x288xf32>
    %173 = arith.addf %172, %170 : vector<4x288xf32>
    %c0_139 = arith.constant 0 : index
    %c0_140 = arith.constant 0 : index
    %c0_141 = arith.constant 0 : index
    %174 = vector.load %arg5[%c0_139, %c0_140, %c0_141] : memref<1x4x288xf32, #tpu.memory_space<vmem>>, vector<1x4x288xf32>
    %175 = vector.shape_cast %174 : vector<1x4x288xf32> to vector<4x288xf32>
    %176 = vector.shape_cast %173 : vector<4x288xf32> to vector<1x4x288xf32>
    tpu.vector_store %arg5[%c0_139, %c0_140, %c0_141], %176 {strides = array<i32>} : memref<1x4x288xf32, #tpu.memory_space<vmem>>, vector<1x4x288xf32>,
    return
  }
  func.func @transform_0(%arg0: i32) -> (i32, i32, i32) {
    %c0_i32 = arith.constant 0 : i32
    %c0_i32_0 = arith.constant 0 : i32
    %c0_i32_1 = arith.constant 0 : i32
    return %arg0, %c0_i32, %c0_i32_0 : i32, i32, i32
  }
  func.func @transform_1(%arg0: i32) -> (i32, i32, i32) {
    %c0_i32 = arith.constant 0 : i32
    %c0_i32_0 = arith.constant 0 : i32
    %c0_i32_1 = arith.constant 0 : i32
    %c0_i32_2 = arith.constant 0 : i32
    return %c0_i32, %c0_i32_0, %c0_i32_1 : i32, i32, i32
  }
  func.func @transform_2(%arg0: i32) -> (i32, i32, i32) {
    %c0_i32 = arith.constant 0 : i32
    %c0_i32_0 = arith.constant 0 : i32
    %c0_i32_1 = arith.constant 0 : i32
    %c0_i32_2 = arith.constant 0 : i32
    return %c0_i32, %c0_i32_0, %c0_i32_1 : i32, i32, i32
  }
  func.func @transform_3(%arg0: i32) -> (i32, i32) {
    %c0_i32 = arith.constant 0 : i32
    %c0_i32_0 = arith.constant 0 : i32
    %c0_i32_1 = arith.constant 0 : i32
    return %c0_i32, %c0_i32_0 : i32, i32
  }
  func.func @transform_4(%arg0: i32) -> (i32, i32, i32) {
    %c0_i32 = arith.constant 0 : i32
    %c0_i32_0 = arith.constant 0 : i32
    %c0_i32_1 = arith.constant 0 : i32
    return %arg0, %c0_i32, %c0_i32_0 : i32, i32, i32
  }
}

</mosaic_0001>

<llo_original>
// kernel: residual_block.1
$region0: #{residual_block.1}
  #allocation0 [shape = 'u32[]', space=smem, size = 0x4, offset = 0x4, fixed_abs, tag = 'smem constant byte address 0x4 - core index']
  #allocation1 [shape = 'u32[144,128]{1,0:T(1,128)}', space=vmem, size = 0x12000, scoped, tag = 'internal scratch']
  #allocation2 [shape = 'f32[4,384]{1,0:T(4,128)}', space=vmem, size = 0x1800, scoped, tag = 'scratch operand']
  %s0 = inlined_call_operand.vmem [shape: f32[2,4,384], index: 0, kind: input, shape index: {}]
  %s1 = inlined_call_operand.vmem [shape: f32[9,4,4], index: 1, kind: input, shape index: {}]
  %s2 = inlined_call_operand.vmem [shape: f32[9,4,4], index: 2, kind: input, shape index: {}]
  %s3 = inlined_call_operand.vmem [shape: s32[1,288], index: 3, kind: input, shape index: {}]
  %s4 = inlined_call_operand.vmem [shape: f32[2,4,288], index: 4, kind: output, shape index: {}]
  %s5 = sld [smem:[#allocation0]]
  $region49: #{residual_block.1} parent=0
    _
  %s7 = ssub.s32 1, %s5
  %s8 = scalar_select 0, %s7, %s5
  loop: start=0, step=1, limit=4
  $region2: #{residual_block.1} parent=0 // loop_pre_header
    _
  $region3: #{residual_block.1} parent=0 // loop_header
    %s10 = sphi 0, %s14
    %p11 = scmp.ge.s32.totalorder %s10, 4
    %s20 = sphi 0, %s22
    %s23 = sphi 0, %s20
    %s24 = sphi 0, %s23
    %s40 = sphi 0, %s24
    %s44 = sphi 0, %s44
    %s46 = sphi 0, %s44
    %s47 = sphi 0, %s46
    %s61 = sphi 0, %s47
    %s65 = sphi 0, %s65
    %s67 = sphi 0, %s65
    %s68 = sphi 0, %s67
    %s82 = sphi 0, %s68
    %s86 = sphi 0, %s86
    %s88 = sphi 0, %s86
    %s89 = sphi 0, %s88
    %s103 = sphi 0, %s89
    %s109 = sphi 0, %s111
    %s112 = sphi 0, %s109
    %s113 = sphi 0, %s112
    %s129 = sphi 0, %s113
  $region4: #{residual_block.1} parent=0 // loop_header_branch
    %13 = sbr.rel (%p11) target = $region8
  $region5: #{residual_block.1} parent=0 // loop_body
    %s15 = ssub.s32 %s10, 1
    %s16 = ssub.s32 %s10, 2
    %s17 = sadd.s32 %s10, 1
    %s18 = ssub.s32 %s10, %s17
    %p19 = scmp.eq.s32.totalorder %s18, 0
    %s21 = sadd.s32 %s20, 1
    %s22 = scalar_select %p19, %s20, %s21
    %p25 = pneg %p19
    %p26 = scmp.eq.s32.totalorder %s10, 1
    %p27 = por %p25, %p26
    %p28 = scmp.ne.s32.totalorder %s20, %s23
    %p29 = scmp.eq.s32.totalorder %s10, 0
    %p30 = por %p28, %p29
    %p31 = scmp.ne.s32.totalorder %s20, %s23
    %p32 = scmp.eq.s32.totalorder %s15, 1
    %p33 = por %p31, %p32
    %p34 = scmp.ne.s32.totalorder %s23, %s24
    %p35 = scmp.eq.s32.totalorder %s15, 0
    %p36 = por %p34, %p35
    %p37 = scmp.ne.s32.totalorder %s23, %s24
    %p38 = scmp.eq.s32.totalorder %s16, 1
    %p39 = por %p37, %p38
    %p41 = scmp.ne.s32.totalorder %s24, %s40
    %p42 = scmp.eq.s32.totalorder %s16, 0
    %p43 = por %p41, %p42
    %s45 = sadd.s32 %s44, 1
    %p48 = scmp.eq.s32.totalorder %s10, 1
    %p49 = scmp.ne.s32.totalorder %s44, %s46
    %p50 = scmp.eq.s32.totalorder %s10, 0
    %p51 = por %p49, %p50
    %p52 = scmp.ne.s32.totalorder %s44, %s46
    %p53 = scmp.eq.s32.totalorder %s15, 1
    %p54 = por %p52, %p53
    %p55 = scmp.ne.s32.totalorder %s46, %s47
    %p56 = scmp.eq.s32.totalorder %s15, 0
    %p57 = por %p55, %p56
    %p58 = scmp.ne.s32.totalorder %s46, %s47
    %p59 = scmp.eq.s32.totalorder %s16, 1
    %p60 = por %p58, %p59
    %p62 = scmp.ne.s32.totalorder %s47, %s61
    %p63 = scmp.eq.s32.totalorder %s16, 0
    %p64 = por %p62, %p63
    %s66 = sadd.s32 %s65, 1
    %p69 = scmp.eq.s32.totalorder %s10, 1
    %p70 = scmp.ne.s32.totalorder %s65, %s67
    %p71 = scmp.eq.s32.totalorder %s10, 0
    %p72 = por %p70, %p71
    %p73 = scmp.ne.s32.totalorder %s65, %s67
    %p74 = scmp.eq.s32.totalorder %s15, 1
    %p75 = por %p73, %p74
    %p76 = scmp.ne.s32.totalorder %s67, %s68
    %p77 = scmp.eq.s32.totalorder %s15, 0
    %p78 = por %p76, %p77
    %p79 = scmp.ne.s32.totalorder %s67, %s68
    %p80 = scmp.eq.s32.totalorder %s16, 1
    %p81 = por %p79, %p80
    %p83 = scmp.ne.s32.totalorder %s68, %s82
    %p84 = scmp.eq.s32.totalorder %s16, 0
    %p85 = por %p83, %p84
    %s87 = sadd.s32 %s86, 1
    %p90 = scmp.eq.s32.totalorder %s10, 1
    %p91 = scmp.ne.s32.totalorder %s86, %s88
    %p92 = scmp.eq.s32.totalorder %s10, 0
    %p93 = por %p91, %p92
    %p94 = scmp.ne.s32.totalorder %s86, %s88
    %p95 = scmp.eq.s32.totalorder %s15, 1
    %p96 = por %p94, %p95
    %p97 = scmp.ne.s32.totalorder %s88, %s89
    %p98 = scmp.eq.s32.totalorder %s15, 0
    %p99 = por %p97, %p98
    %p100 = scmp.ne.s32.totalorder %s88, %s89
    %p101 = scmp.eq.s32.totalorder %s16, 1
    %p102 = por %p100, %p101
    %p104 = scmp.ne.s32.totalorder %s89, %s103
    %p105 = scmp.eq.s32.totalorder %s16, 0
    %p106 = por %p104, %p105
    %s107 = ssub.s32 %s10, %s17
    %p108 = scmp.eq.s32.totalorder %s107, 0
    %s110 = sadd.s32 %s109, 1
    %s111 = scalar_select %p108, %s109, %s110
    %p114 = pneg %p108
    %p115 = scmp.eq.s32.totalorder %s10, 1
    %p116 = por %p114, %p115
    %p117 = scmp.ne.s32.totalorder %s109, %s112
    %p118 = scmp.eq.s32.totalorder %s10, 0
    %p119 = por %p117, %p118
    %p120 = scmp.ne.s32.totalorder %s109, %s112
    %p121 = scmp.eq.s32.totalorder %s15, 1
    %p122 = por %p120, %p121
    %p123 = scmp.ne.s32.totalorder %s112, %s113
    %p124 = scmp.eq.s32.totalorder %s15, 0
    %p125 = por %p123, %p124
    %p126 = scmp.ne.s32.totalorder %s112, %s113
    %p127 = scmp.eq.s32.totalorder %s16, 1
    %p128 = por %p126, %p127
    %p130 = scmp.ne.s32.totalorder %s113, %s129
    %p131 = scmp.eq.s32.totalorder %s16, 0
    %p132 = por %p130, %p131
    %p133 = scmp.le.s32.totalorder 1, %s10
    %p134 = scmp.lt.s32.totalorder %s10, 3
    %p135 = pnand %p133, %p134
    %p136 = pneg %p135
    // Predicated region
    $region9: #{residual_block.1} parent=5 // pred_check
      _
    $region10: #{residual_block.1} parent=5 // pred_check_branch
      %138 = sbr.rel (%p135) target = $region12
    $region11: #{residual_block.1} parent=5 // pred_region
      %s139 = ssub.s32 %s10, 1
      // Predicated region
      $region13: #{residual_block.1} parent=11 // pred_check
        %p140 = pneg %p57
      $region14: #{residual_block.1} parent=11 // pred_check_branch
        %142 = sbr.rel (%p140) target = $region16
      $region15: #{residual_block.1} parent=11 // pred_region
        _
      $region16: #{residual_block.1} parent=11 // pred_fallthru
        _
      // Predicated region
      $region17: #{residual_block.1} parent=11 // pred_check
        %p143 = pneg %p78
      $region18: #{residual_block.1} parent=11 // pred_check_branch
        %145 = sbr.rel (%p143) target = $region20
      $region19: #{residual_block.1} parent=11 // pred_region
        _
      $region20: #{residual_block.1} parent=11 // pred_fallthru
        _
      // Predicated region
      $region21: #{residual_block.1} parent=11 // pred_check
        %p146 = pneg %p99
      $region22: #{residual_block.1} parent=11 // pred_check_branch
        %148 = sbr.rel (%p146) target = $region24
      $region23: #{residual_block.1} parent=11 // pred_region
        _
      $region24: #{residual_block.1} parent=11 // pred_fallthru
        _
    $region12: #{residual_block.1} parent=5 // pred_fallthru
      _
    %p149 = scmp.lt.s32.totalorder %s10, 2
    // Predicated region
    $region25: #{residual_block.1} parent=5 // pred_check
      %p150 = pneg %p149
    $region26: #{residual_block.1} parent=5 // pred_check_branch
      %152 = sbr.rel (%p150) target = $region28
    $region27: #{residual_block.1} parent=5 // pred_region
      // Predicated region
      $region29: #{residual_block.1} parent=27 // pred_check
        %p153 = pneg %p30
      $region30: #{residual_block.1} parent=27 // pred_check_branch
        %155 = sbr.rel (%p153) target = $region32
      $region31: #{residual_block.1} parent=27 // pred_region
        %p156 = scmp.lt.s32.totalorder %s10, 1
        %s157 = scalar_select %p156, %s10, 1
        %s158 = smul.addr %s157, 3
        %s159 = smul.addr %s158, 4
        %s160 = scalar_lea.vmem %s0, %s159
      $region32: #{residual_block.1} parent=27 // pred_fallthru
        _
    $region28: #{residual_block.1} parent=5 // pred_fallthru
      _
    %p161 = scmp.le.s32.totalorder 1, %s10
    %p162 = scmp.lt.s32.totalorder %s10, 3
    %p163 = pnand %p161, %p162
    %p164 = pneg %p163
    // Predicated region
    $region33: #{residual_block.1} parent=5 // pred_check
      _
    $region34: #{residual_block.1} parent=5 // pred_check_branch
      %166 = sbr.rel (%p163) target = $region36
    $region35: #{residual_block.1} parent=5 // pred_region
      %s167 = ssub.s32 %s10, 1
      %p168 = scmp.lt.s32.totalorder %s15, 1
      %s169 = scalar_select %p168, %s15, 1
      %s170 = smul.addr %s169, 3
      %s171 = smul.addr %s170, 4
      %s172 = scalar_lea.vmem %s0, %s171
      %p173 = pneg %p36
      %p174 = pneg %p33
      %p175 = pneg %p57
      %p176 = pneg %p54
      %p177 = pneg %p78
      %p178 = pneg %p75
      %p179 = pneg %p99
      %p180 = pneg %p96
      %p181 = pneg %p125
      %p182 = pneg %p122
      %p183 = scmp.lt.s32.totalorder %s15, 1
      %s184 = scalar_select %p183, %s15, 1
      %s185 = smul.addr %s184, 3
      %s186 = smul.addr %s185, 4
      %s187 = scalar_lea.vmem %s4, %s186
      %p188 = scmp.lt.s32.totalorder %s15, 1
      %s189 = scalar_select %p188, %s15, 1
      %s190 = smul.addr %s189, 3
      %s191 = smul.addr %s190, 4
      %s192 = scalar_lea.vmem %s0, %s191
      %p193 = scmp.lt.s32.totalorder %s15, 1
      %s194 = scalar_select %p193, %s15, 1
      %s195 = smul.addr %s194, 3
      %s196 = smul.addr %s195, 4
      %s197 = scalar_lea.vmem %s4, %s196
      %v198 = vld [vmem:[%s3] sm:$0x7]
      %vm199 = vcmp.lt.s32.totalorder %v198, 16
      %v200 = vld [vmem:[%s1] sm:$0xf]
      %v201 = vld [vmem:[%s192] sm:$0xff]
      %v202 = vld [vmem:[%s192 + $0x8] sm:$0xf]
      %s203 = scalar_lea.vmem %s1, 4
      %v204 = vld [vmem:[%s203] sm:$0xf]
      %v207 = vcombine.high %v201, %v201
      %208 = vrot.lane.b32.xlu0 %v201, 127
      %v209 = vpop.permute.xlu0 %208
      %210 = vrot.lane.b32.xlu0 %v207, 127
      %v211 = vpop.permute.xlu0 %210
      %212 = vrot.lane.b32.xlu0 %v202, 127
      %v213 = vpop.permute.xlu0 %212
      %vm214 = vcmask 1039360
      %v215 = vsel %vm214, %v209, %v211
      %v216 = vsel %vm214, %v211, %v213
      %vm217 = vcmask 31744
      %v219 = vsel %vm217, %v204, 0
      %vm221 = vcmask 1043456
      %v222 = vsel %vm221, %v215, 0
      %v224 = vsel %vm221, %v216, 0
      %v226 = vsel %vm221, %v213, 0
      %228 = vmatprep.subr.mxu0 %v224
      %229 = vmatpush1.msra.mxu0 %v222
      %230 = vmatprep.subr.mxu0 0.0
      %231 = vmatpush1.msra.mxu0 0.0
      %232 = vmatprep.subr.mxu0 0.0
      %233 = vmatpush1.msra.mxu0 0.0
      %234 = vmatprep.subr.mxu0 0.0
      %235 = vmatpush1.msra.mxu0 0.0
      %236 = vmatprep.subr.mxu0 0.0
      %237 = vmatpush1.msra.mxu0 0.0
      %238 = vmatprep.subr.mxu0 0.0
      %239 = vmatpush1.msra.mxu0 0.0
      %240 = vmatprep.subr.mxu0 0.0
      %241 = vmatpush1.msra.mxu0 0.0
      %242 = vmatprep.subr.mxu0 0.0
      %243 = vmatpush1.msra.mxu0 0.0
      %244 = vmatprep.subr.mxu0 0.0
      %245 = vmatpush1.msra.mxu0 0.0
      %246 = vmatprep.subr.mxu0 0.0
      %247 = vmatpush1.msra.mxu0 0.0
      %248 = vmatprep.subr.mxu0 0.0
      %249 = vmatpush1.msra.mxu0 0.0
      %250 = vmatprep.subr.mxu0 0.0
      %251 = vmatpush1.msra.mxu0 0.0
      %252 = vmatprep.subr.mxu0 0.0
      %253 = vmatpush1.msra.mxu0 0.0
      %254 = vmatprep.subr.mxu0 0.0
      %255 = vmatpush1.msra.mxu0 0.0
      %256 = vmatprep.subr.mxu0 0.0
      %257 = vmatpush1.msra.mxu0 0.0
      %258 = vmatprep.subr.mxu0 0.0
      %259 = vmatpush1.msra.mxu0 0.0
      %260 = vmatprep.subr.mxu0 0.0
      %261 = vmatpush1.msra.mxu0 0.0
      %262 = vmatprep.subr.mxu0 0.0
      %263 = vmatpush1.msra.mxu0 0.0
      %264 = vmatprep.subr.mxu0 0.0
      %265 = vmatpush1.msra.mxu0 0.0
      %266 = vmatprep.subr.mxu0 0.0
      %267 = vmatpush1.msra.mxu0 0.0
      %268 = vmatprep.subr.mxu0 0.0
      %269 = vmatpush1.msra.mxu0 0.0
      %270 = vmatprep.subr.mxu0 0.0
      %271 = vmatpush1.msra.mxu0 0.0
      %272 = vmatprep.subr.mxu0 0.0
      %273 = vmatpush1.msra.mxu0 0.0
      %274 = vmatprep.subr.mxu0 0.0
      %275 = vmatpush1.msra.mxu0 0.0
      %276 = vmatprep.subr.mxu0 0.0
      %277 = vmatpush1.msra.mxu0 0.0
      %278 = vmatprep.subr.mxu0 0.0
      %279 = vmatpush1.msra.mxu0 0.0
      %280 = vmatprep.subr.mxu0 0.0
      %281 = vmatpush1.msra.mxu0 0.0
      %282 = vmatprep.subr.mxu0 0.0
      %283 = vmatpush1.msra.mxu0 0.0
      %284 = vmatprep.subr.mxu0 0.0
      %285 = vmatpush1.msra.mxu0 0.0
      %286 = vmatprep.subr.mxu0 0.0
      %287 = vmatpush1.msra.mxu0 0.0
      %288 = vmatprep.subr.mxu0 0.0
      %289 = vmatpush1.msra.mxu0 0.0
      %290 = vmatprep.subr.mxu0 0.0
      %291 = vmatpush1.msra.mxu0 0.0
      %292 = vmatprep.mubr.f32.mxu0 0.0
      %293 = vmatmul.mubr.f32.gmra.mrb[0].mxu0 %v219
      %v294 = vpop.f32.mrb[0].mxu0
      %v295 = vadd.f32 0.0, %v294
      %v296 = vpop.f32.mrb[0].mxu0
      %v297 = vadd.f32 0.0, %v296
      %298 = vdwg.mxu0
      %299 = vmatprep.subr.mxu0 0.0
      %300 = vmatpush1.msra.mxu0 %v226
      %301 = vmatprep.subr.mxu0 0.0
      %302 = vmatpush1.msra.mxu0 0.0
      %303 = vmatprep.subr.mxu0 0.0
      %304 = vmatpush1.msra.mxu0 0.0
      %305 = vmatprep.subr.mxu0 0.0
      %306 = vmatpush1.msra.mxu0 0.0
      %307 = vmatprep.subr.mxu0 0.0
      %308 = vmatpush1.msra.mxu0 0.0
      %309 = vmatprep.subr.mxu0 0.0
      %310 = vmatpush1.msra.mxu0 0.0
      %311 = vmatprep.subr.mxu0 0.0
      %312 = vmatpush1.msra.mxu0 0.0
      %313 = vmatprep.subr.mxu0 0.0
      %314 = vmatpush1.msra.mxu0 0.0
      %315 = vmatprep.subr.mxu0 0.0
      %316 = vmatpush1.msra.mxu0 0.0
      %317 = vmatprep.subr.mxu0 0.0
      %318 = vmatpush1.msra.mxu0 0.0
      %319 = vmatprep.subr.mxu0 0.0
      %320 = vmatpush1.msra.mxu0 0.0
      %321 = vmatprep.subr.mxu0 0.0
      %322 = vmatpush1.msra.mxu0 0.0
      %323 = vmatprep.subr.mxu0 0.0
      %324 = vmatpush1.msra.mxu0 0.0
      %325 = vmatprep.subr.mxu0 0.0
      %326 = vmatpush1.msra.mxu0 0.0
      %327 = vmatprep.subr.mxu0 0.0
      %328 = vmatpush1.msra.mxu0 0.0
      %329 = vmatprep.subr.mxu0 0.0
      %330 = vmatpush1.msra.mxu0 0.0
      %331 = vmatprep.subr.mxu0 0.0
      %332 = vmatpush1.msra.mxu0 0.0
      %333 = vmatprep.subr.mxu0 0.0
      %334 = vmatpush1.msra.mxu0 0.0
      %335 = vmatprep.subr.mxu0 0.0
      %336 = vmatpush1.msra.mxu0 0.0
      %337 = vmatprep.subr.mxu0 0.0
      %338 = vmatpush1.msra.mxu0 0.0
      %339 = vmatprep.subr.mxu0 0.0
      %340 = vmatpush1.msra.mxu0 0.0
      %341 = vmatprep.subr.mxu0 0.0
      %342 = vmatpush1.msra.mxu0 0.0
      %343 = vmatprep.subr.mxu0 0.0
      %344 = vmatpush1.msra.mxu0 0.0
      %345 = vmatprep.subr.mxu0 0.0
      %346 = vmatpush1.msra.mxu0 0.0
      %347 = vmatprep.subr.mxu0 0.0
      %348 = vmatpush1.msra.mxu0 0.0
      %349 = vmatprep.subr.mxu0 0.0
      %350 = vmatpush1.msra.mxu0 0.0
      %351 = vmatprep.subr.mxu0 0.0
      %352 = vmatpush1.msra.mxu0 0.0
      %353 = vmatprep.subr.mxu0 0.0
      %354 = vmatpush1.msra.mxu0 0.0
      %355 = vmatprep.subr.mxu0 0.0
      %356 = vmatpush1.msra.mxu0 0.0
      %357 = vmatprep.subr.mxu0 0.0
      %358 = vmatpush1.msra.mxu0 0.0
      %359 = vmatprep.subr.mxu0 0.0
      %360 = vmatpush1.msra.mxu0 0.0
      %361 = vmatprep.subr.mxu0 0.0
      %362 = vmatpush1.msra.mxu0 0.0
      %363 = vmatprep.mubr.f32.mxu0 0.0
      %364 = vmatmul.mubr.f32.gmra.mrb[0].mxu0 %v219
      %v365 = vpop.f32.mrb[0].mxu0
      %v366 = vadd.f32 0.0, %v365
      %v367 = vpop.f32.mrb[0].mxu0
      %368 = vdwg.mxu0
      %v370 = vsel %vm217, %v200, 0
      %v372 = vsel %vm221, %v201, 0
      %v374 = vsel %vm221, %v207, 0
      %v376 = vsel %vm221, %v202, 0
      %378 = vmatprep.subr.mxu0 %v374
      %379 = vmatpush1.msra.mxu0 %v372
      %380 = vmatprep.subr.mxu0 0.0
      %381 = vmatpush1.msra.mxu0 0.0
      %382 = vmatprep.subr.mxu0 0.0
      %383 = vmatpush1.msra.mxu0 0.0
      %384 = vmatprep.subr.mxu0 0.0
      %385 = vmatpush1.msra.mxu0 0.0
      %386 = vmatprep.subr.mxu0 0.0
      %387 = vmatpush1.msra.mxu0 0.0
      %388 = vmatprep.subr.mxu0 0.0
      %389 = vmatpush1.msra.mxu0 0.0
      %390 = vmatprep.subr.mxu0 0.0
      %391 = vmatpush1.msra.mxu0 0.0
      %392 = vmatprep.subr.mxu0 0.0
      %393 = vmatpush1.msra.mxu0 0.0
      %394 = vmatprep.subr.mxu0 0.0
      %395 = vmatpush1.msra.mxu0 0.0
      %396 = vmatprep.subr.mxu0 0.0
      %397 = vmatpush1.msra.mxu0 0.0
      %398 = vmatprep.subr.mxu0 0.0
      %399 = vmatpush1.msra.mxu0 0.0
      %400 = vmatprep.subr.mxu0 0.0
      %401 = vmatpush1.msra.mxu0 0.0
      %402 = vmatprep.subr.mxu0 0.0
      %403 = vmatpush1.msra.mxu0 0.0
      %404 = vmatprep.subr.mxu0 0.0
      %405 = vmatpush1.msra.mxu0 0.0
      %406 = vmatprep.subr.mxu0 0.0
      %407 = vmatpush1.msra.mxu0 0.0
      %408 = vmatprep.subr.mxu0 0.0
      %409 = vmatpush1.msra.mxu0 0.0
      %410 = vmatprep.subr.mxu0 0.0
      %411 = vmatpush1.msra.mxu0 0.0
      %412 = vmatprep.subr.mxu0 0.0
      %413 = vmatpush1.msra.mxu0 0.0
      %414 = vmatprep.subr.mxu0 0.0
      %415 = vmatpush1.msra.mxu0 0.0
      %416 = vmatprep.subr.mxu0 0.0
      %417 = vmatpush1.msra.mxu0 0.0
      %418 = vmatprep.subr.mxu0 0.0
      %419 = vmatpush1.msra.mxu0 0.0
      %420 = vmatprep.subr.mxu0 0.0
      %421 = vmatpush1.msra.mxu0 0.0
      %422 = vmatprep.subr.mxu0 0.0
      %423 = vmatpush1.msra.mxu0 0.0
      %424 = vmatprep.subr.mxu0 0.0
      %425 = vmatpush1.msra.mxu0 0.0
      %426 = vmatprep.subr.mxu0 0.0
      %427 = vmatpush1.msra.mxu0 0.0
      %428 = vmatprep.subr.mxu0 0.0
      %429 = vmatpush1.msra.mxu0 0.0
      %430 = vmatprep.subr.mxu0 0.0
      %431 = vmatpush1.msra.mxu0 0.0
      %432 = vmatprep.subr.mxu0 0.0
      %433 = vmatpush1.msra.mxu0 0.0
      %434 = vmatprep.subr.mxu0 0.0
      %435 = vmatpush1.msra.mxu0 0.0
      %436 = vmatprep.subr.mxu0 0.0
      %437 = vmatpush1.msra.mxu0 0.0
      %438 = vmatprep.subr.mxu0 0.0
      %439 = vmatpush1.msra.mxu0 0.0
      %440 = vmatprep.subr.mxu0 0.0
      %441 = vmatpush1.msra.mxu0 0.0
      %442 = vmatprep.mubr.f32.mxu0 0.0
      %443 = vmatmul.mubr.f32.gmra.mrb[0].mxu0 %v370
      %v444 = vpop.f32.mrb[0].mxu0
      %v445 = vadd.f32 %v295, %v444
      %v446 = vpop.f32.mrb[0].mxu0
      %v447 = vadd.f32 %v297, %v446
      %448 = vdwg.mxu0
      %449 = vmatprep.subr.mxu0 0.0
      %450 = vmatpush1.msra.mxu0 %v376
      %451 = vmatprep.subr.mxu0 0.0
      %452 = vmatpush1.msra.mxu0 0.0
      %453 = vmatprep.subr.mxu0 0.0
      %454 = vmatpush1.msra.mxu0 0.0
      %455 = vmatprep.subr.mxu0 0.0
      %456 = vmatpush1.msra.mxu0 0.0
      %457 = vmatprep.subr.mxu0 0.0
      %458 = vmatpush1.msra.mxu0 0.0
      %459 = vmatprep.subr.mxu0 0.0
      %460 = vmatpush1.msra.mxu0 0.0
      %461 = vmatprep.subr.mxu0 0.0
      %462 = vmatpush1.msra.mxu0 0.0
      %463 = vmatprep.subr.mxu0 0.0
      %464 = vmatpush1.msra.mxu0 0.0
      %465 = vmatprep.subr.mxu0 0.0
      %466 = vmatpush1.msra.mxu0 0.0
      %467 = vmatprep.subr.mxu0 0.0
      %468 = vmatpush1.msra.mxu0 0.0
      %469 = vmatprep.subr.mxu0 0.0
      %470 = vmatpush1.msra.mxu0 0.0
      %471 = vmatprep.subr.mxu0 0.0
      %472 = vmatpush1.msra.mxu0 0.0
      %473 = vmatprep.subr.mxu0 0.0
      %474 = vmatpush1.msra.mxu0 0.0
      %475 = vmatprep.subr.mxu0 0.0
      %476 = vmatpush1.msra.mxu0 0.0
      %477 = vmatprep.subr.mxu0 0.0
      %478 = vmatpush1.msra.mxu0 0.0
      %479 = vmatprep.subr.mxu0 0.0
      %480 = vmatpush1.msra.mxu0 0.0
      %481 = vmatprep.subr.mxu0 0.0
      %482 = vmatpush1.msra.mxu0 0.0
      %483 = vmatprep.subr.mxu0 0.0
      %484 = vmatpush1.msra.mxu0 0.0
      %485 = vmatprep.subr.mxu0 0.0
      %486 = vmatpush1.msra.mxu0 0.0
      %487 = vmatprep.subr.mxu0 0.0
      %488 = vmatpush1.msra.mxu0 0.0
      %489 = vmatprep.subr.mxu0 0.0
      %490 = vmatpush1.msra.mxu0 0.0
      %491 = vmatprep.subr.mxu0 0.0
      %492 = vmatpush1.msra.mxu0 0.0
      %493 = vmatprep.subr.mxu0 0.0
      %494 = vmatpush1.msra.mxu0 0.0
      %495 = vmatprep.subr.mxu0 0.0
      %496 = vmatpush1.msra.mxu0 0.0
      %497 = vmatprep.subr.mxu0 0.0
      %498 = vmatpush1.msra.mxu0 0.0
      %499 = vmatprep.subr.mxu0 0.0
      %500 = vmatpush1.msra.mxu0 0.0
      %501 = vmatprep.subr.mxu0 0.0
      %502 = vmatpush1.msra.mxu0 0.0
      %503 = vmatprep.subr.mxu0 0.0
      %504 = vmatpush1.msra.mxu0 0.0
      %505 = vmatprep.subr.mxu0 0.0
      %506 = vmatpush1.msra.mxu0 0.0
      %507 = vmatprep.subr.mxu0 0.0
      %508 = vmatpush1.msra.mxu0 0.0
      %509 = vmatprep.subr.mxu0 0.0
      %510 = vmatpush1.msra.mxu0 0.0
      %511 = vmatprep.subr.mxu0 0.0
      %512 = vmatpush1.msra.mxu0 0.0
      %513 = vmatprep.mubr.f32.mxu0 0.0
      %514 = vmatmul.mubr.f32.gmra.mrb[0].mxu0 %v370
      %v515 = vpop.f32.mrb[0].mxu0
      %v516 = vadd.f32 %v366, %v515
      %v517 = vpop.f32.mrb[0].mxu0
      %518 = vdwg.mxu0
      %s519 = scalar_lea.vmem %s1, 8
      %v520 = vld [vmem:[%s519] sm:$0xf]
      %v521 = vld [vmem:[%s192] sm:$0xff]
      %v522 = vld [vmem:[%s192 + $0x8] sm:$0xf]
      %v525 = vcombine.high %v521, %v521
      %526 = vrot.lane.b32.xlu0 %v521, 126
      %v527 = vpop.permute.xlu0 %526
      %528 = vrot.lane.b32.xlu0 %v525, 126
      %v529 = vpop.permute.xlu0 %528
      %530 = vrot.lane.b32.xlu0 %v522, 126
      %v531 = vpop.permute.xlu0 %530
      %vm532 = vcmask 1031168
      %v533 = vsel %vm532, %v527, %v529
      %v534 = vsel %vm532, %v529, %v531
      %v536 = vsel %vm217, %v520, 0
      %v538 = vsel %vm221, %v533, 0
      %v540 = vsel %vm221, %v534, 0
      %v542 = vsel %vm221, %v531, 0
      %544 = vmatprep.subr.mxu0 %v540
      %545 = vmatpush1.msra.mxu0 %v538
      %546 = vmatprep.subr.mxu0 0.0
      %547 = vmatpush1.msra.mxu0 0.0
      %548 = vmatprep.subr.mxu0 0.0
      %549 = vmatpush1.msra.mxu0 0.0
      %550 = vmatprep.subr.mxu0 0.0
      %551 = vmatpush1.msra.mxu0 0.0
      %552 = vmatprep.subr.mxu0 0.0
      %553 = vmatpush1.msra.mxu0 0.0
      %554 = vmatprep.subr.mxu0 0.0
      %555 = vmatpush1.msra.mxu0 0.0
      %556 = vmatprep.subr.mxu0 0.0
      %557 = vmatpush1.msra.mxu0 0.0
      %558 = vmatprep.subr.mxu0 0.0
      %559 = vmatpush1.msra.mxu0 0.0
      %560 = vmatprep.subr.mxu0 0.0
      %561 = vmatpush1.msra.mxu0 0.0
      %562 = vmatprep.subr.mxu0 0.0
      %563 = vmatpush1.msra.mxu0 0.0
      %564 = vmatprep.subr.mxu0 0.0
      %565 = vmatpush1.msra.mxu0 0.0
      %566 = vmatprep.subr.mxu0 0.0
      %567 = vmatpush1.msra.mxu0 0.0
      %568 = vmatprep.subr.mxu0 0.0
      %569 = vmatpush1.msra.mxu0 0.0
      %570 = vmatprep.subr.mxu0 0.0
      %571 = vmatpush1.msra.mxu0 0.0
      %572 = vmatprep.subr.mxu0 0.0
      %573 = vmatpush1.msra.mxu0 0.0
      %574 = vmatprep.subr.mxu0 0.0
      %575 = vmatpush1.msra.mxu0 0.0
      %576 = vmatprep.subr.mxu0 0.0
      %577 = vmatpush1.msra.mxu0 0.0
      %578 = vmatprep.subr.mxu0 0.0
      %579 = vmatpush1.msra.mxu0 0.0
      %580 = vmatprep.subr.mxu0 0.0
      %581 = vmatpush1.msra.mxu0 0.0
      %582 = vmatprep.subr.mxu0 0.0
      %583 = vmatpush1.msra.mxu0 0.0
      %584 = vmatprep.subr.mxu0 0.0
      %585 = vmatpush1.msra.mxu0 0.0
      %586 = vmatprep.subr.mxu0 0.0
      %587 = vmatpush1.msra.mxu0 0.0
      %588 = vmatprep.subr.mxu0 0.0
      %589 = vmatpush1.msra.mxu0 0.0
      %590 = vmatprep.subr.mxu0 0.0
      %591 = vmatpush1.msra.mxu0 0.0
      %592 = vmatprep.subr.mxu0 0.0
      %593 = vmatpush1.msra.mxu0 0.0
      %594 = vmatprep.subr.mxu0 0.0
      %595 = vmatpush1.msra.mxu0 0.0
      %596 = vmatprep.subr.mxu0 0.0
      %597 = vmatpush1.msra.mxu0 0.0
      %598 = vmatprep.subr.mxu0 0.0
      %599 = vmatpush1.msra.mxu0 0.0
      %600 = vmatprep.subr.mxu0 0.0
      %601 = vmatpush1.msra.mxu0 0.0
      %602 = vmatprep.subr.mxu0 0.0
      %603 = vmatpush1.msra.mxu0 0.0
      %604 = vmatprep.subr.mxu0 0.0
      %605 = vmatpush1.msra.mxu0 0.0
      %606 = vmatprep.subr.mxu0 0.0
      %607 = vmatpush1.msra.mxu0 0.0
      %608 = vmatprep.mubr.f32.mxu0 0.0
      %609 = vmatmul.mubr.f32.gmra.mrb[0].mxu0 %v536
      %v610 = vpop.f32.mrb[0].mxu0
      %v611 = vadd.f32 0.0, %v610
      %v612 = vpop.f32.mrb[0].mxu0
      %v613 = vadd.f32 0.0, %v612
      %614 = vdwg.mxu0
      %615 = vmatprep.subr.mxu0 0.0
      %616 = vmatpush1.msra.mxu0 %v542
      %617 = vmatprep.subr.mxu0 0.0
      %618 = vmatpush1.msra.mxu0 0.0
      %619 = vmatprep.subr.mxu0 0.0
      %620 = vmatpush1.msra.mxu0 0.0
      %621 = vmatprep.subr.mxu0 0.0
      %622 = vmatpush1.msra.mxu0 0.0
      %623 = vmatprep.subr.mxu0 0.0
      %624 = vmatpush1.msra.mxu0 0.0
      %625 = vmatprep.subr.mxu0 0.0
      %626 = vmatpush1.msra.mxu0 0.0
      %627 = vmatprep.subr.mxu0 0.0
      %628 = vmatpush1.msra.mxu0 0.0
      %629 = vmatprep.subr.mxu0 0.0
      %630 = vmatpush1.msra.mxu0 0.0
      %631 = vmatprep.subr.mxu0 0.0
      %632 = vmatpush1.msra.mxu0 0.0
      %633 = vmatprep.subr.mxu0 0.0
      %634 = vmatpush1.msra.mxu0 0.0
      %635 = vmatprep.subr.mxu0 0.0
      %636 = vmatpush1.msra.mxu0 0.0
      %637 = vmatprep.subr.mxu0 0.0
      %638 = vmatpush1.msra.mxu0 0.0
      %639 = vmatprep.subr.mxu0 0.0
      %640 = vmatpush1.msra.mxu0 0.0
      %641 = vmatprep.subr.mxu0 0.0
      %642 = vmatpush1.msra.mxu0 0.0
      %643 = vmatprep.subr.mxu0 0.0
      %644 = vmatpush1.msra.mxu0 0.0
      %645 = vmatprep.subr.mxu0 0.0
      %646 = vmatpush1.msra.mxu0 0.0
      %647 = vmatprep.subr.mxu0 0.0
      %648 = vmatpush1.msra.mxu0 0.0
      %649 = vmatprep.subr.mxu0 0.0
      %650 = vmatpush1.msra.mxu0 0.0
      %651 = vmatprep.subr.mxu0 0.0
      %652 = vmatpush1.msra.mxu0 0.0
      %653 = vmatprep.subr.mxu0 0.0
      %654 = vmatpush1.msra.mxu0 0.0
      %655 = vmatprep.subr.mxu0 0.0
      %656 = vmatpush1.msra.mxu0 0.0
      %657 = vmatprep.subr.mxu0 0.0
      %658 = vmatpush1.msra.mxu0 0.0
      %659 = vmatprep.subr.mxu0 0.0
      %660 = vmatpush1.msra.mxu0 0.0
      %661 = vmatprep.subr.mxu0 0.0
      %662 = vmatpush1.msra.mxu0 0.0
      %663 = vmatprep.subr.mxu0 0.0
      %664 = vmatpush1.msra.mxu0 0.0
      %665 = vmatprep.subr.mxu0 0.0
      %666 = vmatpush1.msra.mxu0 0.0
      %667 = vmatprep.subr.mxu0 0.0
      %668 = vmatpush1.msra.mxu0 0.0
      %669 = vmatprep.subr.mxu0 0.0
      %670 = vmatpush1.msra.mxu0 0.0
      %671 = vmatprep.subr.mxu0 0.0
      %672 = vmatpush1.msra.mxu0 0.0
      %673 = vmatprep.subr.mxu0 0.0
      %674 = vmatpush1.msra.mxu0 0.0
      %675 = vmatprep.subr.mxu0 0.0
      %676 = vmatpush1.msra.mxu0 0.0
      %677 = vmatprep.subr.mxu0 0.0
      %678 = vmatpush1.msra.mxu0 0.0
      %679 = vmatprep.mubr.f32.mxu0 0.0
      %680 = vmatmul.mubr.f32.gmra.mrb[0].mxu0 %v536
      %v681 = vpop.f32.mrb[0].mxu0
      %v682 = vadd.f32 0.0, %v681
      %v683 = vpop.f32.mrb[0].mxu0
      %684 = vdwg.mxu0
      %v685 = vadd.f32 %v445, %v611
      %v686 = vadd.f32 %v447, %v613
      %v687 = vadd.f32 %v516, %v682
      %s688 = scalar_lea.vmem %s1, 12
      %v689 = vld [vmem:[%s688] sm:$0xf]
      %v690 = vld [vmem:[%s192] sm:$0xff]
      %v691 = vld [vmem:[%s192 + $0x8] sm:$0xf]
      %v694 = vcombine.high %v690, %v690
      %695 = vrot.lane.b32.xlu0 %v690, 110
      %v696 = vpop.permute.xlu0 %695
      %697 = vrot.lane.b32.xlu0 %v694, 110
      %v698 = vpop.permute.xlu0 %697
      %699 = vrot.lane.b32.xlu0 %v691, 110
      %v700 = vpop.permute.xlu0 %699
      %vm701 = vcmask 900096
      %v702 = vsel %vm701, %v696, %v698
      %v703 = vsel %vm701, %v698, %v700
      %v705 = vsel %vm217, %v689, 0
      %v707 = vsel %vm221, %v702, 0
      %v709 = vsel %vm221, %v703, 0
      %v711 = vsel %vm221, %v700, 0
      %713 = vmatprep.subr.mxu0 %v709
      %714 = vmatpush1.msra.mxu0 %v707
      %715 = vmatprep.subr.mxu0 0.0
      %716 = vmatpush1.msra.mxu0 0.0
      %717 = vmatprep.subr.mxu0 0.0
      %718 = vmatpush1.msra.mxu0 0.0
      %719 = vmatprep.subr.mxu0 0.0
      %720 = vmatpush1.msra.mxu0 0.0
      %721 = vmatprep.subr.mxu0 0.0
      %722 = vmatpush1.msra.mxu0 0.0
      %723 = vmatprep.subr.mxu0 0.0
      %724 = vmatpush1.msra.mxu0 0.0
      %725 = vmatprep.subr.mxu0 0.0
      %726 = vmatpush1.msra.mxu0 0.0
      %727 = vmatprep.subr.mxu0 0.0
      %728 = vmatpush1.msra.mxu0 0.0
      %729 = vmatprep.subr.mxu0 0.0
      %730 = vmatpush1.msra.mxu0 0.0
      %731 = vmatprep.subr.mxu0 0.0
      %732 = vmatpush1.msra.mxu0 0.0
      %733 = vmatprep.subr.mxu0 0.0
      %734 = vmatpush1.msra.mxu0 0.0
      %735 = vmatprep.subr.mxu0 0.0
      %736 = vmatpush1.msra.mxu0 0.0
      %737 = vmatprep.subr.mxu0 0.0
      %738 = vmatpush1.msra.mxu0 0.0
      %739 = vmatprep.subr.mxu0 0.0
      %740 = vmatpush1.msra.mxu0 0.0
      %741 = vmatprep.subr.mxu0 0.0
      %742 = vmatpush1.msra.mxu0 0.0
      %743 = vmatprep.subr.mxu0 0.0
      %744 = vmatpush1.msra.mxu0 0.0
      %745 = vmatprep.subr.mxu0 0.0
      %746 = vmatpush1.msra.mxu0 0.0
      %747 = vmatprep.subr.mxu0 0.0
      %748 = vmatpush1.msra.mxu0 0.0
      %749 = vmatprep.subr.mxu0 0.0
      %750 = vmatpush1.msra.mxu0 0.0
      %751 = vmatprep.subr.mxu0 0.0
      %752 = vmatpush1.msra.mxu0 0.0
      %753 = vmatprep.subr.mxu0 0.0
      %754 = vmatpush1.msra.mxu0 0.0
      %755 = vmatprep.subr.mxu0 0.0
      %756 = vmatpush1.msra.mxu0 0.0
      %757 = vmatprep.subr.mxu0 0.0
      %758 = vmatpush1.msra.mxu0 0.0
      %759 = vmatprep.subr.mxu0 0.0
      %760 = vmatpush1.msra.mxu0 0.0
      %761 = vmatprep.subr.mxu0 0.0
      %762 = vmatpush1.msra.mxu0 0.0
      %763 = vmatprep.subr.mxu0 0.0
      %764 = vmatpush1.msra.mxu0 0.0
      %765 = vmatprep.subr.mxu0 0.0
      %766 = vmatpush1.msra.mxu0 0.0
      %767 = vmatprep.subr.mxu0 0.0
      %768 = vmatpush1.msra.mxu0 0.0
      %769 = vmatprep.subr.mxu0 0.0
      %770 = vmatpush1.msra.mxu0 0.0
      %771 = vmatprep.subr.mxu0 0.0
      %772 = vmatpush1.msra.mxu0 0.0
      %773 = vmatprep.subr.mxu0 0.0
      %774 = vmatpush1.msra.mxu0 0.0
      %775 = vmatprep.subr.mxu0 0.0
      %776 = vmatpush1.msra.mxu0 0.0
      %777 = vmatprep.mubr.f32.mxu0 0.0
      %778 = vmatmul.mubr.f32.gmra.mrb[0].mxu0 %v705
      %v779 = vpop.f32.mrb[0].mxu0
      %v780 = vadd.f32 0.0, %v779
      %v781 = vpop.f32.mrb[0].mxu0
      %v782 = vadd.f32 0.0, %v781
      %783 = vdwg.mxu0
      %784 = vmatprep.subr.mxu0 0.0
      %785 = vmatpush1.msra.mxu0 %v711
      %786 = vmatprep.subr.mxu0 0.0
      %787 = vmatpush1.msra.mxu0 0.0
      %788 = vmatprep.subr.mxu0 0.0
      %789 = vmatpush1.msra.mxu0 0.0
      %790 = vmatprep.subr.mxu0 0.0
      %791 = vmatpush1.msra.mxu0 0.0
      %792 = vmatprep.subr.mxu0 0.0
      %793 = vmatpush1.msra.mxu0 0.0
      %794 = vmatprep.subr.mxu0 0.0
      %795 = vmatpush1.msra.mxu0 0.0
      %796 = vmatprep.subr.mxu0 0.0
      %797 = vmatpush1.msra.mxu0 0.0
      %798 = vmatprep.subr.mxu0 0.0
      %799 = vmatpush1.msra.mxu0 0.0
      %800 = vmatprep.subr.mxu0 0.0
      %801 = vmatpush1.msra.mxu0 0.0
      %802 = vmatprep.subr.mxu0 0.0
      %803 = vmatpush1.msra.mxu0 0.0
      %804 = vmatprep.subr.mxu0 0.0
      %805 = vmatpush1.msra.mxu0 0.0
      %806 = vmatprep.subr.mxu0 0.0
      %807 = vmatpush1.msra.mxu0 0.0
      %808 = vmatprep.subr.mxu0 0.0
      %809 = vmatpush1.msra.mxu0 0.0
      %810 = vmatprep.subr.mxu0 0.0
      %811 = vmatpush1.msra.mxu0 0.0
      %812 = vmatprep.subr.mxu0 0.0
      %813 = vmatpush1.msra.mxu0 0.0
      %814 = vmatprep.subr.mxu0 0.0
      %815 = vmatpush1.msra.mxu0 0.0
      %816 = vmatprep.subr.mxu0 0.0
      %817 = vmatpush1.msra.mxu0 0.0
      %818 = vmatprep.subr.mxu0 0.0
      %819 = vmatpush1.msra.mxu0 0.0
      %820 = vmatprep.subr.mxu0 0.0
      %821 = vmatpush1.msra.mxu0 0.0
      %822 = vmatprep.subr.mxu0 0.0
      %823 = vmatpush1.msra.mxu0 0.0
      %824 = vmatprep.subr.mxu0 0.0
      %825 = vmatpush1.msra.mxu0 0.0
      %826 = vmatprep.subr.mxu0 0.0
      %827 = vmatpush1.msra.mxu0 0.0
      %828 = vmatprep.subr.mxu0 0.0
      %829 = vmatpush1.msra.mxu0 0.0
      %830 = vmatprep.subr.mxu0 0.0
      %831 = vmatpush1.msra.mxu0 0.0
      %832 = vmatprep.subr.mxu0 0.0
      %833 = vmatpush1.msra.mxu0 0.0
      %834 = vmatprep.subr.mxu0 0.0
      %835 = vmatpush1.msra.mxu0 0.0
      %836 = vmatprep.subr.mxu0 0.0
      %837 = vmatpush1.msra.mxu0 0.0
      %838 = vmatprep.subr.mxu0 0.0
      %839 = vmatpush1.msra.mxu0 0.0
      %840 = vmatprep.subr.mxu0 0.0
      %841 = vmatpush1.msra.mxu0 0.0
      %842 = vmatprep.subr.mxu0 0.0
      %843 = vmatpush1.msra.mxu0 0.0
      %844 = vmatprep.subr.mxu0 0.0
      %845 = vmatpush1.msra.mxu0 0.0
      %846 = vmatprep.subr.mxu0 0.0
      %847 = vmatpush1.msra.mxu0 0.0
      %848 = vmatprep.mubr.f32.mxu0 0.0
      %849 = vmatmul.mubr.f32.gmra.mrb[0].mxu0 %v705
      %v850 = vpop.f32.mrb[0].mxu0
      %v851 = vadd.f32 0.0, %v850
      %v852 = vpop.f32.mrb[0].mxu0
      %853 = vdwg.mxu0
      %v854 = vadd.f32 %v685, %v780
      %v855 = vadd.f32 %v686, %v782
      %v856 = vadd.f32 %v687, %v851
      %s857 = scalar_lea.vmem %s1, 16
      %v858 = vld [vmem:[%s857] sm:$0xf]
      %v859 = vld [vmem:[%s192] sm:$0xff]
      %v860 = vld [vmem:[%s192 + $0x8] sm:$0xf]
      %v863 = vcombine.high %v859, %v859
      %864 = vrot.lane.b32.xlu0 %v859, 109
      %v865 = vpop.permute.xlu0 %864
      %866 = vrot.lane.b32.xlu0 %v863, 109
      %v867 = vpop.permute.xlu0 %866
      %868 = vrot.lane.b32.xlu0 %v860, 109
      %v869 = vpop.permute.xlu0 %868
      %vm870 = vcmask 891904
      %v871 = vsel %vm870, %v865, %v867
      %v872 = vsel %vm870, %v867, %v869
      %v874 = vsel %vm217, %v858, 0
      %v876 = vsel %vm221, %v871, 0
      %v878 = vsel %vm221, %v872, 0
      %v880 = vsel %vm221, %v869, 0
      %882 = vmatprep.subr.mxu0 %v878
      %883 = vmatpush1.msra.mxu0 %v876
      %884 = vmatprep.subr.mxu0 0.0
      %885 = vmatpush1.msra.mxu0 0.0
      %886 = vmatprep.subr.mxu0 0.0
      %887 = vmatpush1.msra.mxu0 0.0
      %888 = vmatprep.subr.mxu0 0.0
      %889 = vmatpush1.msra.mxu0 0.0
      %890 = vmatprep.subr.mxu0 0.0
      %891 = vmatpush1.msra.mxu0 0.0
      %892 = vmatprep.subr.mxu0 0.0
      %893 = vmatpush1.msra.mxu0 0.0
      %894 = vmatprep.subr.mxu0 0.0
      %895 = vmatpush1.msra.mxu0 0.0
      %896 = vmatprep.subr.mxu0 0.0
      %897 = vmatpush1.msra.mxu0 0.0
      %898 = vmatprep.subr.mxu0 0.0
      %899 = vmatpush1.msra.mxu0 0.0
      %900 = vmatprep.subr.mxu0 0.0
      %901 = vmatpush1.msra.mxu0 0.0
      %902 = vmatprep.subr.mxu0 0.0
      %903 = vmatpush1.msra.mxu0 0.0
      %904 = vmatprep.subr.mxu0 0.0
      %905 = vmatpush1.msra.mxu0 0.0
      %906 = vmatprep.subr.mxu0 0.0
      %907 = vmatpush1.msra.mxu0 0.0
      %908 = vmatprep.subr.mxu0 0.0
      %909 = vmatpush1.msra.mxu0 0.0
      %910 = vmatprep.subr.mxu0 0.0
      %911 = vmatpush1.msra.mxu0 0.0
      %912 = vmatprep.subr.mxu0 0.0
      %913 = vmatpush1.msra.mxu0 0.0
      %914 = vmatprep.subr.mxu0 0.0
      %915 = vmatpush1.msra.mxu0 0.0
      %916 = vmatprep.subr.mxu0 0.0
      %917 = vmatpush1.msra.mxu0 0.0
      %918 = vmatprep.subr.mxu0 0.0
      %919 = vmatpush1.msra.mxu0 0.0
      %920 = vmatprep.subr.mxu0 0.0
      %921 = vmatpush1.msra.mxu0 0.0
      %922 = vmatprep.subr.mxu0 0.0
      %923 = vmatpush1.msra.mxu0 0.0
      %924 = vmatprep.subr.mxu0 0.0
      %925 = vmatpush1.msra.mxu0 0.0
      %926 = vmatprep.subr.mxu0 0.0
      %927 = vmatpush1.msra.mxu0 0.0
      %928 = vmatprep.subr.mxu0 0.0
      %929 = vmatpush1.msra.mxu0 0.0
      %930 = vmatprep.subr.mxu0 0.0
      %931 = vmatpush1.msra.mxu0 0.0
      %932 = vmatprep.subr.mxu0 0.0
      %933 = vmatpush1.msra.mxu0 0.0
      %934 = vmatprep.subr.mxu0 0.0
      %935 = vmatpush1.msra.mxu0 0.0
      %936 = vmatprep.subr.mxu0 0.0
      %937 = vmatpush1.msra.mxu0 0.0
      %938 = vmatprep.subr.mxu0 0.0
      %939 = vmatpush1.msra.mxu0 0.0
      %940 = vmatprep.subr.mxu0 0.0
      %941 = vmatpush1.msra.mxu0 0.0
      %942 = vmatprep.subr.mxu0 0.0
      %943 = vmatpush1.msra.mxu0 0.0
      %944 = vmatprep.subr.mxu0 0.0
      %945 = vmatpush1.msra.mxu0 0.0
      %946 = vmatprep.mubr.f32.mxu0 0.0
      %947 = vmatmul.mubr.f32.gmra.mrb[0].mxu0 %v874
      %v948 = vpop.f32.mrb[0].mxu0
      %v949 = vadd.f32 0.0, %v948
      %v950 = vpop.f32.mrb[0].mxu0
      %v951 = vadd.f32 0.0, %v950
      %952 = vdwg.mxu0
      %953 = vmatprep.subr.mxu0 0.0
      %954 = vmatpush1.msra.mxu0 %v880
      %955 = vmatprep.subr.mxu0 0.0
      %956 = vmatpush1.msra.mxu0 0.0
      %957 = vmatprep.subr.mxu0 0.0
      %958 = vmatpush1.msra.mxu0 0.0
      %959 = vmatprep.subr.mxu0 0.0
      %960 = vmatpush1.msra.mxu0 0.0
      %961 = vmatprep.subr.mxu0 0.0
      %962 = vmatpush1.msra.mxu0 0.0
      %963 = vmatprep.subr.mxu0 0.0
      %964 = vmatpush1.msra.mxu0 0.0
      %965 = vmatprep.subr.mxu0 0.0
      %966 = vmatpush1.msra.mxu0 0.0
      %967 = vmatprep.subr.mxu0 0.0
      %968 = vmatpush1.msra.mxu0 0.0
      %969 = vmatprep.subr.mxu0 0.0
      %970 = vmatpush1.msra.mxu0 0.0
      %971 = vmatprep.subr.mxu0 0.0
      %972 = vmatpush1.msra.mxu0 0.0
      %973 = vmatprep.subr.mxu0 0.0
      %974 = vmatpush1.msra.mxu0 0.0
      %975 = vmatprep.subr.mxu0 0.0
      %976 = vmatpush1.msra.mxu0 0.0
      %977 = vmatprep.subr.mxu0 0.0
      %978 = vmatpush1.msra.mxu0 0.0
      %979 = vmatprep.subr.mxu0 0.0
      %980 = vmatpush1.msra.mxu0 0.0
      %981 = vmatprep.subr.mxu0 0.0
      %982 = vmatpush1.msra.mxu0 0.0
      %983 = vmatprep.subr.mxu0 0.0
      %984 = vmatpush1.msra.mxu0 0.0
      %985 = vmatprep.subr.mxu0 0.0
      %986 = vmatpush1.msra.mxu0 0.0
      %987 = vmatprep.subr.mxu0 0.0
      %988 = vmatpush1.msra.mxu0 0.0
      %989 = vmatprep.subr.mxu0 0.0
      %990 = vmatpush1.msra.mxu0 0.0
      %991 = vmatprep.subr.mxu0 0.0
      %992 = vmatpush1.msra.mxu0 0.0
      %993 = vmatprep.subr.mxu0 0.0
      %994 = vmatpush1.msra.mxu0 0.0
      %995 = vmatprep.subr.mxu0 0.0
      %996 = vmatpush1.msra.mxu0 0.0
      %997 = vmatprep.subr.mxu0 0.0
      %998 = vmatpush1.msra.mxu0 0.0
      %999 = vmatprep.subr.mxu0 0.0
      %1000 = vmatpush1.msra.mxu0 0.0
      %1001 = vmatprep.subr.mxu0 0.0
      %1002 = vmatpush1.msra.mxu0 0.0
      %1003 = vmatprep.subr.mxu0 0.0
      %1004 = vmatpush1.msra.mxu0 0.0
      %1005 = vmatprep.subr.mxu0 0.0
      %1006 = vmatpush1.msra.mxu0 0.0
      %1007 = vmatprep.subr.mxu0 0.0
      %1008 = vmatpush1.msra.mxu0 0.0
      %1009 = vmatprep.subr.mxu0 0.0
      %1010 = vmatpush1.msra.mxu0 0.0
      %1011 = vmatprep.subr.mxu0 0.0
      %1012 = vmatpush1.msra.mxu0 0.0
      %1013 = vmatprep.subr.mxu0 0.0
      %1014 = vmatpush1.msra.mxu0 0.0
      %1015 = vmatprep.subr.mxu0 0.0
      %1016 = vmatpush1.msra.mxu0 0.0
      %1017 = vmatprep.mubr.f32.mxu0 0.0
      %1018 = vmatmul.mubr.f32.gmra.mrb[0].mxu0 %v874
      %v1019 = vpop.f32.mrb[0].mxu0
      %v1020 = vadd.f32 0.0, %v1019
      %v1021 = vpop.f32.mrb[0].mxu0
      %1022 = vdwg.mxu0
      %v1023 = vadd.f32 %v854, %v949
      %v1024 = vadd.f32 %v855, %v951
      %v1025 = vadd.f32 %v856, %v1020
      %s1026 = scalar_lea.vmem %s1, 20
      %v1027 = vld [vmem:[%s1026] sm:$0xf]
      %v1028 = vld [vmem:[%s192] sm:$0xff]
      %v1029 = vld [vmem:[%s192 + $0x8] sm:$0xf]
      %v1032 = vcombine.high %v1028, %v1028
      %1033 = vrot.lane.b32.xlu0 %v1028, 108
      %v1034 = vpop.permute.xlu0 %1033
      %1035 = vrot.lane.b32.xlu0 %v1032, 108
      %v1036 = vpop.permute.xlu0 %1035
      %1037 = vrot.lane.b32.xlu0 %v1029, 108
      %v1038 = vpop.permute.xlu0 %1037
      %vm1039 = vcmask 883712
      %v1040 = vsel %vm1039, %v1034, %v1036
      %v1041 = vsel %vm1039, %v1036, %v1038
      %v1043 = vsel %vm217, %v1027, 0
      %v1045 = vsel %vm221, %v1040, 0
      %v1047 = vsel %vm221, %v1041, 0
      %v1049 = vsel %vm221, %v1038, 0
      %1051 = vmatprep.subr.mxu0 %v1047
      %1052 = vmatpush1.msra.mxu0 %v1045
      %1053 = vmatprep.subr.mxu0 0.0
      %1054 = vmatpush1.msra.mxu0 0.0
      %1055 = vmatprep.subr.mxu0 0.0
      %1056 = vmatpush1.msra.mxu0 0.0
      %1057 = vmatprep.subr.mxu0 0.0
      %1058 = vmatpush1.msra.mxu0 0.0
      %1059 = vmatprep.subr.mxu0 0.0
      %1060 = vmatpush1.msra.mxu0 0.0
      %1061 = vmatprep.subr.mxu0 0.0
      %1062 = vmatpush1.msra.mxu0 0.0
      %1063 = vmatprep.subr.mxu0 0.0
      %1064 = vmatpush1.msra.mxu0 0.0
      %1065 = vmatprep.subr.mxu0 0.0
      %1066 = vmatpush1.msra.mxu0 0.0
      %1067 = vmatprep.subr.mxu0 0.0
      %1068 = vmatpush1.msra.mxu0 0.0
      %1069 = vmatprep.subr.mxu0 0.0
      %1070 = vmatpush1.msra.mxu0 0.0
      %1071 = vmatprep.subr.mxu0 0.0
      %1072 = vmatpush1.msra.mxu0 0.0
      %1073 = vmatprep.subr.mxu0 0.0
      %1074 = vmatpush1.msra.mxu0 0.0
      %1075 = vmatprep.subr.mxu0 0.0
      %1076 = vmatpush1.msra.mxu0 0.0
      %1077 = vmatprep.subr.mxu0 0.0
      %1078 = vmatpush1.msra.mxu0 0.0
      %1079 = vmatprep.subr.mxu0 0.0
      %1080 = vmatpush1.msra.mxu0 0.0
      %1081 = vmatprep.subr.mxu0 0.0
      %1082 = vmatpush1.msra.mxu0 0.0
      %1083 = vmatprep.subr.mxu0 0.0
      %1084 = vmatpush1.msra.mxu0 0.0
      %1085 = vmatprep.subr.mxu0 0.0
      %1086 = vmatpush1.msra.mxu0 0.0
      %1087 = vmatprep.subr.mxu0 0.0
      %1088 = vmatpush1.msra.mxu0 0.0
      %1089 = vmatprep.subr.mxu0 0.0
      %1090 = vmatpush1.msra.mxu0 0.0
      %1091 = vmatprep.subr.mxu0 0.0
      %1092 = vmatpush1.msra.mxu0 0.0
      %1093 = vmatprep.subr.mxu0 0.0
      %1094 = vmatpush1.msra.mxu0 0.0
      %1095 = vmatprep.subr.mxu0 0.0
      %1096 = vmatpush1.msra.mxu0 0.0
      %1097 = vmatprep.subr.mxu0 0.0
      %1098 = vmatpush1.msra.mxu0 0.0
      %1099 = vmatprep.subr.mxu0 0.0
      %1100 = vmatpush1.msra.mxu0 0.0
      %1101 = vmatprep.subr.mxu0 0.0
      %1102 = vmatpush1.msra.mxu0 0.0
      %1103 = vmatprep.subr.mxu0 0.0
      %1104 = vmatpush1.msra.mxu0 0.0
      %1105 = vmatprep.subr.mxu0 0.0
      %1106 = vmatpush1.msra.mxu0 0.0
      %1107 = vmatprep.subr.mxu0 0.0
      %1108 = vmatpush1.msra.mxu0 0.0
      %1109 = vmatprep.subr.mxu0 0.0
      %1110 = vmatpush1.msra.mxu0 0.0
      %1111 = vmatprep.subr.mxu0 0.0
      %1112 = vmatpush1.msra.mxu0 0.0
      %1113 = vmatprep.subr.mxu0 0.0
      %1114 = vmatpush1.msra.mxu0 0.0
      %1115 = vmatprep.mubr.f32.mxu0 0.0
      %1116 = vmatmul.mubr.f32.gmra.mrb[0].mxu0 %v1043
      %v1117 = vpop.f32.mrb[0].mxu0
      %v1118 = vadd.f32 0.0, %v1117
      %v1119 = vpop.f32.mrb[0].mxu0
      %v1120 = vadd.f32 0.0, %v1119
      %1121 = vdwg.mxu0
      %1122 = vmatprep.subr.mxu0 0.0
      %1123 = vmatpush1.msra.mxu0 %v1049
      %1124 = vmatprep.subr.mxu0 0.0
      %1125 = vmatpush1.msra.mxu0 0.0
      %1126 = vmatprep.subr.mxu0 0.0
      %1127 = vmatpush1.msra.mxu0 0.0
      %1128 = vmatprep.subr.mxu0 0.0
      %1129 = vmatpush1.msra.mxu0 0.0
      %1130 = vmatprep.subr.mxu0 0.0
      %1131 = vmatpush1.msra.mxu0 0.0
      %1132 = vmatprep.subr.mxu0 0.0
      %1133 = vmatpush1.msra.mxu0 0.0
      %1134 = vmatprep.subr.mxu0 0.0
      %1135 = vmatpush1.msra.mxu0 0.0
      %1136 = vmatprep.subr.mxu0 0.0
      %1137 = vmatpush1.msra.mxu0 0.0
      %1138 = vmatprep.subr.mxu0 0.0
      %1139 = vmatpush1.msra.mxu0 0.0
      %1140 = vmatprep.subr.mxu0 0.0
      %1141 = vmatpush1.msra.mxu0 0.0
      %1142 = vmatprep.subr.mxu0 0.0
      %1143 = vmatpush1.msra.mxu0 0.0
      %1144 = vmatprep.subr.mxu0 0.0
      %1145 = vmatpush1.msra.mxu0 0.0
      %1146 = vmatprep.subr.mxu0 0.0
      %1147 = vmatpush1.msra.mxu0 0.0
      %1148 = vmatprep.subr.mxu0 0.0
      %1149 = vmatpush1.msra.mxu0 0.0
      %1150 = vmatprep.subr.mxu0 0.0
      %1151 = vmatpush1.msra.mxu0 0.0
      %1152 = vmatprep.subr.mxu0 0.0
      %1153 = vmatpush1.msra.mxu0 0.0
      %1154 = vmatprep.subr.mxu0 0.0
      %1155 = vmatpush1.msra.mxu0 0.0
      %1156 = vmatprep.subr.mxu0 0.0
      %1157 = vmatpush1.msra.mxu0 0.0
      %1158 = vmatprep.subr.mxu0 0.0
      %1159 = vmatpush1.msra.mxu0 0.0
      %1160 = vmatprep.subr.mxu0 0.0
      %1161 = vmatpush1.msra.mxu0 0.0
      %1162 = vmatprep.subr.mxu0 0.0
      %1163 = vmatpush1.msra.mxu0 0.0
      %1164 = vmatprep.subr.mxu0 0.0
      %1165 = vmatpush1.msra.mxu0 0.0
      %1166 = vmatprep.subr.mxu0 0.0
      %1167 = vmatpush1.msra.mxu0 0.0
      %1168 = vmatprep.subr.mxu0 0.0
      %1169 = vmatpush1.msra.mxu0 0.0
      %1170 = vmatprep.subr.mxu0 0.0
      %1171 = vmatpush1.msra.mxu0 0.0
      %1172 = vmatprep.subr.mxu0 0.0
      %1173 = vmatpush1.msra.mxu0 0.0
      %1174 = vmatprep.subr.mxu0 0.0
      %1175 = vmatpush1.msra.mxu0 0.0
      %1176 = vmatprep.subr.mxu0 0.0
      %1177 = vmatpush1.msra.mxu0 0.0
      %1178 = vmatprep.subr.mxu0 0.0
      %1179 = vmatpush1.msra.mxu0 0.0
      %1180 = vmatprep.subr.mxu0 0.0
      %1181 = vmatpush1.msra.mxu0 0.0
      %1182 = vmatprep.subr.mxu0 0.0
      %1183 = vmatpush1.msra.mxu0 0.0
      %1184 = vmatprep.subr.mxu0 0.0
      %1185 = vmatpush1.msra.mxu0 0.0
      %1186 = vmatprep.mubr.f32.mxu0 0.0
      %1187 = vmatmul.mubr.f32.gmra.mrb[0].mxu0 %v1043
      %v1188 = vpop.f32.mrb[0].mxu0
      %v1189 = vadd.f32 0.0, %v1188
      %v1190 = vpop.f32.mrb[0].mxu0
      %1191 = vdwg.mxu0
      %v1192 = vadd.f32 %v1023, %v1118
      %v1193 = vadd.f32 %v1024, %v1120
      %v1194 = vadd.f32 %v1025, %v1189
      %s1195 = scalar_lea.vmem %s1, 24
      %v1196 = vld [vmem:[%s1195] sm:$0xf]
      %v1197 = vld [vmem:[%s192] sm:$0xff]
      %v1198 = vld [vmem:[%s192 + $0x8] sm:$0xf]
      %v1201 = vcombine.high %v1197, %v1197
      %1202 = vrot.lane.b32.xlu0 %v1197, 92
      %v1203 = vpop.permute.xlu0 %1202
      %1204 = vrot.lane.b32.xlu0 %v1201, 92
      %v1205 = vpop.permute.xlu0 %1204
      %1206 = vrot.lane.b32.xlu0 %v1198, 92
      %v1207 = vpop.permute.xlu0 %1206
      %vm1208 = vcmask 752640
      %v1209 = vsel %vm1208, %v1203, %v1205
      %v1210 = vsel %vm1208, %v1205, %v1207
      %v1212 = vsel %vm217, %v1196, 0
      %v1214 = vsel %vm221, %v1209, 0
      %v1216 = vsel %vm221, %v1210, 0
      %v1218 = vsel %vm221, %v1207, 0
      %1220 = vmatprep.subr.mxu0 %v1216
      %1221 = vmatpush1.msra.mxu0 %v1214
      %1222 = vmatprep.subr.mxu0 0.0
      %1223 = vmatpush1.msra.mxu0 0.0
      %1224 = vmatprep.subr.mxu0 0.0
      %1225 = vmatpush1.msra.mxu0 0.0
      %1226 = vmatprep.subr.mxu0 0.0
      %1227 = vmatpush1.msra.mxu0 0.0
      %1228 = vmatprep.subr.mxu0 0.0
      %1229 = vmatpush1.msra.mxu0 0.0
      %1230 = vmatprep.subr.mxu0 0.0
      %1231 = vmatpush1.msra.mxu0 0.0
      %1232 = vmatprep.subr.mxu0 0.0
      %1233 = vmatpush1.msra.mxu0 0.0
      %1234 = vmatprep.subr.mxu0 0.0
      %1235 = vmatpush1.msra.mxu0 0.0
      %1236 = vmatprep.subr.mxu0 0.0
      %1237 = vmatpush1.msra.mxu0 0.0
      %1238 = vmatprep.subr.mxu0 0.0
      %1239 = vmatpush1.msra.mxu0 0.0
      %1240 = vmatprep.subr.mxu0 0.0
      %1241 = vmatpush1.msra.mxu0 0.0
      %1242 = vmatprep.subr.mxu0 0.0
      %1243 = vmatpush1.msra.mxu0 0.0
      %1244 = vmatprep.subr.mxu0 0.0
      %1245 = vmatpush1.msra.mxu0 0.0
      %1246 = vmatprep.subr.mxu0 0.0
      %1247 = vmatpush1.msra.mxu0 0.0
      %1248 = vmatprep.subr.mxu0 0.0
      %1249 = vmatpush1.msra.mxu0 0.0
      %1250 = vmatprep.subr.mxu0 0.0
      %1251 = vmatpush1.msra.mxu0 0.0
      %1252 = vmatprep.subr.mxu0 0.0
      %1253 = vmatpush1.msra.mxu0 0.0
      %1254 = vmatprep.subr.mxu0 0.0
      %1255 = vmatpush1.msra.mxu0 0.0
      %1256 = vmatprep.subr.mxu0 0.0
      %1257 = vmatpush1.msra.mxu0 0.0
      %1258 = vmatprep.subr.mxu0 0.0
      %1259 = vmatpush1.msra.mxu0 0.0
      %1260 = vmatprep.subr.mxu0 0.0
      %1261 = vmatpush1.msra.mxu0 0.0
      %1262 = vmatprep.subr.mxu0 0.0
      %1263 = vmatpush1.msra.mxu0 0.0
      %1264 = vmatprep.subr.mxu0 0.0
      %1265 = vmatpush1.msra.mxu0 0.0
      %1266 = vmatprep.subr.mxu0 0.0
      %1267 = vmatpush1.msra.mxu0 0.0
      %1268 = vmatprep.subr.mxu0 0.0
      %1269 = vmatpush1.msra.mxu0 0.0
      %1270 = vmatprep.subr.mxu0 0.0
      %1271 = vmatpush1.msra.mxu0 0.0
      %1272 = vmatprep.subr.mxu0 0.0
      %1273 = vmatpush1.msra.mxu0 0.0
      %1274 = vmatprep.subr.mxu0 0.0
      %1275 = vmatpush1.msra.mxu0 0.0
      %1276 = vmatprep.subr.mxu0 0.0
      %1277 = vmatpush1.msra.mxu0 0.0
      %1278 = vmatprep.subr.mxu0 0.0
      %1279 = vmatpush1.msra.mxu0 0.0
      %1280 = vmatprep.subr.mxu0 0.0
      %1281 = vmatpush1.msra.mxu0 0.0
      %1282 = vmatprep.subr.mxu0 0.0
      %1283 = vmatpush1.msra.mxu0 0.0
      %1284 = vmatprep.mubr.f32.mxu0 0.0
      %1285 = vmatmul.mubr.f32.gmra.mrb[0].mxu0 %v1212
      %v1286 = vpop.f32.mrb[0].mxu0
      %v1287 = vadd.f32 0.0, %v1286
      %v1288 = vpop.f32.mrb[0].mxu0
      %v1289 = vadd.f32 0.0, %v1288
      %1290 = vdwg.mxu0
      %1291 = vmatprep.subr.mxu0 0.0
      %1292 = vmatpush1.msra.mxu0 %v1218
      %1293 = vmatprep.subr.mxu0 0.0
      %1294 = vmatpush1.msra.mxu0 0.0
      %1295 = vmatprep.subr.mxu0 0.0
      %1296 = vmatpush1.msra.mxu0 0.0
      %1297 = vmatprep.subr.mxu0 0.0
      %1298 = vmatpush1.msra.mxu0 0.0
      %1299 = vmatprep.subr.mxu0 0.0
      %1300 = vmatpush1.msra.mxu0 0.0
      %1301 = vmatprep.subr.mxu0 0.0
      %1302 = vmatpush1.msra.mxu0 0.0
      %1303 = vmatprep.subr.mxu0 0.0
      %1304 = vmatpush1.msra.mxu0 0.0
      %1305 = vmatprep.subr.mxu0 0.0
      %1306 = vmatpush1.msra.mxu0 0.0
      %1307 = vmatprep.subr.mxu0 0.0
      %1308 = vmatpush1.msra.mxu0 0.0
      %1309 = vmatprep.subr.mxu0 0.0
      %1310 = vmatpush1.msra.mxu0 0.0
      %1311 = vmatprep.subr.mxu0 0.0
      %1312 = vmatpush1.msra.mxu0 0.0
      %1313 = vmatprep.subr.mxu0 0.0
      %1314 = vmatpush1.msra.mxu0 0.0
      %1315 = vmatprep.subr.mxu0 0.0
      %1316 = vmatpush1.msra.mxu0 0.0
      %1317 = vmatprep.subr.mxu0 0.0
      %1318 = vmatpush1.msra.mxu0 0.0
      %1319 = vmatprep.subr.mxu0 0.0
      %1320 = vmatpush1.msra.mxu0 0.0
      %1321 = vmatprep.subr.mxu0 0.0
      %1322 = vmatpush1.msra.mxu0 0.0
      %1323 = vmatprep.subr.mxu0 0.0
      %1324 = vmatpush1.msra.mxu0 0.0
      %1325 = vmatprep.subr.mxu0 0.0
      %1326 = vmatpush1.msra.mxu0 0.0
      %1327 = vmatprep.subr.mxu0 0.0
      %1328 = vmatpush1.msra.mxu0 0.0
      %1329 = vmatprep.subr.mxu0 0.0
      %1330 = vmatpush1.msra.mxu0 0.0
      %1331 = vmatprep.subr.mxu0 0.0
      %1332 = vmatpush1.msra.mxu0 0.0
      %1333 = vmatprep.subr.mxu0 0.0
      %1334 = vmatpush1.msra.mxu0 0.0
      %1335 = vmatprep.subr.mxu0 0.0
      %1336 = vmatpush1.msra.mxu0 0.0
      %1337 = vmatprep.subr.mxu0 0.0
      %1338 = vmatpush1.msra.mxu0 0.0
      %1339 = vmatprep.subr.mxu0 0.0
      %1340 = vmatpush1.msra.mxu0 0.0
      %1341 = vmatprep.subr.mxu0 0.0
      %1342 = vmatpush1.msra.mxu0 0.0
      %1343 = vmatprep.subr.mxu0 0.0
      %1344 = vmatpush1.msra.mxu0 0.0
      %1345 = vmatprep.subr.mxu0 0.0
      %1346 = vmatpush1.msra.mxu0 0.0
      %1347 = vmatprep.subr.mxu0 0.0
      %1348 = vmatpush1.msra.mxu0 0.0
      %1349 = vmatprep.subr.mxu0 0.0
      %1350 = vmatpush1.msra.mxu0 0.0
      %1351 = vmatprep.subr.mxu0 0.0
      %1352 = vmatpush1.msra.mxu0 0.0
      %1353 = vmatprep.subr.mxu0 0.0
      %1354 = vmatpush1.msra.mxu0 0.0
      %1355 = vmatprep.mubr.f32.mxu0 0.0
      %1356 = vmatmul.mubr.f32.gmra.mrb[0].mxu0 %v1212
      %v1357 = vpop.f32.mrb[0].mxu0
      %v1358 = vadd.f32 0.0, %v1357
      %v1359 = vpop.f32.mrb[0].mxu0
      %1360 = vdwg.mxu0
      %v1361 = vadd.f32 %v1192, %v1287
      %v1362 = vadd.f32 %v1193, %v1289
      %v1363 = vadd.f32 %v1194, %v1358
      %s1364 = scalar_lea.vmem %s1, 28
      %v1365 = vld [vmem:[%s1364] sm:$0xf]
      %v1366 = vld [vmem:[%s192] sm:$0xff]
      %v1367 = vld [vmem:[%s192 + $0x8] sm:$0xf]
      %v1370 = vcombine.high %v1366, %v1366
      %1371 = vrot.lane.b32.xlu0 %v1366, 91
      %v1372 = vpop.permute.xlu0 %1371
      %1373 = vrot.lane.b32.xlu0 %v1370, 91
      %v1374 = vpop.permute.xlu0 %1373
      %1375 = vrot.lane.b32.xlu0 %v1367, 91
      %v1376 = vpop.permute.xlu0 %1375
      %vm1377 = vcmask 744448
      %v1378 = vsel %vm1377, %v1372, %v1374
      %v1379 = vsel %vm1377, %v1374, %v1376
      %v1381 = vsel %vm217, %v1365, 0
      %v1383 = vsel %vm221, %v1378, 0
      %v1385 = vsel %vm221, %v1379, 0
      %v1387 = vsel %vm221, %v1376, 0
      %1389 = vmatprep.subr.mxu0 %v1385
      %1390 = vmatpush1.msra.mxu0 %v1383
      %1391 = vmatprep.subr.mxu0 0.0
      %1392 = vmatpush1.msra.mxu0 0.0
      %1393 = vmatprep.subr.mxu0 0.0
      %1394 = vmatpush1.msra.mxu0 0.0
      %1395 = vmatprep.subr.mxu0 0.0
      %1396 = vmatpush1.msra.mxu0 0.0
      %1397 = vmatprep.subr.mxu0 0.0
      %1398 = vmatpush1.msra.mxu0 0.0
      %1399 = vmatprep.subr.mxu0 0.0
      %1400 = vmatpush1.msra.mxu0 0.0
      %1401 = vmatprep.subr.mxu0 0.0
      %1402 = vmatpush1.msra.mxu0 0.0
      %1403 = vmatprep.subr.mxu0 0.0
      %1404 = vmatpush1.msra.mxu0 0.0
      %1405 = vmatprep.subr.mxu0 0.0
      %1406 = vmatpush1.msra.mxu0 0.0
      %1407 = vmatprep.subr.mxu0 0.0
      %1408 = vmatpush1.msra.mxu0 0.0
      %1409 = vmatprep.subr.mxu0 0.0
      %1410 = vmatpush1.msra.mxu0 0.0
      %1411 = vmatprep.subr.mxu0 0.0
      %1412 = vmatpush1.msra.mxu0 0.0
      %1413 = vmatprep.subr.mxu0 0.0
      %1414 = vmatpush1.msra.mxu0 0.0
      %1415 = vmatprep.subr.mxu0 0.0
      %1416 = vmatpush1.msra.mxu0 0.0
      %1417 = vmatprep.subr.mxu0 0.0
      %1418 = vmatpush1.msra.mxu0 0.0
      %1419 = vmatprep.subr.mxu0 0.0
      %1420 = vmatpush1.msra.mxu0 0.0
      %1421 = vmatprep.subr.mxu0 0.0
      %1422 = vmatpush1.msra.mxu0 0.0
      %1423 = vmatprep.subr.mxu0 0.0
      %1424 = vmatpush1.msra.mxu0 0.0
      %1425 = vmatprep.subr.mxu0 0.0
      %1426 = vmatpush1.msra.mxu0 0.0
      %1427 = vmatprep.subr.mxu0 0.0
      %1428 = vmatpush1.msra.mxu0 0.0
      %1429 = vmatprep.subr.mxu0 0.0
      %1430 = vmatpush1.msra.mxu0 0.0
      %1431 = vmatprep.subr.mxu0 0.0
      %1432 = vmatpush1.msra.mxu0 0.0
      %1433 = vmatprep.subr.mxu0 0.0
      %1434 = vmatpush1.msra.mxu0 0.0
      %1435 = vmatprep.subr.mxu0 0.0
      %1436 = vmatpush1.msra.mxu0 0.0
      %1437 = vmatprep.subr.mxu0 0.0
      %1438 = vmatpush1.msra.mxu0 0.0
      %1439 = vmatprep.subr.mxu0 0.0
      %1440 = vmatpush1.msra.mxu0 0.0
      %1441 = vmatprep.subr.mxu0 0.0
      %1442 = vmatpush1.msra.mxu0 0.0
      %1443 = vmatprep.subr.mxu0 0.0
      %1444 = vmatpush1.msra.mxu0 0.0
      %1445 = vmatprep.subr.mxu0 0.0
      %1446 = vmatpush1.msra.mxu0 0.0
      %1447 = vmatprep.subr.mxu0 0.0
      %1448 = vmatpush1.msra.mxu0 0.0
      %1449 = vmatprep.subr.mxu0 0.0
      %1450 = vmatpush1.msra.mxu0 0.0
      %1451 = vmatprep.subr.mxu0 0.0
      %1452 = vmatpush1.msra.mxu0 0.0
      %1453 = vmatprep.mubr.f32.mxu0 0.0
      %1454 = vmatmul.mubr.f32.gmra.mrb[0].mxu0 %v1381
      %v1455 = vpop.f32.mrb[0].mxu0
      %v1456 = vadd.f32 0.0, %v1455
      %v1457 = vpop.f32.mrb[0].mxu0
      %v1458 = vadd.f32 0.0, %v1457
      %1459 = vdwg.mxu0
      %1460 = vmatprep.subr.mxu0 0.0
      %1461 = vmatpush1.msra.mxu0 %v1387
      %1462 = vmatprep.subr.mxu0 0.0
      %1463 = vmatpush1.msra.mxu0 0.0
      %1464 = vmatprep.subr.mxu0 0.0
      %1465 = vmatpush1.msra.mxu0 0.0
      %1466 = vmatprep.subr.mxu0 0.0
      %1467 = vmatpush1.msra.mxu0 0.0
      %1468 = vmatprep.subr.mxu0 0.0
      %1469 = vmatpush1.msra.mxu0 0.0
      %1470 = vmatprep.subr.mxu0 0.0
      %1471 = vmatpush1.msra.mxu0 0.0
      %1472 = vmatprep.subr.mxu0 0.0
      %1473 = vmatpush1.msra.mxu0 0.0
      %1474 = vmatprep.subr.mxu0 0.0
      %1475 = vmatpush1.msra.mxu0 0.0
      %1476 = vmatprep.subr.mxu0 0.0
      %1477 = vmatpush1.msra.mxu0 0.0
      %1478 = vmatprep.subr.mxu0 0.0
      %1479 = vmatpush1.msra.mxu0 0.0
      %1480 = vmatprep.subr.mxu0 0.0
      %1481 = vmatpush1.msra.mxu0 0.0
      %1482 = vmatprep.subr.mxu0 0.0
      %1483 = vmatpush1.msra.mxu0 0.0
      %1484 = vmatprep.subr.mxu0 0.0
      %1485 = vmatpush1.msra.mxu0 0.0
      %1486 = vmatprep.subr.mxu0 0.0
      %1487 = vmatpush1.msra.mxu0 0.0
      %1488 = vmatprep.subr.mxu0 0.0
      %1489 = vmatpush1.msra.mxu0 0.0
      %1490 = vmatprep.subr.mxu0 0.0
      %1491 = vmatpush1.msra.mxu0 0.0
      %1492 = vmatprep.subr.mxu0 0.0
      %1493 = vmatpush1.msra.mxu0 0.0
      %1494 = vmatprep.subr.mxu0 0.0
      %1495 = vmatpush1.msra.mxu0 0.0
      %1496 = vmatprep.subr.mxu0 0.0
      %1497 = vmatpush1.msra.mxu0 0.0
      %1498 = vmatprep.subr.mxu0 0.0
      %1499 = vmatpush1.msra.mxu0 0.0
      %1500 = vmatprep.subr.mxu0 0.0
      %1501 = vmatpush1.msra.mxu0 0.0
      %1502 = vmatprep.subr.mxu0 0.0
      %1503 = vmatpush1.msra.mxu0 0.0
      %1504 = vmatprep.subr.mxu0 0.0
      %1505 = vmatpush1.msra.mxu0 0.0
      %1506 = vmatprep.subr.mxu0 0.0
      %1507 = vmatpush1.msra.mxu0 0.0
      %1508 = vmatprep.subr.mxu0 0.0
      %1509 = vmatpush1.msra.mxu0 0.0
      %1510 = vmatprep.subr.mxu0 0.0
      %1511 = vmatpush1.msra.mxu0 0.0
      %1512 = vmatprep.subr.mxu0 0.0
      %1513 = vmatpush1.msra.mxu0 0.0
      %1514 = vmatprep.subr.mxu0 0.0
      %1515 = vmatpush1.msra.mxu0 0.0
      %1516 = vmatprep.subr.mxu0 0.0
      %1517 = vmatpush1.msra.mxu0 0.0
      %1518 = vmatprep.subr.mxu0 0.0
      %1519 = vmatpush1.msra.mxu0 0.0
      %1520 = vmatprep.subr.mxu0 0.0
      %1521 = vmatpush1.msra.mxu0 0.0
      %1522 = vmatprep.subr.mxu0 0.0
      %1523 = vmatpush1.msra.mxu0 0.0
      %1524 = vmatprep.mubr.f32.mxu0 0.0
      %1525 = vmatmul.mubr.f32.gmra.mrb[0].mxu0 %v1381
      %v1526 = vpop.f32.mrb[0].mxu0
      %v1527 = vadd.f32 0.0, %v1526
      %v1528 = vpop.f32.mrb[0].mxu0
      %1529 = vdwg.mxu0
      %v1530 = vadd.f32 %v1361, %v1456
      %v1531 = vadd.f32 %v1362, %v1458
      %v1532 = vadd.f32 %v1363, %v1527
      %s1533 = scalar_lea.vmem %s1, 32
      %v1534 = vld [vmem:[%s1533] sm:$0xf]
      %v1535 = vld [vmem:[%s192] sm:$0xff]
      %v1536 = vld [vmem:[%s192 + $0x8] sm:$0xf]
      %v1539 = vcombine.high %v1535, %v1535
      %1540 = vrot.lane.b32.xlu0 %v1535, 90
      %v1541 = vpop.permute.xlu0 %1540
      %1542 = vrot.lane.b32.xlu0 %v1539, 90
      %v1543 = vpop.permute.xlu0 %1542
      %1544 = vrot.lane.b32.xlu0 %v1536, 90
      %v1545 = vpop.permute.xlu0 %1544
      %vm1546 = vcmask 736256
      %v1547 = vsel %vm1546, %v1541, %v1543
      %v1548 = vsel %vm1546, %v1543, %v1545
      %v1550 = vsel %vm217, %v1534, 0
      %v1552 = vsel %vm221, %v1547, 0
      %v1554 = vsel %vm221, %v1548, 0
      %v1556 = vsel %vm221, %v1545, 0
      %1558 = vmatprep.subr.mxu0 %v1554
      %1559 = vmatpush1.msra.mxu0 %v1552
      %1560 = vmatprep.subr.mxu0 0.0
      %1561 = vmatpush1.msra.mxu0 0.0
      %1562 = vmatprep.subr.mxu0 0.0
      %1563 = vmatpush1.msra.mxu0 0.0
      %1564 = vmatprep.subr.mxu0 0.0
      %1565 = vmatpush1.msra.mxu0 0.0
      %1566 = vmatprep.subr.mxu0 0.0
      %1567 = vmatpush1.msra.mxu0 0.0
      %1568 = vmatprep.subr.mxu0 0.0
      %1569 = vmatpush1.msra.mxu0 0.0
      %1570 = vmatprep.subr.mxu0 0.0
      %1571 = vmatpush1.msra.mxu0 0.0
      %1572 = vmatprep.subr.mxu0 0.0
      %1573 = vmatpush1.msra.mxu0 0.0
      %1574 = vmatprep.subr.mxu0 0.0
      %1575 = vmatpush1.msra.mxu0 0.0
      %1576 = vmatprep.subr.mxu0 0.0
      %1577 = vmatpush1.msra.mxu0 0.0
      %1578 = vmatprep.subr.mxu0 0.0
      %1579 = vmatpush1.msra.mxu0 0.0
      %1580 = vmatprep.subr.mxu0 0.0
      %1581 = vmatpush1.msra.mxu0 0.0
      %1582 = vmatprep.subr.mxu0 0.0
      %1583 = vmatpush1.msra.mxu0 0.0
      %1584 = vmatprep.subr.mxu0 0.0
      %1585 = vmatpush1.msra.mxu0 0.0
      %1586 = vmatprep.subr.mxu0 0.0
      %1587 = vmatpush1.msra.mxu0 0.0
      %1588 = vmatprep.subr.mxu0 0.0
      %1589 = vmatpush1.msra.mxu0 0.0
      %1590 = vmatprep.subr.mxu0 0.0
      %1591 = vmatpush1.msra.mxu0 0.0
      %1592 = vmatprep.subr.mxu0 0.0
      %1593 = vmatpush1.msra.mxu0 0.0
      %1594 = vmatprep.subr.mxu0 0.0
      %1595 = vmatpush1.msra.mxu0 0.0
      %1596 = vmatprep.subr.mxu0 0.0
      %1597 = vmatpush1.msra.mxu0 0.0
      %1598 = vmatprep.subr.mxu0 0.0
      %1599 = vmatpush1.msra.mxu0 0.0
      %1600 = vmatprep.subr.mxu0 0.0
      %1601 = vmatpush1.msra.mxu0 0.0
      %1602 = vmatprep.subr.mxu0 0.0
      %1603 = vmatpush1.msra.mxu0 0.0
      %1604 = vmatprep.subr.mxu0 0.0
      %1605 = vmatpush1.msra.mxu0 0.0
      %1606 = vmatprep.subr.mxu0 0.0
      %1607 = vmatpush1.msra.mxu0 0.0
      %1608 = vmatprep.subr.mxu0 0.0
      %1609 = vmatpush1.msra.mxu0 0.0
      %1610 = vmatprep.subr.mxu0 0.0
      %1611 = vmatpush1.msra.mxu0 0.0
      %1612 = vmatprep.subr.mxu0 0.0
      %1613 = vmatpush1.msra.mxu0 0.0
      %1614 = vmatprep.subr.mxu0 0.0
      %1615 = vmatpush1.msra.mxu0 0.0
      %1616 = vmatprep.subr.mxu0 0.0
      %1617 = vmatpush1.msra.mxu0 0.0
      %1618 = vmatprep.subr.mxu0 0.0
      %1619 = vmatpush1.msra.mxu0 0.0
      %1620 = vmatprep.subr.mxu0 0.0
      %1621 = vmatpush1.msra.mxu0 0.0
      %1622 = vmatprep.mubr.f32.mxu0 0.0
      %1623 = vmatmul.mubr.f32.gmra.mrb[0].mxu0 %v1550
      %v1624 = vpop.f32.mrb[0].mxu0
      %v1625 = vadd.f32 0.0, %v1624
      %v1626 = vpop.f32.mrb[0].mxu0
      %v1627 = vadd.f32 0.0, %v1626
      %1628 = vdwg.mxu0
      %1629 = vmatprep.subr.mxu0 0.0
      %1630 = vmatpush1.msra.mxu0 %v1556
      %1631 = vmatprep.subr.mxu0 0.0
      %1632 = vmatpush1.msra.mxu0 0.0
      %1633 = vmatprep.subr.mxu0 0.0
      %1634 = vmatpush1.msra.mxu0 0.0
      %1635 = vmatprep.subr.mxu0 0.0
      %1636 = vmatpush1.msra.mxu0 0.0
      %1637 = vmatprep.subr.mxu0 0.0
      %1638 = vmatpush1.msra.mxu0 0.0
      %1639 = vmatprep.subr.mxu0 0.0
      %1640 = vmatpush1.msra.mxu0 0.0
      %1641 = vmatprep.subr.mxu0 0.0
      %1642 = vmatpush1.msra.mxu0 0.0
      %1643 = vmatprep.subr.mxu0 0.0
      %1644 = vmatpush1.msra.mxu0 0.0
      %1645 = vmatprep.subr.mxu0 0.0
      %1646 = vmatpush1.msra.mxu0 0.0
      %1647 = vmatprep.subr.mxu0 0.0
      %1648 = vmatpush1.msra.mxu0 0.0
      %1649 = vmatprep.subr.mxu0 0.0
      %1650 = vmatpush1.msra.mxu0 0.0
      %1651 = vmatprep.subr.mxu0 0.0
      %1652 = vmatpush1.msra.mxu0 0.0
      %1653 = vmatprep.subr.mxu0 0.0
      %1654 = vmatpush1.msra.mxu0 0.0
      %1655 = vmatprep.subr.mxu0 0.0
      %1656 = vmatpush1.msra.mxu0 0.0
      %1657 = vmatprep.subr.mxu0 0.0
      %1658 = vmatpush1.msra.mxu0 0.0
      %1659 = vmatprep.subr.mxu0 0.0
      %1660 = vmatpush1.msra.mxu0 0.0
      %1661 = vmatprep.subr.mxu0 0.0
      %1662 = vmatpush1.msra.mxu0 0.0
      %1663 = vmatprep.subr.mxu0 0.0
      %1664 = vmatpush1.msra.mxu0 0.0
      %1665 = vmatprep.subr.mxu0 0.0
      %1666 = vmatpush1.msra.mxu0 0.0
      %1667 = vmatprep.subr.mxu0 0.0
      %1668 = vmatpush1.msra.mxu0 0.0
      %1669 = vmatprep.subr.mxu0 0.0
      %1670 = vmatpush1.msra.mxu0 0.0
      %1671 = vmatprep.subr.mxu0 0.0
      %1672 = vmatpush1.msra.mxu0 0.0
      %1673 = vmatprep.subr.mxu0 0.0
      %1674 = vmatpush1.msra.mxu0 0.0
      %1675 = vmatprep.subr.mxu0 0.0
      %1676 = vmatpush1.msra.mxu0 0.0
      %1677 = vmatprep.subr.mxu0 0.0
      %1678 = vmatpush1.msra.mxu0 0.0
      %1679 = vmatprep.subr.mxu0 0.0
      %1680 = vmatpush1.msra.mxu0 0.0
      %1681 = vmatprep.subr.mxu0 0.0
      %1682 = vmatpush1.msra.mxu0 0.0
      %1683 = vmatprep.subr.mxu0 0.0
      %1684 = vmatpush1.msra.mxu0 0.0
      %1685 = vmatprep.subr.mxu0 0.0
      %1686 = vmatpush1.msra.mxu0 0.0
      %1687 = vmatprep.subr.mxu0 0.0
      %1688 = vmatpush1.msra.mxu0 0.0
      %1689 = vmatprep.subr.mxu0 0.0
      %1690 = vmatpush1.msra.mxu0 0.0
      %1691 = vmatprep.subr.mxu0 0.0
      %1692 = vmatpush1.msra.mxu0 0.0
      %1693 = vmatprep.mubr.f32.mxu0 0.0
      %1694 = vmatmul.mubr.f32.gmra.mrb[0].mxu0 %v1550
      %v1695 = vpop.f32.mrb[0].mxu0
      %v1696 = vadd.f32 0.0, %v1695
      %v1697 = vpop.f32.mrb[0].mxu0
      %1698 = vdwg.mxu0
      %v1699 = vadd.f32 %v1530, %v1625
      %v1700 = vadd.f32 %v1531, %v1627
      %v1701 = vadd.f32 %v1532, %v1696
      %v1702 = vsel %vm199, 1, 0
      %v1703 = vlaneseq
      %v1704 = vshrl.u32 %v1703, 7
      %v1705 = vsub.s32 0, %v1704
      %v1706 = vrot.slane %v1702, %v1705
      %v1707 = vlaneseq
      %v1708 = vshrl.u32 %v1707, 7
      %v1709 = vsub.s32 1, %v1708
      %v1710 = vrot.slane %v1702, %v1709
      %v1711 = vlaneseq
      %v1712 = vshrl.u32 %v1711, 7
      %v1713 = vsub.s32 2, %v1712
      %v1714 = vrot.slane %v1702, %v1713
      %vm1715 = vcmp.eq.s32.totalorder %v1706, 1
      %vm1716 = vcmp.eq.s32.totalorder %v1710, 1
      %vm1717 = vcmp.eq.s32.totalorder %v1714, 1
      %v1718 = vsel %vm1715, %v1699, 0.0
      %v1719 = vsel %vm1716, %v1700, 0.0
      %v1720 = vsel %vm1717, %v1701, 0.0
      %v1721 = vsel %vm221, %v1718, 0.0
      %v1722 = vsel %vm221, %v1719, 0.0
      %v1723 = vadd.f32 %v1721, %v1722
      %vm1724 = vcmask 257024
      %v1725 = vsel %vm1724, %v1720, 0.0
      %v1726 = vadd.f32 %v1723, %v1725
      %1727 = vadd.xlane.f32.xlu0 %v1726
      %v1728 = vpop.xlane.xlu0 %1727
      %v1729 = vmul.f32 %v1718, %v1718
      %v1730 = vmul.f32 %v1719, %v1719
      %v1731 = vmul.f32 %v1720, %v1720
      %v1732 = vsel %vm221, %v1729, 0.0
      %v1733 = vsel %vm221, %v1730, 0.0
      %v1734 = vadd.f32 %v1732, %v1733
      %v1735 = vsel %vm1724, %v1731, 0.0
      %v1736 = vadd.f32 %v1734, %v1735
      %1737 = vadd.xlane.f32.xlu0 %v1736
      %v1738 = vpop.xlane.xlu0 %1737
      %v1739 = vmul.f32 %v1728, 0.00390625
      %v1740 = vmul.f32 %v1738, 0.00390625
      %v1741 = vmul.f32 %v1739, %v1739
      %v1742 = vsub.f32 %v1740, %v1741
      %v1743 = vsub.f32 %v1699, %v1739
      %v1744 = vsub.f32 %v1700, %v1739
      %v1745 = vsub.f32 %v1701, %v1739
      %v1746 = vadd.f32 %v1742, 1e-05
      %v1747 = vrsqrt.pop %v1746
      %v1748 = vmul.f32 %v1743, %v1747
      %v1749 = vmul.f32 %v1744, %v1747
      %v1750 = vmul.f32 %v1745, %v1747
      %v1751 = vmax.f32 %v1748, 0.0
      %v1752 = vmax.f32 %v1749, 0.0
      %v1753 = vmax.f32 %v1750, 0.0
      %1754 = vst [vmem:[#allocation2] sm:$0xff] 0.0
      %1755 = vst [vmem:[#allocation2 + $0x8] sm:$0xf] 0.0
      %v1759 = vcombine.low %v1751, %v1752
      %1760 = vrot.lane.b32.xlu0 %v1759, 19
      %v1761 = vpop.permute.xlu0 %1760
      %1762 = vrot.lane.b32.xlu0 %v1753, 19
      %v1763 = vpop.permute.xlu0 %1762
      %v1764 = vrot.slane %v1761, 4
      %vm1765 = vcmask 154624
      %v1766 = vsel %vm1765, %v1764, %v1761
      %v1767 = vsel %vm1765, %v1764, %v1763
      %vm1770 = vcmask 1043608
      %vm1771 = vcmask 1047556
      %vm1772 = vmor %vm1771, %vm1770
      %1773 = vst.msk [vmem:[#allocation2] sm:$0xff] %vm1772, %v1766
      %vm1774 = vcmask 412672
      %1775 = vst.msk [vmem:[#allocation2 + $0x8] sm:$0xf] %vm1774, %v1767
      %v1776 = vld [vmem:[#allocation2] sm:$0xff]
      %v1777 = vld [vmem:[#allocation2 + $0x8] sm:$0xf]
      %vm1778 = vcmp.eq.s32.totalorder %v198, 0
      %vm1779 = vcmp.eq.s32.totalorder %v198, 17
      %v1780 = vsel %vm1779, 1, 0
      %v1781 = vlaneseq
      %v1782 = vshrl.u32 %v1781, 7
      %v1783 = vsub.s32 0, %v1782
      %v1784 = vrot.slane %v1780, %v1783
      %v1785 = vlaneseq
      %v1786 = vshrl.u32 %v1785, 7
      %v1787 = vsub.s32 1, %v1786
      %v1788 = vrot.slane %v1780, %v1787
      %v1789 = vlaneseq
      %v1790 = vshrl.u32 %v1789, 7
      %v1791 = vsub.s32 2, %v1790
      %v1792 = vrot.slane %v1780, %v1791
      %vm1793 = vcmp.eq.s32.totalorder %v1784, 1
      %vm1794 = vcmp.eq.s32.totalorder %v1788, 1
      %vm1795 = vcmp.eq.s32.totalorder %v1792, 1
      %v1798 = vcombine.high %v1776, %v1776
      %1799 = vrot.lane.b32.xlu0 %v1776, 112
      %v1800 = vpop.permute.xlu0 %1799
      %1801 = vrot.lane.b32.xlu0 %v1798, 112
      %v1802 = vpop.permute.xlu0 %1801
      %1803 = vrot.lane.b32.xlu0 %v1777, 112
      %v1804 = vpop.permute.xlu0 %1803
      %vm1805 = vcmask 916480
      %v1806 = vsel %vm1805, %v1800, %v1802
      %v1807 = vsel %vm1805, %v1802, %v1804
      %1811 = vrot.lane.b32.xlu0 %v1776, 110
      %v1812 = vpop.permute.xlu0 %1811
      %1813 = vrot.lane.b32.xlu0 %v1798, 110
      %v1814 = vpop.permute.xlu0 %1813
      %1815 = vrot.lane.b32.xlu0 %v1777, 110
      %v1816 = vpop.permute.xlu0 %1815
      %v1817 = vsel %vm701, %v1812, %v1814
      %v1818 = vsel %vm701, %v1814, %v1816
      %v1822 = vsel %vm1793, %v1806, %v1817
      %v1823 = vsel %vm1794, %v1807, %v1818
      %v1824 = vsel %vm1795, %v1804, %v1816
      %v1825 = vsel %vm1778, 1, 0
      %v1826 = vlaneseq
      %v1827 = vshrl.u32 %v1826, 7
      %v1828 = vsub.s32 0, %v1827
      %v1829 = vrot.slane %v1825, %v1828
      %v1830 = vlaneseq
      %v1831 = vshrl.u32 %v1830, 7
      %v1832 = vsub.s32 1, %v1831
      %v1833 = vrot.slane %v1825, %v1832
      %v1834 = vlaneseq
      %v1835 = vshrl.u32 %v1834, 7
      %v1836 = vsub.s32 2, %v1835
      %v1837 = vrot.slane %v1825, %v1836
      %vm1838 = vcmp.eq.s32.totalorder %v1829, 1
      %vm1839 = vcmp.eq.s32.totalorder %v1833, 1
      %vm1840 = vcmp.eq.s32.totalorder %v1837, 1
      %1841 = vrot.lane.b32.xlu0 %v1776, 108
      %v1842 = vpop.permute.xlu0 %1841
      %1843 = vrot.lane.b32.xlu0 %v1798, 108
      %v1844 = vpop.permute.xlu0 %1843
      %1845 = vrot.lane.b32.xlu0 %v1777, 108
      %v1846 = vpop.permute.xlu0 %1845
      %v1847 = vsel %vm1039, %v1842, %v1844
      %v1848 = vsel %vm1039, %v1844, %v1846
      %v1852 = vsel %vm1838, %v1847, %v1822
      %v1853 = vsel %vm1839, %v1848, %v1823
      %v1854 = vsel %vm1840, %v1846, %v1824
      %v1858 = vcombine.low %v1852, %v1853
      %1859 = vrot.lane.b32.xlu0 %v1858, 18
      %v1860 = vpop.permute.xlu0 %1859
      %1861 = vrot.lane.b32.xlu0 %v1854, 18
      %v1862 = vpop.permute.xlu0 %1861
      %v1863 = vrot.slane %v1860, 4
      %vm1864 = vcmask 146432
      %v1865 = vsel %vm1864, %v1863, %v1860
      %v1866 = vsel %vm1864, %v1863, %v1862
      %vm1869 = vcmask 1043600
      %vm1870 = vmor %vm1771, %vm1869
      %1871 = vst.msk [vmem:[#allocation2] sm:$0xff] %vm1870, %v1865
      %vm1872 = vcmask 404480
      %1873 = vst.msk [vmem:[#allocation2 + $0x8] sm:$0xf] %vm1872, %v1866
      %v1874 = vld [vmem:[#allocation2] sm:$0xf]
      %1876 = vrot.lane.b32.xlu0 %v1874, 92
      %v1877 = vpop.permute.xlu0 %1876
      %vm1879 = vcmask 142336
      %1880 = vst.msk [vmem:[#allocation2] sm:$0xf] %vm1879, %v1877
      %v1881 = vld [vmem:[#allocation2 + $0x8] sm:$0xf]
      %1883 = vrot.lane.b32.xlu0 %v1881, 36
      %v1884 = vpop.permute.xlu0 %1883
      %vm1886 = vcmask 552336
      %1887 = vst.msk [vmem:[#allocation2 + $0x8] sm:$0xf] %vm1886, %v1884
      %v1888 = vld [vmem:[%s2] sm:$0xf]
      %v1889 = vld [vmem:[#allocation2] sm:$0xff]
      %v1890 = vld [vmem:[#allocation2 + $0x8] sm:$0xf]
      %s1891 = scalar_lea.vmem %s2, 4
      %v1892 = vld [vmem:[%s1891] sm:$0xf]
      %v1895 = vcombine.high %v1889, %v1889
      %1896 = vrot.lane.b32.xlu0 %v1889, 127
      %v1897 = vpop.permute.xlu0 %1896
      %1898 = vrot.lane.b32.xlu0 %v1895, 127
      %v1899 = vpop.permute.xlu0 %1898
      %1900 = vrot.lane.b32.xlu0 %v1890, 127
      %v1901 = vpop.permute.xlu0 %1900
      %v1902 = vsel %vm214, %v1897, %v1899
      %v1903 = vsel %vm214, %v1899, %v1901
      %v1905 = vsel %vm217, %v1892, 0
      %v1907 = vsel %vm221, %v1902, 0
      %v1909 = vsel %vm221, %v1903, 0
      %v1911 = vsel %vm221, %v1901, 0
      %1913 = vmatprep.subr.mxu0 %v1909
      %1914 = vmatpush1.msra.mxu0 %v1907
      %1915 = vmatprep.subr.mxu0 0.0
      %1916 = vmatpush1.msra.mxu0 0.0
      %1917 = vmatprep.subr.mxu0 0.0
      %1918 = vmatpush1.msra.mxu0 0.0
      %1919 = vmatprep.subr.mxu0 0.0
      %1920 = vmatpush1.msra.mxu0 0.0
      %1921 = vmatprep.subr.mxu0 0.0
      %1922 = vmatpush1.msra.mxu0 0.0
      %1923 = vmatprep.subr.mxu0 0.0
      %1924 = vmatpush1.msra.mxu0 0.0
      %1925 = vmatprep.subr.mxu0 0.0
      %1926 = vmatpush1.msra.mxu0 0.0
      %1927 = vmatprep.subr.mxu0 0.0
      %1928 = vmatpush1.msra.mxu0 0.0
      %1929 = vmatprep.subr.mxu0 0.0
      %1930 = vmatpush1.msra.mxu0 0.0
      %1931 = vmatprep.subr.mxu0 0.0
      %1932 = vmatpush1.msra.mxu0 0.0
      %1933 = vmatprep.subr.mxu0 0.0
      %1934 = vmatpush1.msra.mxu0 0.0
      %1935 = vmatprep.subr.mxu0 0.0
      %1936 = vmatpush1.msra.mxu0 0.0
      %1937 = vmatprep.subr.mxu0 0.0
      %1938 = vmatpush1.msra.mxu0 0.0
      %1939 = vmatprep.subr.mxu0 0.0
      %1940 = vmatpush1.msra.mxu0 0.0
      %1941 = vmatprep.subr.mxu0 0.0
      %1942 = vmatpush1.msra.mxu0 0.0
      %1943 = vmatprep.subr.mxu0 0.0
      %1944 = vmatpush1.msra.mxu0 0.0
      %1945 = vmatprep.subr.mxu0 0.0
      %1946 = vmatpush1.msra.mxu0 0.0
      %1947 = vmatprep.subr.mxu0 0.0
      %1948 = vmatpush1.msra.mxu0 0.0
      %1949 = vmatprep.subr.mxu0 0.0
      %1950 = vmatpush1.msra.mxu0 0.0
      %1951 = vmatprep.subr.mxu0 0.0
      %1952 = vmatpush1.msra.mxu0 0.0
      %1953 = vmatprep.subr.mxu0 0.0
      %1954 = vmatpush1.msra.mxu0 0.0
      %1955 = vmatprep.subr.mxu0 0.0
      %1956 = vmatpush1.msra.mxu0 0.0
      %1957 = vmatprep.subr.mxu0 0.0
      %1958 = vmatpush1.msra.mxu0 0.0
      %1959 = vmatprep.subr.mxu0 0.0
      %1960 = vmatpush1.msra.mxu0 0.0
      %1961 = vmatprep.subr.mxu0 0.0
      %1962 = vmatpush1.msra.mxu0 0.0
      %1963 = vmatprep.subr.mxu0 0.0
      %1964 = vmatpush1.msra.mxu0 0.0
      %1965 = vmatprep.subr.mxu0 0.0
      %1966 = vmatpush1.msra.mxu0 0.0
      %1967 = vmatprep.subr.mxu0 0.0
      %1968 = vmatpush1.msra.mxu0 0.0
      %1969 = vmatprep.subr.mxu0 0.0
      %1970 = vmatpush1.msra.mxu0 0.0
      %1971 = vmatprep.subr.mxu0 0.0
      %1972 = vmatpush1.msra.mxu0 0.0
      %1973 = vmatprep.subr.mxu0 0.0
      %1974 = vmatpush1.msra.mxu0 0.0
      %1975 = vmatprep.subr.mxu0 0.0
      %1976 = vmatpush1.msra.mxu0 0.0
      %1977 = vmatprep.mubr.f32.mxu0 0.0
      %1978 = vmatmul.mubr.f32.gmra.mrb[0].mxu0 %v1905
      %v1979 = vpop.f32.mrb[0].mxu0
      %v1980 = vadd.f32 0.0, %v1979
      %v1981 = vpop.f32.mrb[0].mxu0
      %v1982 = vadd.f32 0.0, %v1981
      %1983 = vdwg.mxu0
      %1984 = vmatprep.subr.mxu0 0.0
      %1985 = vmatpush1.msra.mxu0 %v1911
      %1986 = vmatprep.subr.mxu0 0.0
      %1987 = vmatpush1.msra.mxu0 0.0
      %1988 = vmatprep.subr.mxu0 0.0
      %1989 = vmatpush1.msra.mxu0 0.0
      %1990 = vmatprep.subr.mxu0 0.0
      %1991 = vmatpush1.msra.mxu0 0.0
      %1992 = vmatprep.subr.mxu0 0.0
      %1993 = vmatpush1.msra.mxu0 0.0
      %1994 = vmatprep.subr.mxu0 0.0
      %1995 = vmatpush1.msra.mxu0 0.0
      %1996 = vmatprep.subr.mxu0 0.0
      %1997 = vmatpush1.msra.mxu0 0.0
      %1998 = vmatprep.subr.mxu0 0.0
      %1999 = vmatpush1.msra.mxu0 0.0
      %2000 = vmatprep.subr.mxu0 0.0
      %2001 = vmatpush1.msra.mxu0 0.0
      %2002 = vmatprep.subr.mxu0 0.0
      %2003 = vmatpush1.msra.mxu0 0.0
      %2004 = vmatprep.subr.mxu0 0.0
      %2005 = vmatpush1.msra.mxu0 0.0
      %2006 = vmatprep.subr.mxu0 0.0
      %2007 = vmatpush1.msra.mxu0 0.0
      %2008 = vmatprep.subr.mxu0 0.0
      %2009 = vmatpush1.msra.mxu0 0.0
      %2010 = vmatprep.subr.mxu0 0.0
      %2011 = vmatpush1.msra.mxu0 0.0
      %2012 = vmatprep.subr.mxu0 0.0
      %2013 = vmatpush1.msra.mxu0 0.0
      %2014 = vmatprep.subr.mxu0 0.0
      %2015 = vmatpush1.msra.mxu0 0.0
      %2016 = vmatprep.subr.mxu0 0.0
      %2017 = vmatpush1.msra.mxu0 0.0
      %2018 = vmatprep.subr.mxu0 0.0
      %2019 = vmatpush1.msra.mxu0 0.0
      %2020 = vmatprep.subr.mxu0 0.0
      %2021 = vmatpush1.msra.mxu0 0.0
      %2022 = vmatprep.subr.mxu0 0.0
      %2023 = vmatpush1.msra.mxu0 0.0
      %2024 = vmatprep.subr.mxu0 0.0
      %2025 = vmatpush1.msra.mxu0 0.0
      %2026 = vmatprep.subr.mxu0 0.0
      %2027 = vmatpush1.msra.mxu0 0.0
      %2028 = vmatprep.subr.mxu0 0.0
      %2029 = vmatpush1.msra.mxu0 0.0
      %2030 = vmatprep.subr.mxu0 0.0
      %2031 = vmatpush1.msra.mxu0 0.0
      %2032 = vmatprep.subr.mxu0 0.0
      %2033 = vmatpush1.msra.mxu0 0.0
      %2034 = vmatprep.subr.mxu0 0.0
      %2035 = vmatpush1.msra.mxu0 0.0
      %2036 = vmatprep.subr.mxu0 0.0
      %2037 = vmatpush1.msra.mxu0 0.0
      %2038 = vmatprep.subr.mxu0 0.0
      %2039 = vmatpush1.msra.mxu0 0.0
      %2040 = vmatprep.subr.mxu0 0.0
      %2041 = vmatpush1.msra.mxu0 0.0
      %2042 = vmatprep.subr.mxu0 0.0
      %2043 = vmatpush1.msra.mxu0 0.0
      %2044 = vmatprep.subr.mxu0 0.0
      %2045 = vmatpush1.msra.mxu0 0.0
      %2046 = vmatprep.subr.mxu0 0.0
      %2047 = vmatpush1.msra.mxu0 0.0
      %2048 = vmatprep.mubr.f32.mxu0 0.0
      %2049 = vmatmul.mubr.f32.gmra.mrb[0].mxu0 %v1905
      %v2050 = vpop.f32.mrb[0].mxu0
      %v2051 = vadd.f32 0.0, %v2050
      %v2052 = vpop.f32.mrb[0].mxu0
      %2053 = vdwg.mxu0
      %v2055 = vsel %vm217, %v1888, 0
      %v2057 = vsel %vm221, %v1889, 0
      %v2059 = vsel %vm221, %v1895, 0
      %v2061 = vsel %vm221, %v1890, 0
      %2063 = vmatprep.subr.mxu0 %v2059
      %2064 = vmatpush1.msra.mxu0 %v2057
      %2065 = vmatprep.subr.mxu0 0.0
      %2066 = vmatpush1.msra.mxu0 0.0
      %2067 = vmatprep.subr.mxu0 0.0
      %2068 = vmatpush1.msra.mxu0 0.0
      %2069 = vmatprep.subr.mxu0 0.0
      %2070 = vmatpush1.msra.mxu0 0.0
      %2071 = vmatprep.subr.mxu0 0.0
      %2072 = vmatpush1.msra.mxu0 0.0
      %2073 = vmatprep.subr.mxu0 0.0
      %2074 = vmatpush1.msra.mxu0 0.0
      %2075 = vmatprep.subr.mxu0 0.0
      %2076 = vmatpush1.msra.mxu0 0.0
      %2077 = vmatprep.subr.mxu0 0.0
      %2078 = vmatpush1.msra.mxu0 0.0
      %2079 = vmatprep.subr.mxu0 0.0
      %2080 = vmatpush1.msra.mxu0 0.0
      %2081 = vmatprep.subr.mxu0 0.0
      %2082 = vmatpush1.msra.mxu0 0.0
      %2083 = vmatprep.subr.mxu0 0.0
      %2084 = vmatpush1.msra.mxu0 0.0
      %2085 = vmatprep.subr.mxu0 0.0
      %2086 = vmatpush1.msra.mxu0 0.0
      %2087 = vmatprep.subr.mxu0 0.0
      %2088 = vmatpush1.msra.mxu0 0.0
      %2089 = vmatprep.subr.mxu0 0.0
      %2090 = vmatpush1.msra.mxu0 0.0
      %2091 = vmatprep.subr.mxu0 0.0
      %2092 = vmatpush1.msra.mxu0 0.0
      %2093 = vmatprep.subr.mxu0 0.0
      %2094 = vmatpush1.msra.mxu0 0.0
      %2095 = vmatprep.subr.mxu0 0.0
      %2096 = vmatpush1.msra.mxu0 0.0
      %2097 = vmatprep.subr.mxu0 0.0
      %2098 = vmatpush1.msra.mxu0 0.0
      %2099 = vmatprep.subr.mxu0 0.0
      %2100 = vmatpush1.msra.mxu0 0.0
      %2101 = vmatprep.subr.mxu0 0.0
      %2102 = vmatpush1.msra.mxu0 0.0
      %2103 = vmatprep.subr.mxu0 0.0
      %2104 = vmatpush1.msra.mxu0 0.0
      %2105 = vmatprep.subr.mxu0 0.0
      %2106 = vmatpush1.msra.mxu0 0.0
      %2107 = vmatprep.subr.mxu0 0.0
      %2108 = vmatpush1.msra.mxu0 0.0
      %2109 = vmatprep.subr.mxu0 0.0
      %2110 = vmatpush1.msra.mxu0 0.0
      %2111 = vmatprep.subr.mxu0 0.0
      %2112 = vmatpush1.msra.mxu0 0.0
      %2113 = vmatprep.subr.mxu0 0.0
      %2114 = vmatpush1.msra.mxu0 0.0
      %2115 = vmatprep.subr.mxu0 0.0
      %2116 = vmatpush1.msra.mxu0 0.0
      %2117 = vmatprep.subr.mxu0 0.0
      %2118 = vmatpush1.msra.mxu0 0.0
      %2119 = vmatprep.subr.mxu0 0.0
      %2120 = vmatpush1.msra.mxu0 0.0
      %2121 = vmatprep.subr.mxu0 0.0
      %2122 = vmatpush1.msra.mxu0 0.0
      %2123 = vmatprep.subr.mxu0 0.0
      %2124 = vmatpush1.msra.mxu0 0.0
      %2125 = vmatprep.subr.mxu0 0.0
      %2126 = vmatpush1.msra.mxu0 0.0
      %2127 = vmatprep.mubr.f32.mxu0 0.0
      %2128 = vmatmul.mubr.f32.gmra.mrb[0].mxu0 %v2055
      %v2129 = vpop.f32.mrb[0].mxu0
      %v2130 = vadd.f32 %v1980, %v2129
      %v2131 = vpop.f32.mrb[0].mxu0
      %v2132 = vadd.f32 %v1982, %v2131
      %2133 = vdwg.mxu0
      %2134 = vmatprep.subr.mxu0 0.0
      %2135 = vmatpush1.msra.mxu0 %v2061
      %2136 = vmatprep.subr.mxu0 0.0
      %2137 = vmatpush1.msra.mxu0 0.0
      %2138 = vmatprep.subr.mxu0 0.0
      %2139 = vmatpush1.msra.mxu0 0.0
      %2140 = vmatprep.subr.mxu0 0.0
      %2141 = vmatpush1.msra.mxu0 0.0
      %2142 = vmatprep.subr.mxu0 0.0
      %2143 = vmatpush1.msra.mxu0 0.0
      %2144 = vmatprep.subr.mxu0 0.0
      %2145 = vmatpush1.msra.mxu0 0.0
      %2146 = vmatprep.subr.mxu0 0.0
      %2147 = vmatpush1.msra.mxu0 0.0
      %2148 = vmatprep.subr.mxu0 0.0
      %2149 = vmatpush1.msra.mxu0 0.0
      %2150 = vmatprep.subr.mxu0 0.0
      %2151 = vmatpush1.msra.mxu0 0.0
      %2152 = vmatprep.subr.mxu0 0.0
      %2153 = vmatpush1.msra.mxu0 0.0
      %2154 = vmatprep.subr.mxu0 0.0
      %2155 = vmatpush1.msra.mxu0 0.0
      %2156 = vmatprep.subr.mxu0 0.0
      %2157 = vmatpush1.msra.mxu0 0.0
      %2158 = vmatprep.subr.mxu0 0.0
      %2159 = vmatpush1.msra.mxu0 0.0
      %2160 = vmatprep.subr.mxu0 0.0
      %2161 = vmatpush1.msra.mxu0 0.0
      %2162 = vmatprep.subr.mxu0 0.0
      %2163 = vmatpush1.msra.mxu0 0.0
      %2164 = vmatprep.subr.mxu0 0.0
      %2165 = vmatpush1.msra.mxu0 0.0
      %2166 = vmatprep.subr.mxu0 0.0
      %2167 = vmatpush1.msra.mxu0 0.0
      %2168 = vmatprep.subr.mxu0 0.0
      %2169 = vmatpush1.msra.mxu0 0.0
      %2170 = vmatprep.subr.mxu0 0.0
      %2171 = vmatpush1.msra.mxu0 0.0
      %2172 = vmatprep.subr.mxu0 0.0
      %2173 = vmatpush1.msra.mxu0 0.0
      %2174 = vmatprep.subr.mxu0 0.0
      %2175 = vmatpush1.msra.mxu0 0.0
      %2176 = vmatprep.subr.mxu0 0.0
      %2177 = vmatpush1.msra.mxu0 0.0
      %2178 = vmatprep.subr.mxu0 0.0
      %2179 = vmatpush1.msra.mxu0 0.0
      %2180 = vmatprep.subr.mxu0 0.0
      %2181 = vmatpush1.msra.mxu0 0.0
      %2182 = vmatprep.subr.mxu0 0.0
      %2183 = vmatpush1.msra.mxu0 0.0
      %2184 = vmatprep.subr.mxu0 0.0
      %2185 = vmatpush1.msra.mxu0 0.0
      %2186 = vmatprep.subr.mxu0 0.0
      %2187 = vmatpush1.msra.mxu0 0.0
      %2188 = vmatprep.subr.mxu0 0.0
      %2189 = vmatpush1.msra.mxu0 0.0
      %2190 = vmatprep.subr.mxu0 0.0
      %2191 = vmatpush1.msra.mxu0 0.0
      %2192 = vmatprep.subr.mxu0 0.0
      %2193 = vmatpush1.msra.mxu0 0.0
      %2194 = vmatprep.subr.mxu0 0.0
      %2195 = vmatpush1.msra.mxu0 0.0
      %2196 = vmatprep.subr.mxu0 0.0
      %2197 = vmatpush1.msra.mxu0 0.0
      %2198 = vmatprep.mubr.f32.mxu0 0.0
      %2199 = vmatmul.mubr.f32.gmra.mrb[0].mxu0 %v2055
      %v2200 = vpop.f32.mrb[0].mxu0
      %v2201 = vadd.f32 %v2051, %v2200
      %v2202 = vpop.f32.mrb[0].mxu0
      %2203 = vdwg.mxu0
      %s2204 = scalar_lea.vmem %s2, 8
      %v2205 = vld [vmem:[%s2204] sm:$0xf]
      %v2206 = vld [vmem:[#allocation2] sm:$0xff]
      %v2207 = vld [vmem:[#allocation2 + $0x8] sm:$0xf]
      %v2210 = vcombine.high %v2206, %v2206
      %2211 = vrot.lane.b32.xlu0 %v2206, 126
      %v2212 = vpop.permute.xlu0 %2211
      %2213 = vrot.lane.b32.xlu0 %v2210, 126
      %v2214 = vpop.permute.xlu0 %2213
      %2215 = vrot.lane.b32.xlu0 %v2207, 126
      %v2216 = vpop.permute.xlu0 %2215
      %v2217 = vsel %vm532, %v2212, %v2214
      %v2218 = vsel %vm532, %v2214, %v2216
      %v2220 = vsel %vm217, %v2205, 0
      %v2222 = vsel %vm221, %v2217, 0
      %v2224 = vsel %vm221, %v2218, 0
      %v2226 = vsel %vm221, %v2216, 0
      %2228 = vmatprep.subr.mxu0 %v2224
      %2229 = vmatpush1.msra.mxu0 %v2222
      %2230 = vmatprep.subr.mxu0 0.0
      %2231 = vmatpush1.msra.mxu0 0.0
      %2232 = vmatprep.subr.mxu0 0.0
      %2233 = vmatpush1.msra.mxu0 0.0
      %2234 = vmatprep.subr.mxu0 0.0
      %2235 = vmatpush1.msra.mxu0 0.0
      %2236 = vmatprep.subr.mxu0 0.0
      %2237 = vmatpush1.msra.mxu0 0.0
      %2238 = vmatprep.subr.mxu0 0.0
      %2239 = vmatpush1.msra.mxu0 0.0
      %2240 = vmatprep.subr.mxu0 0.0
      %2241 = vmatpush1.msra.mxu0 0.0
      %2242 = vmatprep.subr.mxu0 0.0
      %2243 = vmatpush1.msra.mxu0 0.0
      %2244 = vmatprep.subr.mxu0 0.0
      %2245 = vmatpush1.msra.mxu0 0.0
      %2246 = vmatprep.subr.mxu0 0.0
      %2247 = vmatpush1.msra.mxu0 0.0
      %2248 = vmatprep.subr.mxu0 0.0
      %2249 = vmatpush1.msra.mxu0 0.0
      %2250 = vmatprep.subr.mxu0 0.0
      %2251 = vmatpush1.msra.mxu0 0.0
      %2252 = vmatprep.subr.mxu0 0.0
      %2253 = vmatpush1.msra.mxu0 0.0
      %2254 = vmatprep.subr.mxu0 0.0
      %2255 = vmatpush1.msra.mxu0 0.0
      %2256 = vmatprep.subr.mxu0 0.0
      %2257 = vmatpush1.msra.mxu0 0.0
      %2258 = vmatprep.subr.mxu0 0.0
      %2259 = vmatpush1.msra.mxu0 0.0
      %2260 = vmatprep.subr.mxu0 0.0
      %2261 = vmatpush1.msra.mxu0 0.0
      %2262 = vmatprep.subr.mxu0 0.0
      %2263 = vmatpush1.msra.mxu0 0.0
      %2264 = vmatprep.subr.mxu0 0.0
      %2265 = vmatpush1.msra.mxu0 0.0
      %2266 = vmatprep.subr.mxu0 0.0
      %2267 = vmatpush1.msra.mxu0 0.0
      %2268 = vmatprep.subr.mxu0 0.0
      %2269 = vmatpush1.msra.mxu0 0.0
      %2270 = vmatprep.subr.mxu0 0.0
      %2271 = vmatpush1.msra.mxu0 0.0
      %2272 = vmatprep.subr.mxu0 0.0
      %2273 = vmatpush1.msra.mxu0 0.0
      %2274 = vmatprep.subr.mxu0 0.0
      %2275 = vmatpush1.msra.mxu0 0.0
      %2276 = vmatprep.subr.mxu0 0.0
      %2277 = vmatpush1.msra.mxu0 0.0
      %2278 = vmatprep.subr.mxu0 0.0
      %2279 = vmatpush1.msra.mxu0 0.0
      %2280 = vmatprep.subr.mxu0 0.0
      %2281 = vmatpush1.msra.mxu0 0.0
      %2282 = vmatprep.subr.mxu0 0.0
      %2283 = vmatpush1.msra.mxu0 0.0
      %2284 = vmatprep.subr.mxu0 0.0
      %2285 = vmatpush1.msra.mxu0 0.0
      %2286 = vmatprep.subr.mxu0 0.0
      %2287 = vmatpush1.msra.mxu0 0.0
      %2288 = vmatprep.subr.mxu0 0.0
      %2289 = vmatpush1.msra.mxu0 0.0
      %2290 = vmatprep.subr.mxu0 0.0
      %2291 = vmatpush1.msra.mxu0 0.0
      %2292 = vmatprep.mubr.f32.mxu0 0.0
      %2293 = vmatmul.mubr.f32.gmra.mrb[0].mxu0 %v2220
      %v2294 = vpop.f32.mrb[0].mxu0
      %v2295 = vadd.f32 0.0, %v2294
      %v2296 = vpop.f32.mrb[0].mxu0
      %v2297 = vadd.f32 0.0, %v2296
      %2298 = vdwg.mxu0
      %2299 = vmatprep.subr.mxu0 0.0
      %2300 = vmatpush1.msra.mxu0 %v2226
      %2301 = vmatprep.subr.mxu0 0.0
      %2302 = vmatpush1.msra.mxu0 0.0
      %2303 = vmatprep.subr.mxu0 0.0
      %2304 = vmatpush1.msra.mxu0 0.0
      %2305 = vmatprep.subr.mxu0 0.0
      %2306 = vmatpush1.msra.mxu0 0.0
      %2307 = vmatprep.subr.mxu0 0.0
      %2308 = vmatpush1.msra.mxu0 0.0
      %2309 = vmatprep.subr.mxu0 0.0
      %2310 = vmatpush1.msra.mxu0 0.0
      %2311 = vmatprep.subr.mxu0 0.0
      %2312 = vmatpush1.msra.mxu0 0.0
      %2313 = vmatprep.subr.mxu0 0.0
      %2314 = vmatpush1.msra.mxu0 0.0
      %2315 = vmatprep.subr.mxu0 0.0
      %2316 = vmatpush1.msra.mxu0 0.0
      %2317 = vmatprep.subr.mxu0 0.0
      %2318 = vmatpush1.msra.mxu0 0.0
      %2319 = vmatprep.subr.mxu0 0.0
      %2320 = vmatpush1.msra.mxu0 0.0
      %2321 = vmatprep.subr.mxu0 0.0
      %2322 = vmatpush1.msra.mxu0 0.0
      %2323 = vmatprep.subr.mxu0 0.0
      %2324 = vmatpush1.msra.mxu0 0.0
      %2325 = vmatprep.subr.mxu0 0.0
      %2326 = vmatpush1.msra.mxu0 0.0
      %2327 = vmatprep.subr.mxu0 0.0
      %2328 = vmatpush1.msra.mxu0 0.0
      %2329 = vmatprep.subr.mxu0 0.0
      %2330 = vmatpush1.msra.mxu0 0.0
      %2331 = vmatprep.subr.mxu0 0.0
      %2332 = vmatpush1.msra.mxu0 0.0
      %2333 = vmatprep.subr.mxu0 0.0
      %2334 = vmatpush1.msra.mxu0 0.0
      %2335 = vmatprep.subr.mxu0 0.0
      %2336 = vmatpush1.msra.mxu0 0.0
      %2337 = vmatprep.subr.mxu0 0.0
      %2338 = vmatpush1.msra.mxu0 0.0
      %2339 = vmatprep.subr.mxu0 0.0
      %2340 = vmatpush1.msra.mxu0 0.0
      %2341 = vmatprep.subr.mxu0 0.0
      %2342 = vmatpush1.msra.mxu0 0.0
      %2343 = vmatprep.subr.mxu0 0.0
      %2344 = vmatpush1.msra.mxu0 0.0
      %2345 = vmatprep.subr.mxu0 0.0
      %2346 = vmatpush1.msra.mxu0 0.0
      %2347 = vmatprep.subr.mxu0 0.0
      %2348 = vmatpush1.msra.mxu0 0.0
      %2349 = vmatprep.subr.mxu0 0.0
      %2350 = vmatpush1.msra.mxu0 0.0
      %2351 = vmatprep.subr.mxu0 0.0
      %2352 = vmatpush1.msra.mxu0 0.0
      %2353 = vmatprep.subr.mxu0 0.0
      %2354 = vmatpush1.msra.mxu0 0.0
      %2355 = vmatprep.subr.mxu0 0.0
      %2356 = vmatpush1.msra.mxu0 0.0
      %2357 = vmatprep.subr.mxu0 0.0
      %2358 = vmatpush1.msra.mxu0 0.0
      %2359 = vmatprep.subr.mxu0 0.0
      %2360 = vmatpush1.msra.mxu0 0.0
      %2361 = vmatprep.subr.mxu0 0.0
      %2362 = vmatpush1.msra.mxu0 0.0
      %2363 = vmatprep.mubr.f32.mxu0 0.0
      %2364 = vmatmul.mubr.f32.gmra.mrb[0].mxu0 %v2220
      %v2365 = vpop.f32.mrb[0].mxu0
      %v2366 = vadd.f32 0.0, %v2365
      %v2367 = vpop.f32.mrb[0].mxu0
      %2368 = vdwg.mxu0
      %v2369 = vadd.f32 %v2130, %v2295
      %v2370 = vadd.f32 %v2132, %v2297
      %v2371 = vadd.f32 %v2201, %v2366
      %s2372 = scalar_lea.vmem %s2, 12
      %v2373 = vld [vmem:[%s2372] sm:$0xf]
      %v2374 = vld [vmem:[#allocation2] sm:$0xff]
      %v2375 = vld [vmem:[#allocation2 + $0x8] sm:$0xf]
      %v2378 = vcombine.high %v2374, %v2374
      %2379 = vrot.lane.b32.xlu0 %v2374, 110
      %v2380 = vpop.permute.xlu0 %2379
      %2381 = vrot.lane.b32.xlu0 %v2378, 110
      %v2382 = vpop.permute.xlu0 %2381
      %2383 = vrot.lane.b32.xlu0 %v2375, 110
      %v2384 = vpop.permute.xlu0 %2383
      %v2385 = vsel %vm701, %v2380, %v2382
      %v2386 = vsel %vm701, %v2382, %v2384
      %v2388 = vsel %vm217, %v2373, 0
      %v2390 = vsel %vm221, %v2385, 0
      %v2392 = vsel %vm221, %v2386, 0
      %v2394 = vsel %vm221, %v2384, 0
      %2396 = vmatprep.subr.mxu0 %v2392
      %2397 = vmatpush1.msra.mxu0 %v2390
      %2398 = vmatprep.subr.mxu0 0.0
      %2399 = vmatpush1.msra.mxu0 0.0
      %2400 = vmatprep.subr.mxu0 0.0
      %2401 = vmatpush1.msra.mxu0 0.0
      %2402 = vmatprep.subr.mxu0 0.0
      %2403 = vmatpush1.msra.mxu0 0.0
      %2404 = vmatprep.subr.mxu0 0.0
      %2405 = vmatpush1.msra.mxu0 0.0
      %2406 = vmatprep.subr.mxu0 0.0
      %2407 = vmatpush1.msra.mxu0 0.0
      %2408 = vmatprep.subr.mxu0 0.0
      %2409 = vmatpush1.msra.mxu0 0.0
      %2410 = vmatprep.subr.mxu0 0.0
      %2411 = vmatpush1.msra.mxu0 0.0
      %2412 = vmatprep.subr.mxu0 0.0
      %2413 = vmatpush1.msra.mxu0 0.0
      %2414 = vmatprep.subr.mxu0 0.0
      %2415 = vmatpush1.msra.mxu0 0.0
      %2416 = vmatprep.subr.mxu0 0.0
      %2417 = vmatpush1.msra.mxu0 0.0
      %2418 = vmatprep.subr.mxu0 0.0
      %2419 = vmatpush1.msra.mxu0 0.0
      %2420 = vmatprep.subr.mxu0 0.0
      %2421 = vmatpush1.msra.mxu0 0.0
      %2422 = vmatprep.subr.mxu0 0.0
      %2423 = vmatpush1.msra.mxu0 0.0
      %2424 = vmatprep.subr.mxu0 0.0
      %2425 = vmatpush1.msra.mxu0 0.0
      %2426 = vmatprep.subr.mxu0 0.0
      %2427 = vmatpush1.msra.mxu0 0.0
      %2428 = vmatprep.subr.mxu0 0.0
      %2429 = vmatpush1.msra.mxu0 0.0
      %2430 = vmatprep.subr.mxu0 0.0
      %2431 = vmatpush1.msra.mxu0 0.0
      %2432 = vmatprep.subr.mxu0 0.0
      %2433 = vmatpush1.msra.mxu0 0.0
      %2434 = vmatprep.subr.mxu0 0.0
      %2435 = vmatpush1.msra.mxu0 0.0
      %2436 = vmatprep.subr.mxu0 0.0
      %2437 = vmatpush1.msra.mxu0 0.0
      %2438 = vmatprep.subr.mxu0 0.0
      %2439 = vmatpush1.msra.mxu0 0.0
      %2440 = vmatprep.subr.mxu0 0.0
      %2441 = vmatpush1.msra.mxu0 0.0
      %2442 = vmatprep.subr.mxu0 0.0
      %2443 = vmatpush1.msra.mxu0 0.0
      %2444 = vmatprep.subr.mxu0 0.0
      %2445 = vmatpush1.msra.mxu0 0.0
      %2446 = vmatprep.subr.mxu0 0.0
      %2447 = vmatpush1.msra.mxu0 0.0
      %2448 = vmatprep.subr.mxu0 0.0
      %2449 = vmatpush1.msra.mxu0 0.0
      %2450 = vmatprep.subr.mxu0 0.0
      %2451 = vmatpush1.msra.mxu0 0.0
      %2452 = vmatprep.subr.mxu0 0.0
      %2453 = vmatpush1.msra.mxu0 0.0
      %2454 = vmatprep.subr.mxu0 0.0
      %2455 = vmatpush1.msra.mxu0 0.0
      %2456 = vmatprep.subr.mxu0 0.0
      %2457 = vmatpush1.msra.mxu0 0.0
      %2458 = vmatprep.subr.mxu0 0.0
      %2459 = vmatpush1.msra.mxu0 0.0
      %2460 = vmatprep.mubr.f32.mxu0 0.0
      %2461 = vmatmul.mubr.f32.gmra.mrb[0].mxu0 %v2388
      %v2462 = vpop.f32.mrb[0].mxu0
      %v2463 = vadd.f32 0.0, %v2462
      %v2464 = vpop.f32.mrb[0].mxu0
      %v2465 = vadd.f32 0.0, %v2464
      %2466 = vdwg.mxu0
      %2467 = vmatprep.subr.mxu0 0.0
      %2468 = vmatpush1.msra.mxu0 %v2394
      %2469 = vmatprep.subr.mxu0 0.0
      %2470 = vmatpush1.msra.mxu0 0.0
      %2471 = vmatprep.subr.mxu0 0.0
      %2472 = vmatpush1.msra.mxu0 0.0
      %2473 = vmatprep.subr.mxu0 0.0
      %2474 = vmatpush1.msra.mxu0 0.0
      %2475 = vmatprep.subr.mxu0 0.0
      %2476 = vmatpush1.msra.mxu0 0.0
      %2477 = vmatprep.subr.mxu0 0.0
      %2478 = vmatpush1.msra.mxu0 0.0
      %2479 = vmatprep.subr.mxu0 0.0
      %2480 = vmatpush1.msra.mxu0 0.0
      %2481 = vmatprep.subr.mxu0 0.0
      %2482 = vmatpush1.msra.mxu0 0.0
      %2483 = vmatprep.subr.mxu0 0.0
      %2484 = vmatpush1.msra.mxu0 0.0
      %2485 = vmatprep.subr.mxu0 0.0
      %2486 = vmatpush1.msra.mxu0 0.0
      %2487 = vmatprep.subr.mxu0 0.0
      %2488 = vmatpush1.msra.mxu0 0.0
      %2489 = vmatprep.subr.mxu0 0.0
      %2490 = vmatpush1.msra.mxu0 0.0
      %2491 = vmatprep.subr.mxu0 0.0
      %2492 = vmatpush1.msra.mxu0 0.0
      %2493 = vmatprep.subr.mxu0 0.0
      %2494 = vmatpush1.msra.mxu0 0.0
      %2495 = vmatprep.subr.mxu0 0.0
      %2496 = vmatpush1.msra.mxu0 0.0
      %2497 = vmatprep.subr.mxu0 0.0
      %2498 = vmatpush1.msra.mxu0 0.0
      %2499 = vmatprep.subr.mxu0 0.0
      %2500 = vmatpush1.msra.mxu0 0.0
      %2501 = vmatprep.subr.mxu0 0.0
      %2502 = vmatpush1.msra.mxu0 0.0
      %2503 = vmatprep.subr.mxu0 0.0
      %2504 = vmatpush1.msra.mxu0 0.0
      %2505 = vmatprep.subr.mxu0 0.0
      %2506 = vmatpush1.msra.mxu0 0.0
      %2507 = vmatprep.subr.mxu0 0.0
      %2508 = vmatpush1.msra.mxu0 0.0
      %2509 = vmatprep.subr.mxu0 0.0
      %2510 = vmatpush1.msra.mxu0 0.0
      %2511 = vmatprep.subr.mxu0 0.0
      %2512 = vmatpush1.msra.mxu0 0.0
      %2513 = vmatprep.subr.mxu0 0.0
      %2514 = vmatpush1.msra.mxu0 0.0
      %2515 = vmatprep.subr.mxu0 0.0
      %2516 = vmatpush1.msra.mxu0 0.0
      %2517 = vmatprep.subr.mxu0 0.0
      %2518 = vmatpush1.msra.mxu0 0.0
      %2519 = vmatprep.subr.mxu0 0.0
      %2520 = vmatpush1.msra.mxu0 0.0
      %2521 = vmatprep.subr.mxu0 0.0
      %2522 = vmatpush1.msra.mxu0 0.0
      %2523 = vmatprep.subr.mxu0 0.0
      %2524 = vmatpush1.msra.mxu0 0.0
      %2525 = vmatprep.subr.mxu0 0.0
      %2526 = vmatpush1.msra.mxu0 0.0
      %2527 = vmatprep.subr.mxu0 0.0
      %2528 = vmatpush1.msra.mxu0 0.0
      %2529 = vmatprep.subr.mxu0 0.0
      %2530 = vmatpush1.msra.mxu0 0.0
      %2531 = vmatprep.mubr.f32.mxu0 0.0
      %2532 = vmatmul.mubr.f32.gmra.mrb[0].mxu0 %v2388
      %v2533 = vpop.f32.mrb[0].mxu0
      %v2534 = vadd.f32 0.0, %v2533
      %v2535 = vpop.f32.mrb[0].mxu0
      %2536 = vdwg.mxu0
      %v2537 = vadd.f32 %v2369, %v2463
      %v2538 = vadd.f32 %v2370, %v2465
      %v2539 = vadd.f32 %v2371, %v2534
      %s2540 = scalar_lea.vmem %s2, 16
      %v2541 = vld [vmem:[%s2540] sm:$0xf]
      %v2542 = vld [vmem:[#allocation2] sm:$0xff]
      %v2543 = vld [vmem:[#allocation2 + $0x8] sm:$0xf]
      %v2546 = vcombine.high %v2542, %v2542
      %2547 = vrot.lane.b32.xlu0 %v2542, 109
      %v2548 = vpop.permute.xlu0 %2547
      %2549 = vrot.lane.b32.xlu0 %v2546, 109
      %v2550 = vpop.permute.xlu0 %2549
      %2551 = vrot.lane.b32.xlu0 %v2543, 109
      %v2552 = vpop.permute.xlu0 %2551
      %v2553 = vsel %vm870, %v2548, %v2550
      %v2554 = vsel %vm870, %v2550, %v2552
      %v2556 = vsel %vm217, %v2541, 0
      %v2558 = vsel %vm221, %v2553, 0
      %v2560 = vsel %vm221, %v2554, 0
      %v2562 = vsel %vm221, %v2552, 0
      %2564 = vmatprep.subr.mxu0 %v2560
      %2565 = vmatpush1.msra.mxu0 %v2558
      %2566 = vmatprep.subr.mxu0 0.0
      %2567 = vmatpush1.msra.mxu0 0.0
      %2568 = vmatprep.subr.mxu0 0.0
      %2569 = vmatpush1.msra.mxu0 0.0
      %2570 = vmatprep.subr.mxu0 0.0
      %2571 = vmatpush1.msra.mxu0 0.0
      %2572 = vmatprep.subr.mxu0 0.0
      %2573 = vmatpush1.msra.mxu0 0.0
      %2574 = vmatprep.subr.mxu0 0.0
      %2575 = vmatpush1.msra.mxu0 0.0
      %2576 = vmatprep.subr.mxu0 0.0
      %2577 = vmatpush1.msra.mxu0 0.0
      %2578 = vmatprep.subr.mxu0 0.0
      %2579 = vmatpush1.msra.mxu0 0.0
      %2580 = vmatprep.subr.mxu0 0.0
      %2581 = vmatpush1.msra.mxu0 0.0
      %2582 = vmatprep.subr.mxu0 0.0
      %2583 = vmatpush1.msra.mxu0 0.0
      %2584 = vmatprep.subr.mxu0 0.0
      %2585 = vmatpush1.msra.mxu0 0.0
      %2586 = vmatprep.subr.mxu0 0.0
      %2587 = vmatpush1.msra.mxu0 0.0
      %2588 = vmatprep.subr.mxu0 0.0
      %2589 = vmatpush1.msra.mxu0 0.0
      %2590 = vmatprep.subr.mxu0 0.0
      %2591 = vmatpush1.msra.mxu0 0.0
      %2592 = vmatprep.subr.mxu0 0.0
      %2593 = vmatpush1.msra.mxu0 0.0
      %2594 = vmatprep.subr.mxu0 0.0
      %2595 = vmatpush1.msra.mxu0 0.0
      %2596 = vmatprep.subr.mxu0 0.0
      %2597 = vmatpush1.msra.mxu0 0.0
      %2598 = vmatprep.subr.mxu0 0.0
      %2599 = vmatpush1.msra.mxu0 0.0
      %2600 = vmatprep.subr.mxu0 0.0
      %2601 = vmatpush1.msra.mxu0 0.0
      %2602 = vmatprep.subr.mxu0 0.0
      %2603 = vmatpush1.msra.mxu0 0.0
      %2604 = vmatprep.subr.mxu0 0.0
      %2605 = vmatpush1.msra.mxu0 0.0
      %2606 = vmatprep.subr.mxu0 0.0
      %2607 = vmatpush1.msra.mxu0 0.0
      %2608 = vmatprep.subr.mxu0 0.0
      %2609 = vmatpush1.msra.mxu0 0.0
      %2610 = vmatprep.subr.mxu0 0.0
      %2611 = vmatpush1.msra.mxu0 0.0
      %2612 = vmatprep.subr.mxu0 0.0
      %2613 = vmatpush1.msra.mxu0 0.0
      %2614 = vmatprep.subr.mxu0 0.0
      %2615 = vmatpush1.msra.mxu0 0.0
      %2616 = vmatprep.subr.mxu0 0.0
      %2617 = vmatpush1.msra.mxu0 0.0
      %2618 = vmatprep.subr.mxu0 0.0
      %2619 = vmatpush1.msra.mxu0 0.0
      %2620 = vmatprep.subr.mxu0 0.0
      %2621 = vmatpush1.msra.mxu0 0.0
      %2622 = vmatprep.subr.mxu0 0.0
      %2623 = vmatpush1.msra.mxu0 0.0
      %2624 = vmatprep.subr.mxu0 0.0
      %2625 = vmatpush1.msra.mxu0 0.0
      %2626 = vmatprep.subr.mxu0 0.0
      %2627 = vmatpush1.msra.mxu0 0.0
      %2628 = vmatprep.mubr.f32.mxu0 0.0
      %2629 = vmatmul.mubr.f32.gmra.mrb[0].mxu0 %v2556
      %v2630 = vpop.f32.mrb[0].mxu0
      %v2631 = vadd.f32 0.0, %v2630
      %v2632 = vpop.f32.mrb[0].mxu0
      %v2633 = vadd.f32 0.0, %v2632
      %2634 = vdwg.mxu0
      %2635 = vmatprep.subr.mxu0 0.0
      %2636 = vmatpush1.msra.mxu0 %v2562
      %2637 = vmatprep.subr.mxu0 0.0
      %2638 = vmatpush1.msra.mxu0 0.0
      %2639 = vmatprep.subr.mxu0 0.0
      %2640 = vmatpush1.msra.mxu0 0.0
      %2641 = vmatprep.subr.mxu0 0.0
      %2642 = vmatpush1.msra.mxu0 0.0
      %2643 = vmatprep.subr.mxu0 0.0
      %2644 = vmatpush1.msra.mxu0 0.0
      %2645 = vmatprep.subr.mxu0 0.0
      %2646 = vmatpush1.msra.mxu0 0.0
      %2647 = vmatprep.subr.mxu0 0.0
      %2648 = vmatpush1.msra.mxu0 0.0
      %2649 = vmatprep.subr.mxu0 0.0
      %2650 = vmatpush1.msra.mxu0 0.0
      %2651 = vmatprep.subr.mxu0 0.0
      %2652 = vmatpush1.msra.mxu0 0.0
      %2653 = vmatprep.subr.mxu0 0.0
      %2654 = vmatpush1.msra.mxu0 0.0
      %2655 = vmatprep.subr.mxu0 0.0
      %2656 = vmatpush1.msra.mxu0 0.0
      %2657 = vmatprep.subr.mxu0 0.0
      %2658 = vmatpush1.msra.mxu0 0.0
      %2659 = vmatprep.subr.mxu0 0.0
      %2660 = vmatpush1.msra.mxu0 0.0
      %2661 = vmatprep.subr.mxu0 0.0
      %2662 = vmatpush1.msra.mxu0 0.0
      %2663 = vmatprep.subr.mxu0 0.0
      %2664 = vmatpush1.msra.mxu0 0.0
      %2665 = vmatprep.subr.mxu0 0.0
      %2666 = vmatpush1.msra.mxu0 0.0
      %2667 = vmatprep.subr.mxu0 0.0
      %2668 = vmatpush1.msra.mxu0 0.0
      %2669 = vmatprep.subr.mxu0 0.0
      %2670 = vmatpush1.msra.mxu0 0.0
      %2671 = vmatprep.subr.mxu0 0.0
      %2672 = vmatpush1.msra.mxu0 0.0
      %2673 = vmatprep.subr.mxu0 0.0
      %2674 = vmatpush1.msra.mxu0 0.0
      %2675 = vmatprep.subr.mxu0 0.0
      %2676 = vmatpush1.msra.mxu0 0.0
      %2677 = vmatprep.subr.mxu0 0.0
      %2678 = vmatpush1.msra.mxu0 0.0
      %2679 = vmatprep.subr.mxu0 0.0
      %2680 = vmatpush1.msra.mxu0 0.0
      %2681 = vmatprep.subr.mxu0 0.0
      %2682 = vmatpush1.msra.mxu0 0.0
      %2683 = vmatprep.subr.mxu0 0.0
      %2684 = vmatpush1.msra.mxu0 0.0
      %2685 = vmatprep.subr.mxu0 0.0
      %2686 = vmatpush1.msra.mxu0 0.0
      %2687 = vmatprep.subr.mxu0 0.0
      %2688 = vmatpush1.msra.mxu0 0.0
      %2689 = vmatprep.subr.mxu0 0.0
      %2690 = vmatpush1.msra.mxu0 0.0
      %2691 = vmatprep.subr.mxu0 0.0
      %2692 = vmatpush1.msra.mxu0 0.0
      %2693 = vmatprep.subr.mxu0 0.0
      %2694 = vmatpush1.msra.mxu0 0.0
      %2695 = vmatprep.subr.mxu0 0.0
      %2696 = vmatpush1.msra.mxu0 0.0
      %2697 = vmatprep.subr.mxu0 0.0
      %2698 = vmatpush1.msra.mxu0 0.0
      %2699 = vmatprep.mubr.f32.mxu0 0.0
      %2700 = vmatmul.mubr.f32.gmra.mrb[0].mxu0 %v2556
      %v2701 = vpop.f32.mrb[0].mxu0
      %v2702 = vadd.f32 0.0, %v2701
      %v2703 = vpop.f32.mrb[0].mxu0
      %2704 = vdwg.mxu0
      %v2705 = vadd.f32 %v2537, %v2631
      %v2706 = vadd.f32 %v2538, %v2633
      %v2707 = vadd.f32 %v2539, %v2702
      %s2708 = scalar_lea.vmem %s2, 20
      %v2709 = vld [vmem:[%s2708] sm:$0xf]
      %v2710 = vld [vmem:[#allocation2] sm:$0xff]
      %v2711 = vld [vmem:[#allocation2 + $0x8] sm:$0xf]
      %v2714 = vcombine.high %v2710, %v2710
      %2715 = vrot.lane.b32.xlu0 %v2710, 108
      %v2716 = vpop.permute.xlu0 %2715
      %2717 = vrot.lane.b32.xlu0 %v2714, 108
      %v2718 = vpop.permute.xlu0 %2717
      %2719 = vrot.lane.b32.xlu0 %v2711, 108
      %v2720 = vpop.permute.xlu0 %2719
      %v2721 = vsel %vm1039, %v2716, %v2718
      %v2722 = vsel %vm1039, %v2718, %v2720
      %v2724 = vsel %vm217, %v2709, 0
      %v2726 = vsel %vm221, %v2721, 0
      %v2728 = vsel %vm221, %v2722, 0
      %v2730 = vsel %vm221, %v2720, 0
      %2732 = vmatprep.subr.mxu0 %v2728
      %2733 = vmatpush1.msra.mxu0 %v2726
      %2734 = vmatprep.subr.mxu0 0.0
      %2735 = vmatpush1.msra.mxu0 0.0
      %2736 = vmatprep.subr.mxu0 0.0
      %2737 = vmatpush1.msra.mxu0 0.0
      %2738 = vmatprep.subr.mxu0 0.0
      %2739 = vmatpush1.msra.mxu0 0.0
      %2740 = vmatprep.subr.mxu0 0.0
      %2741 = vmatpush1.msra.mxu0 0.0
      %2742 = vmatprep.subr.mxu0 0.0
      %2743 = vmatpush1.msra.mxu0 0.0
      %2744 = vmatprep.subr.mxu0 0.0
      %2745 = vmatpush1.msra.mxu0 0.0
      %2746 = vmatprep.subr.mxu0 0.0
      %2747 = vmatpush1.msra.mxu0 0.0
      %2748 = vmatprep.subr.mxu0 0.0
      %2749 = vmatpush1.msra.mxu0 0.0
      %2750 = vmatprep.subr.mxu0 0.0
      %2751 = vmatpush1.msra.mxu0 0.0
      %2752 = vmatprep.subr.mxu0 0.0
      %2753 = vmatpush1.msra.mxu0 0.0
      %2754 = vmatprep.subr.mxu0 0.0
      %2755 = vmatpush1.msra.mxu0 0.0
      %2756 = vmatprep.subr.mxu0 0.0
      %2757 = vmatpush1.msra.mxu0 0.0
      %2758 = vmatprep.subr.mxu0 0.0
      %2759 = vmatpush1.msra.mxu0 0.0
      %2760 = vmatprep.subr.mxu0 0.0
      %2761 = vmatpush1.msra.mxu0 0.0
      %2762 = vmatprep.subr.mxu0 0.0
      %2763 = vmatpush1.msra.mxu0 0.0
      %2764 = vmatprep.subr.mxu0 0.0
      %2765 = vmatpush1.msra.mxu0 0.0
      %2766 = vmatprep.subr.mxu0 0.0
      %2767 = vmatpush1.msra.mxu0 0.0
      %2768 = vmatprep.subr.mxu0 0.0
      %2769 = vmatpush1.msra.mxu0 0.0
      %2770 = vmatprep.subr.mxu0 0.0
      %2771 = vmatpush1.msra.mxu0 0.0
      %2772 = vmatprep.subr.mxu0 0.0
      %2773 = vmatpush1.msra.mxu0 0.0
      %2774 = vmatprep.subr.mxu0 0.0
      %2775 = vmatpush1.msra.mxu0 0.0
      %2776 = vmatprep.subr.mxu0 0.0
      %2777 = vmatpush1.msra.mxu0 0.0
      %2778 = vmatprep.subr.mxu0 0.0
      %2779 = vmatpush1.msra.mxu0 0.0
      %2780 = vmatprep.subr.mxu0 0.0
      %2781 = vmatpush1.msra.mxu0 0.0
      %2782 = vmatprep.subr.mxu0 0.0
      %2783 = vmatpush1.msra.mxu0 0.0
      %2784 = vmatprep.subr.mxu0 0.0
      %2785 = vmatpush1.msra.mxu0 0.0
      %2786 = vmatprep.subr.mxu0 0.0
      %2787 = vmatpush1.msra.mxu0 0.0
      %2788 = vmatprep.subr.mxu0 0.0
      %2789 = vmatpush1.msra.mxu0 0.0
      %2790 = vmatprep.subr.mxu0 0.0
      %2791 = vmatpush1.msra.mxu0 0.0
      %2792 = vmatprep.subr.mxu0 0.0
      %2793 = vmatpush1.msra.mxu0 0.0
      %2794 = vmatprep.subr.mxu0 0.0
      %2795 = vmatpush1.msra.mxu0 0.0
      %2796 = vmatprep.mubr.f32.mxu0 0.0
      %2797 = vmatmul.mubr.f32.gmra.mrb[0].mxu0 %v2724
      %v2798 = vpop.f32.mrb[0].mxu0
      %v2799 = vadd.f32 0.0, %v2798
      %v2800 = vpop.f32.mrb[0].mxu0
      %v2801 = vadd.f32 0.0, %v2800
      %2802 = vdwg.mxu0
      %2803 = vmatprep.subr.mxu0 0.0
      %2804 = vmatpush1.msra.mxu0 %v2730
      %2805 = vmatprep.subr.mxu0 0.0
      %2806 = vmatpush1.msra.mxu0 0.0
      %2807 = vmatprep.subr.mxu0 0.0
      %2808 = vmatpush1.msra.mxu0 0.0
      %2809 = vmatprep.subr.mxu0 0.0
      %2810 = vmatpush1.msra.mxu0 0.0
      %2811 = vmatprep.subr.mxu0 0.0
      %2812 = vmatpush1.msra.mxu0 0.0
      %2813 = vmatprep.subr.mxu0 0.0
      %2814 = vmatpush1.msra.mxu0 0.0
      %2815 = vmatprep.subr.mxu0 0.0
      %2816 = vmatpush1.msra.mxu0 0.0
      %2817 = vmatprep.subr.mxu0 0.0
      %2818 = vmatpush1.msra.mxu0 0.0
      %2819 = vmatprep.subr.mxu0 0.0
      %2820 = vmatpush1.msra.mxu0 0.0
      %2821 = vmatprep.subr.mxu0 0.0
      %2822 = vmatpush1.msra.mxu0 0.0
      %2823 = vmatprep.subr.mxu0 0.0
      %2824 = vmatpush1.msra.mxu0 0.0
      %2825 = vmatprep.subr.mxu0 0.0
      %2826 = vmatpush1.msra.mxu0 0.0
      %2827 = vmatprep.subr.mxu0 0.0
      %2828 = vmatpush1.msra.mxu0 0.0
      %2829 = vmatprep.subr.mxu0 0.0
      %2830 = vmatpush1.msra.mxu0 0.0
      %2831 = vmatprep.subr.mxu0 0.0
      %2832 = vmatpush1.msra.mxu0 0.0
      %2833 = vmatprep.subr.mxu0 0.0
      %2834 = vmatpush1.msra.mxu0 0.0
      %2835 = vmatprep.subr.mxu0 0.0
      %2836 = vmatpush1.msra.mxu0 0.0
      %2837 = vmatprep.subr.mxu0 0.0
      %2838 = vmatpush1.msra.mxu0 0.0
      %2839 = vmatprep.subr.mxu0 0.0
      %2840 = vmatpush1.msra.mxu0 0.0
      %2841 = vmatprep.subr.mxu0 0.0
      %2842 = vmatpush1.msra.mxu0 0.0
      %2843 = vmatprep.subr.mxu0 0.0
      %2844 = vmatpush1.msra.mxu0 0.0
      %2845 = vmatprep.subr.mxu0 0.0
      %2846 = vmatpush1.msra.mxu0 0.0
      %2847 = vmatprep.subr.mxu0 0.0
      %2848 = vmatpush1.msra.mxu0 0.0
      %2849 = vmatprep.subr.mxu0 0.0
      %2850 = vmatpush1.msra.mxu0 0.0
      %2851 = vmatprep.subr.mxu0 0.0
      %2852 = vmatpush1.msra.mxu0 0.0
      %2853 = vmatprep.subr.mxu0 0.0
      %2854 = vmatpush1.msra.mxu0 0.0
      %2855 = vmatprep.subr.mxu0 0.0
      %2856 = vmatpush1.msra.mxu0 0.0
      %2857 = vmatprep.subr.mxu0 0.0
      %2858 = vmatpush1.msra.mxu0 0.0
      %2859 = vmatprep.subr.mxu0 0.0
      %2860 = vmatpush1.msra.mxu0 0.0
      %2861 = vmatprep.subr.mxu0 0.0
      %2862 = vmatpush1.msra.mxu0 0.0
      %2863 = vmatprep.subr.mxu0 0.0
      %2864 = vmatpush1.msra.mxu0 0.0
      %2865 = vmatprep.subr.mxu0 0.0
      %2866 = vmatpush1.msra.mxu0 0.0
      %2867 = vmatprep.mubr.f32.mxu0 0.0
      %2868 = vmatmul.mubr.f32.gmra.mrb[0].mxu0 %v2724
      %v2869 = vpop.f32.mrb[0].mxu0
      %v2870 = vadd.f32 0.0, %v2869
      %v2871 = vpop.f32.mrb[0].mxu0
      %2872 = vdwg.mxu0
      %v2873 = vadd.f32 %v2705, %v2799
      %v2874 = vadd.f32 %v2706, %v2801
      %v2875 = vadd.f32 %v2707, %v2870
      %s2876 = scalar_lea.vmem %s2, 24
      %v2877 = vld [vmem:[%s2876] sm:$0xf]
      %v2878 = vld [vmem:[#allocation2] sm:$0xff]
      %v2879 = vld [vmem:[#allocation2 + $0x8] sm:$0xf]
      %v2882 = vcombine.high %v2878, %v2878
      %2883 = vrot.lane.b32.xlu0 %v2878, 92
      %v2884 = vpop.permute.xlu0 %2883
      %2885 = vrot.lane.b32.xlu0 %v2882, 92
      %v2886 = vpop.permute.xlu0 %2885
      %2887 = vrot.lane.b32.xlu0 %v2879, 92
      %v2888 = vpop.permute.xlu0 %2887
      %v2889 = vsel %vm1208, %v2884, %v2886
      %v2890 = vsel %vm1208, %v2886, %v2888
      %v2892 = vsel %vm217, %v2877, 0
      %v2894 = vsel %vm221, %v2889, 0
      %v2896 = vsel %vm221, %v2890, 0
      %v2898 = vsel %vm221, %v2888, 0
      %2900 = vmatprep.subr.mxu0 %v2896
      %2901 = vmatpush1.msra.mxu0 %v2894
      %2902 = vmatprep.subr.mxu0 0.0
      %2903 = vmatpush1.msra.mxu0 0.0
      %2904 = vmatprep.subr.mxu0 0.0
      %2905 = vmatpush1.msra.mxu0 0.0
      %2906 = vmatprep.subr.mxu0 0.0
      %2907 = vmatpush1.msra.mxu0 0.0
      %2908 = vmatprep.subr.mxu0 0.0
      %2909 = vmatpush1.msra.mxu0 0.0
      %2910 = vmatprep.subr.mxu0 0.0
      %2911 = vmatpush1.msra.mxu0 0.0
      %2912 = vmatprep.subr.mxu0 0.0
      %2913 = vmatpush1.msra.mxu0 0.0
      %2914 = vmatprep.subr.mxu0 0.0
      %2915 = vmatpush1.msra.mxu0 0.0
      %2916 = vmatprep.subr.mxu0 0.0
      %2917 = vmatpush1.msra.mxu0 0.0
      %2918 = vmatprep.subr.mxu0 0.0
      %2919 = vmatpush1.msra.mxu0 0.0
      %2920 = vmatprep.subr.mxu0 0.0
      %2921 = vmatpush1.msra.mxu0 0.0
      %2922 = vmatprep.subr.mxu0 0.0
      %2923 = vmatpush1.msra.mxu0 0.0
      %2924 = vmatprep.subr.mxu0 0.0
      %2925 = vmatpush1.msra.mxu0 0.0
      %2926 = vmatprep.subr.mxu0 0.0
      %2927 = vmatpush1.msra.mxu0 0.0
      %2928 = vmatprep.subr.mxu0 0.0
      %2929 = vmatpush1.msra.mxu0 0.0
      %2930 = vmatprep.subr.mxu0 0.0
      %2931 = vmatpush1.msra.mxu0 0.0
      %2932 = vmatprep.subr.mxu0 0.0
      %2933 = vmatpush1.msra.mxu0 0.0
      %2934 = vmatprep.subr.mxu0 0.0
      %2935 = vmatpush1.msra.mxu0 0.0
      %2936 = vmatprep.subr.mxu0 0.0
      %2937 = vmatpush1.msra.mxu0 0.0
      %2938 = vmatprep.subr.mxu0 0.0
      %2939 = vmatpush1.msra.mxu0 0.0
      %2940 = vmatprep.subr.mxu0 0.0
      %2941 = vmatpush1.msra.mxu0 0.0
      %2942 = vmatprep.subr.mxu0 0.0
      %2943 = vmatpush1.msra.mxu0 0.0
      %2944 = vmatprep.subr.mxu0 0.0
      %2945 = vmatpush1.msra.mxu0 0.0
      %2946 = vmatprep.subr.mxu0 0.0
      %2947 = vmatpush1.msra.mxu0 0.0
      %2948 = vmatprep.subr.mxu0 0.0
      %2949 = vmatpush1.msra.mxu0 0.0
      %2950 = vmatprep.subr.mxu0 0.0
      %2951 = vmatpush1.msra.mxu0 0.0
      %2952 = vmatprep.subr.mxu0 0.0
      %2953 = vmatpush1.msra.mxu0 0.0
      %2954 = vmatprep.subr.mxu0 0.0
      %2955 = vmatpush1.msra.mxu0 0.0
      %2956 = vmatprep.subr.mxu0 0.0
      %2957 = vmatpush1.msra.mxu0 0.0
      %2958 = vmatprep.subr.mxu0 0.0
      %2959 = vmatpush1.msra.mxu0 0.0
      %2960 = vmatprep.subr.mxu0 0.0
      %2961 = vmatpush1.msra.mxu0 0.0
      %2962 = vmatprep.subr.mxu0 0.0
      %2963 = vmatpush1.msra.mxu0 0.0
      %2964 = vmatprep.mubr.f32.mxu0 0.0
      %2965 = vmatmul.mubr.f32.gmra.mrb[0].mxu0 %v2892
      %v2966 = vpop.f32.mrb[0].mxu0
      %v2967 = vadd.f32 0.0, %v2966
      %v2968 = vpop.f32.mrb[0].mxu0
      %v2969 = vadd.f32 0.0, %v2968
      %2970 = vdwg.mxu0
      %2971 = vmatprep.subr.mxu0 0.0
      %2972 = vmatpush1.msra.mxu0 %v2898
      %2973 = vmatprep.subr.mxu0 0.0
      %2974 = vmatpush1.msra.mxu0 0.0
      %2975 = vmatprep.subr.mxu0 0.0
      %2976 = vmatpush1.msra.mxu0 0.0
      %2977 = vmatprep.subr.mxu0 0.0
      %2978 = vmatpush1.msra.mxu0 0.0
      %2979 = vmatprep.subr.mxu0 0.0
      %2980 = vmatpush1.msra.mxu0 0.0
      %2981 = vmatprep.subr.mxu0 0.0
      %2982 = vmatpush1.msra.mxu0 0.0
      %2983 = vmatprep.subr.mxu0 0.0
      %2984 = vmatpush1.msra.mxu0 0.0
      %2985 = vmatprep.subr.mxu0 0.0
      %2986 = vmatpush1.msra.mxu0 0.0
      %2987 = vmatprep.subr.mxu0 0.0
      %2988 = vmatpush1.msra.mxu0 0.0
      %2989 = vmatprep.subr.mxu0 0.0
      %2990 = vmatpush1.msra.mxu0 0.0
      %2991 = vmatprep.subr.mxu0 0.0
      %2992 = vmatpush1.msra.mxu0 0.0
      %2993 = vmatprep.subr.mxu0 0.0
      %2994 = vmatpush1.msra.mxu0 0.0
      %2995 = vmatprep.subr.mxu0 0.0
      %2996 = vmatpush1.msra.mxu0 0.0
      %2997 = vmatprep.subr.mxu0 0.0
      %2998 = vmatpush1.msra.mxu0 0.0
      %2999 = vmatprep.subr.mxu0 0.0
      %3000 = vmatpush1.msra.mxu0 0.0
      %3001 = vmatprep.subr.mxu0 0.0
      %3002 = vmatpush1.msra.mxu0 0.0
      %3003 = vmatprep.subr.mxu0 0.0
      %3004 = vmatpush1.msra.mxu0 0.0
      %3005 = vmatprep.subr.mxu0 0.0
      %3006 = vmatpush1.msra.mxu0 0.0
      %3007 = vmatprep.subr.mxu0 0.0
      %3008 = vmatpush1.msra.mxu0 0.0
      %3009 = vmatprep.subr.mxu0 0.0
      %3010 = vmatpush1.msra.mxu0 0.0
      %3011 = vmatprep.subr.mxu0 0.0
      %3012 = vmatpush1.msra.mxu0 0.0
      %3013 = vmatprep.subr.mxu0 0.0
      %3014 = vmatpush1.msra.mxu0 0.0
      %3015 = vmatprep.subr.mxu0 0.0
      %3016 = vmatpush1.msra.mxu0 0.0
      %3017 = vmatprep.subr.mxu0 0.0
      %3018 = vmatpush1.msra.mxu0 0.0
      %3019 = vmatprep.subr.mxu0 0.0
      %3020 = vmatpush1.msra.mxu0 0.0
      %3021 = vmatprep.subr.mxu0 0.0
      %3022 = vmatpush1.msra.mxu0 0.0
      %3023 = vmatprep.subr.mxu0 0.0
      %3024 = vmatpush1.msra.mxu0 0.0
      %3025 = vmatprep.subr.mxu0 0.0
      %3026 = vmatpush1.msra.mxu0 0.0
      %3027 = vmatprep.subr.mxu0 0.0
      %3028 = vmatpush1.msra.mxu0 0.0
      %3029 = vmatprep.subr.mxu0 0.0
      %3030 = vmatpush1.msra.mxu0 0.0
      %3031 = vmatprep.subr.mxu0 0.0
      %3032 = vmatpush1.msra.mxu0 0.0
      %3033 = vmatprep.subr.mxu0 0.0
      %3034 = vmatpush1.msra.mxu0 0.0
      %3035 = vmatprep.mubr.f32.mxu0 0.0
      %3036 = vmatmul.mubr.f32.gmra.mrb[0].mxu0 %v2892
      %v3037 = vpop.f32.mrb[0].mxu0
      %v3038 = vadd.f32 0.0, %v3037
      %v3039 = vpop.f32.mrb[0].mxu0
      %3040 = vdwg.mxu0
      %v3041 = vadd.f32 %v2873, %v2967
      %v3042 = vadd.f32 %v2874, %v2969
      %v3043 = vadd.f32 %v2875, %v3038
      %s3044 = scalar_lea.vmem %s2, 28
      %v3045 = vld [vmem:[%s3044] sm:$0xf]
      %v3046 = vld [vmem:[#allocation2] sm:$0xff]
      %v3047 = vld [vmem:[#allocation2 + $0x8] sm:$0xf]
      %v3050 = vcombine.high %v3046, %v3046
      %3051 = vrot.lane.b32.xlu0 %v3046, 91
      %v3052 = vpop.permute.xlu0 %3051
      %3053 = vrot.lane.b32.xlu0 %v3050, 91
      %v3054 = vpop.permute.xlu0 %3053
      %3055 = vrot.lane.b32.xlu0 %v3047, 91
      %v3056 = vpop.permute.xlu0 %3055
      %v3057 = vsel %vm1377, %v3052, %v3054
      %v3058 = vsel %vm1377, %v3054, %v3056
      %v3060 = vsel %vm217, %v3045, 0
      %v3062 = vsel %vm221, %v3057, 0
      %v3064 = vsel %vm221, %v3058, 0
      %v3066 = vsel %vm221, %v3056, 0
      %3068 = vmatprep.subr.mxu0 %v3064
      %3069 = vmatpush1.msra.mxu0 %v3062
      %3070 = vmatprep.subr.mxu0 0.0
      %3071 = vmatpush1.msra.mxu0 0.0
      %3072 = vmatprep.subr.mxu0 0.0
      %3073 = vmatpush1.msra.mxu0 0.0
      %3074 = vmatprep.subr.mxu0 0.0
      %3075 = vmatpush1.msra.mxu0 0.0
      %3076 = vmatprep.subr.mxu0 0.0
      %3077 = vmatpush1.msra.mxu0 0.0
      %3078 = vmatprep.subr.mxu0 0.0
      %3079 = vmatpush1.msra.mxu0 0.0
      %3080 = vmatprep.subr.mxu0 0.0
      %3081 = vmatpush1.msra.mxu0 0.0
      %3082 = vmatprep.subr.mxu0 0.0
      %3083 = vmatpush1.msra.mxu0 0.0
      %3084 = vmatprep.subr.mxu0 0.0
      %3085 = vmatpush1.msra.mxu0 0.0
      %3086 = vmatprep.subr.mxu0 0.0
      %3087 = vmatpush1.msra.mxu0 0.0
      %3088 = vmatprep.subr.mxu0 0.0
      %3089 = vmatpush1.msra.mxu0 0.0
      %3090 = vmatprep.subr.mxu0 0.0
      %3091 = vmatpush1.msra.mxu0 0.0
      %3092 = vmatprep.subr.mxu0 0.0
      %3093 = vmatpush1.msra.mxu0 0.0
      %3094 = vmatprep.subr.mxu0 0.0
      %3095 = vmatpush1.msra.mxu0 0.0
      %3096 = vmatprep.subr.mxu0 0.0
      %3097 = vmatpush1.msra.mxu0 0.0
      %3098 = vmatprep.subr.mxu0 0.0
      %3099 = vmatpush1.msra.mxu0 0.0
      %3100 = vmatprep.subr.mxu0 0.0
      %3101 = vmatpush1.msra.mxu0 0.0
      %3102 = vmatprep.subr.mxu0 0.0
      %3103 = vmatpush1.msra.mxu0 0.0
      %3104 = vmatprep.subr.mxu0 0.0
      %3105 = vmatpush1.msra.mxu0 0.0
      %3106 = vmatprep.subr.mxu0 0.0
      %3107 = vmatpush1.msra.mxu0 0.0
      %3108 = vmatprep.subr.mxu0 0.0
      %3109 = vmatpush1.msra.mxu0 0.0
      %3110 = vmatprep.subr.mxu0 0.0
      %3111 = vmatpush1.msra.mxu0 0.0
      %3112 = vmatprep.subr.mxu0 0.0
      %3113 = vmatpush1.msra.mxu0 0.0
      %3114 = vmatprep.subr.mxu0 0.0
      %3115 = vmatpush1.msra.mxu0 0.0
      %3116 = vmatprep.subr.mxu0 0.0
      %3117 = vmatpush1.msra.mxu0 0.0
      %3118 = vmatprep.subr.mxu0 0.0
      %3119 = vmatpush1.msra.mxu0 0.0
      %3120 = vmatprep.subr.mxu0 0.0
      %3121 = vmatpush1.msra.mxu0 0.0
      %3122 = vmatprep.subr.mxu0 0.0
      %3123 = vmatpush1.msra.mxu0 0.0
      %3124 = vmatprep.subr.mxu0 0.0
      %3125 = vmatpush1.msra.mxu0 0.0
      %3126 = vmatprep.subr.mxu0 0.0
      %3127 = vmatpush1.msra.mxu0 0.0
      %3128 = vmatprep.subr.mxu0 0.0
      %3129 = vmatpush1.msra.mxu0 0.0
      %3130 = vmatprep.subr.mxu0 0.0
      %3131 = vmatpush1.msra.mxu0 0.0
      %3132 = vmatprep.mubr.f32.mxu0 0.0
      %3133 = vmatmul.mubr.f32.gmra.mrb[0].mxu0 %v3060
      %v3134 = vpop.f32.mrb[0].mxu0
      %v3135 = vadd.f32 0.0, %v3134
      %v3136 = vpop.f32.mrb[0].mxu0
      %v3137 = vadd.f32 0.0, %v3136
      %3138 = vdwg.mxu0
      %3139 = vmatprep.subr.mxu0 0.0
      %3140 = vmatpush1.msra.mxu0 %v3066
      %3141 = vmatprep.subr.mxu0 0.0
      %3142 = vmatpush1.msra.mxu0 0.0
      %3143 = vmatprep.subr.mxu0 0.0
      %3144 = vmatpush1.msra.mxu0 0.0
      %3145 = vmatprep.subr.mxu0 0.0
      %3146 = vmatpush1.msra.mxu0 0.0
      %3147 = vmatprep.subr.mxu0 0.0
      %3148 = vmatpush1.msra.mxu0 0.0
      %3149 = vmatprep.subr.mxu0 0.0
      %3150 = vmatpush1.msra.mxu0 0.0
      %3151 = vmatprep.subr.mxu0 0.0
      %3152 = vmatpush1.msra.mxu0 0.0
      %3153 = vmatprep.subr.mxu0 0.0
      %3154 = vmatpush1.msra.mxu0 0.0
      %3155 = vmatprep.subr.mxu0 0.0
      %3156 = vmatpush1.msra.mxu0 0.0
      %3157 = vmatprep.subr.mxu0 0.0
      %3158 = vmatpush1.msra.mxu0 0.0
      %3159 = vmatprep.subr.mxu0 0.0
      %3160 = vmatpush1.msra.mxu0 0.0
      %3161 = vmatprep.subr.mxu0 0.0
      %3162 = vmatpush1.msra.mxu0 0.0
      %3163 = vmatprep.subr.mxu0 0.0
      %3164 = vmatpush1.msra.mxu0 0.0
      %3165 = vmatprep.subr.mxu0 0.0
      %3166 = vmatpush1.msra.mxu0 0.0
      %3167 = vmatprep.subr.mxu0 0.0
      %3168 = vmatpush1.msra.mxu0 0.0
      %3169 = vmatprep.subr.mxu0 0.0
      %3170 = vmatpush1.msra.mxu0 0.0
      %3171 = vmatprep.subr.mxu0 0.0
      %3172 = vmatpush1.msra.mxu0 0.0
      %3173 = vmatprep.subr.mxu0 0.0
      %3174 = vmatpush1.msra.mxu0 0.0
      %3175 = vmatprep.subr.mxu0 0.0
      %3176 = vmatpush1.msra.mxu0 0.0
      %3177 = vmatprep.subr.mxu0 0.0
      %3178 = vmatpush1.msra.mxu0 0.0
      %3179 = vmatprep.subr.mxu0 0.0
      %3180 = vmatpush1.msra.mxu0 0.0
      %3181 = vmatprep.subr.mxu0 0.0
      %3182 = vmatpush1.msra.mxu0 0.0
      %3183 = vmatprep.subr.mxu0 0.0
      %3184 = vmatpush1.msra.mxu0 0.0
      %3185 = vmatprep.subr.mxu0 0.0
      %3186 = vmatpush1.msra.mxu0 0.0
      %3187 = vmatprep.subr.mxu0 0.0
      %3188 = vmatpush1.msra.mxu0 0.0
      %3189 = vmatprep.subr.mxu0 0.0
      %3190 = vmatpush1.msra.mxu0 0.0
      %3191 = vmatprep.subr.mxu0 0.0
      %3192 = vmatpush1.msra.mxu0 0.0
      %3193 = vmatprep.subr.mxu0 0.0
      %3194 = vmatpush1.msra.mxu0 0.0
      %3195 = vmatprep.subr.mxu0 0.0
      %3196 = vmatpush1.msra.mxu0 0.0
      %3197 = vmatprep.subr.mxu0 0.0
      %3198 = vmatpush1.msra.mxu0 0.0
      %3199 = vmatprep.subr.mxu0 0.0
      %3200 = vmatpush1.msra.mxu0 0.0
      %3201 = vmatprep.subr.mxu0 0.0
      %3202 = vmatpush1.msra.mxu0 0.0
      %3203 = vmatprep.mubr.f32.mxu0 0.0
      %3204 = vmatmul.mubr.f32.gmra.mrb[0].mxu0 %v3060
      %v3205 = vpop.f32.mrb[0].mxu0
      %v3206 = vadd.f32 0.0, %v3205
      %v3207 = vpop.f32.mrb[0].mxu0
      %3208 = vdwg.mxu0
      %v3209 = vadd.f32 %v3041, %v3135
      %v3210 = vadd.f32 %v3042, %v3137
      %v3211 = vadd.f32 %v3043, %v3206
      %s3212 = scalar_lea.vmem %s2, 32
      %v3213 = vld [vmem:[%s3212] sm:$0xf]
      %v3214 = vld [vmem:[#allocation2] sm:$0xff]
      %v3215 = vld [vmem:[#allocation2 + $0x8] sm:$0xf]
      %v3218 = vcombine.high %v3214, %v3214
      %3219 = vrot.lane.b32.xlu0 %v3214, 90
      %v3220 = vpop.permute.xlu0 %3219
      %3221 = vrot.lane.b32.xlu0 %v3218, 90
      %v3222 = vpop.permute.xlu0 %3221
      %3223 = vrot.lane.b32.xlu0 %v3215, 90
      %v3224 = vpop.permute.xlu0 %3223
      %v3225 = vsel %vm1546, %v3220, %v3222
      %v3226 = vsel %vm1546, %v3222, %v3224
      %v3228 = vsel %vm217, %v3213, 0
      %v3230 = vsel %vm221, %v3225, 0
      %v3232 = vsel %vm221, %v3226, 0
      %v3234 = vsel %vm221, %v3224, 0
      %3236 = vmatprep.subr.mxu0 %v3232
      %3237 = vmatpush1.msra.mxu0 %v3230
      %3238 = vmatprep.subr.mxu0 0.0
      %3239 = vmatpush1.msra.mxu0 0.0
      %3240 = vmatprep.subr.mxu0 0.0
      %3241 = vmatpush1.msra.mxu0 0.0
      %3242 = vmatprep.subr.mxu0 0.0
      %3243 = vmatpush1.msra.mxu0 0.0
      %3244 = vmatprep.subr.mxu0 0.0
      %3245 = vmatpush1.msra.mxu0 0.0
      %3246 = vmatprep.subr.mxu0 0.0
      %3247 = vmatpush1.msra.mxu0 0.0
      %3248 = vmatprep.subr.mxu0 0.0
      %3249 = vmatpush1.msra.mxu0 0.0
      %3250 = vmatprep.subr.mxu0 0.0
      %3251 = vmatpush1.msra.mxu0 0.0
      %3252 = vmatprep.subr.mxu0 0.0
      %3253 = vmatpush1.msra.mxu0 0.0
      %3254 = vmatprep.subr.mxu0 0.0
      %3255 = vmatpush1.msra.mxu0 0.0
      %3256 = vmatprep.subr.mxu0 0.0
      %3257 = vmatpush1.msra.mxu0 0.0
      %3258 = vmatprep.subr.mxu0 0.0
      %3259 = vmatpush1.msra.mxu0 0.0
      %3260 = vmatprep.subr.mxu0 0.0
      %3261 = vmatpush1.msra.mxu0 0.0
      %3262 = vmatprep.subr.mxu0 0.0
      %3263 = vmatpush1.msra.mxu0 0.0
      %3264 = vmatprep.subr.mxu0 0.0
      %3265 = vmatpush1.msra.mxu0 0.0
      %3266 = vmatprep.subr.mxu0 0.0
      %3267 = vmatpush1.msra.mxu0 0.0
      %3268 = vmatprep.subr.mxu0 0.0
      %3269 = vmatpush1.msra.mxu0 0.0
      %3270 = vmatprep.subr.mxu0 0.0
      %3271 = vmatpush1.msra.mxu0 0.0
      %3272 = vmatprep.subr.mxu0 0.0
      %3273 = vmatpush1.msra.mxu0 0.0
      %3274 = vmatprep.subr.mxu0 0.0
      %3275 = vmatpush1.msra.mxu0 0.0
      %3276 = vmatprep.subr.mxu0 0.0
      %3277 = vmatpush1.msra.mxu0 0.0
      %3278 = vmatprep.subr.mxu0 0.0
      %3279 = vmatpush1.msra.mxu0 0.0
      %3280 = vmatprep.subr.mxu0 0.0
      %3281 = vmatpush1.msra.mxu0 0.0
      %3282 = vmatprep.subr.mxu0 0.0
      %3283 = vmatpush1.msra.mxu0 0.0
      %3284 = vmatprep.subr.mxu0 0.0
      %3285 = vmatpush1.msra.mxu0 0.0
      %3286 = vmatprep.subr.mxu0 0.0
      %3287 = vmatpush1.msra.mxu0 0.0
      %3288 = vmatprep.subr.mxu0 0.0
      %3289 = vmatpush1.msra.mxu0 0.0
      %3290 = vmatprep.subr.mxu0 0.0
      %3291 = vmatpush1.msra.mxu0 0.0
      %3292 = vmatprep.subr.mxu0 0.0
      %3293 = vmatpush1.msra.mxu0 0.0
      %3294 = vmatprep.subr.mxu0 0.0
      %3295 = vmatpush1.msra.mxu0 0.0
      %3296 = vmatprep.subr.mxu0 0.0
      %3297 = vmatpush1.msra.mxu0 0.0
      %3298 = vmatprep.subr.mxu0 0.0
      %3299 = vmatpush1.msra.mxu0 0.0
      %3300 = vmatprep.mubr.f32.mxu0 0.0
      %3301 = vmatmul.mubr.f32.gmra.mrb[0].mxu0 %v3228
      %v3302 = vpop.f32.mrb[0].mxu0
      %v3303 = vadd.f32 0.0, %v3302
      %v3304 = vpop.f32.mrb[0].mxu0
      %v3305 = vadd.f32 0.0, %v3304
      %3306 = vdwg.mxu0
      %3307 = vmatprep.subr.mxu0 0.0
      %3308 = vmatpush1.msra.mxu0 %v3234
      %3309 = vmatprep.subr.mxu0 0.0
      %3310 = vmatpush1.msra.mxu0 0.0
      %3311 = vmatprep.subr.mxu0 0.0
      %3312 = vmatpush1.msra.mxu0 0.0
      %3313 = vmatprep.subr.mxu0 0.0
      %3314 = vmatpush1.msra.mxu0 0.0
      %3315 = vmatprep.subr.mxu0 0.0
      %3316 = vmatpush1.msra.mxu0 0.0
      %3317 = vmatprep.subr.mxu0 0.0
      %3318 = vmatpush1.msra.mxu0 0.0
      %3319 = vmatprep.subr.mxu0 0.0
      %3320 = vmatpush1.msra.mxu0 0.0
      %3321 = vmatprep.subr.mxu0 0.0
      %3322 = vmatpush1.msra.mxu0 0.0
      %3323 = vmatprep.subr.mxu0 0.0
      %3324 = vmatpush1.msra.mxu0 0.0
      %3325 = vmatprep.subr.mxu0 0.0
      %3326 = vmatpush1.msra.mxu0 0.0
      %3327 = vmatprep.subr.mxu0 0.0
      %3328 = vmatpush1.msra.mxu0 0.0
      %3329 = vmatprep.subr.mxu0 0.0
      %3330 = vmatpush1.msra.mxu0 0.0
      %3331 = vmatprep.subr.mxu0 0.0
      %3332 = vmatpush1.msra.mxu0 0.0
      %3333 = vmatprep.subr.mxu0 0.0
      %3334 = vmatpush1.msra.mxu0 0.0
      %3335 = vmatprep.subr.mxu0 0.0
      %3336 = vmatpush1.msra.mxu0 0.0
      %3337 = vmatprep.subr.mxu0 0.0
      %3338 = vmatpush1.msra.mxu0 0.0
      %3339 = vmatprep.subr.mxu0 0.0
      %3340 = vmatpush1.msra.mxu0 0.0
      %3341 = vmatprep.subr.mxu0 0.0
      %3342 = vmatpush1.msra.mxu0 0.0
      %3343 = vmatprep.subr.mxu0 0.0
      %3344 = vmatpush1.msra.mxu0 0.0
      %3345 = vmatprep.subr.mxu0 0.0
      %3346 = vmatpush1.msra.mxu0 0.0
      %3347 = vmatprep.subr.mxu0 0.0
      %3348 = vmatpush1.msra.mxu0 0.0
      %3349 = vmatprep.subr.mxu0 0.0
      %3350 = vmatpush1.msra.mxu0 0.0
      %3351 = vmatprep.subr.mxu0 0.0
      %3352 = vmatpush1.msra.mxu0 0.0
      %3353 = vmatprep.subr.mxu0 0.0
      %3354 = vmatpush1.msra.mxu0 0.0
      %3355 = vmatprep.subr.mxu0 0.0
      %3356 = vmatpush1.msra.mxu0 0.0
      %3357 = vmatprep.subr.mxu0 0.0
      %3358 = vmatpush1.msra.mxu0 0.0
      %3359 = vmatprep.subr.mxu0 0.0
      %3360 = vmatpush1.msra.mxu0 0.0
      %3361 = vmatprep.subr.mxu0 0.0
      %3362 = vmatpush1.msra.mxu0 0.0
      %3363 = vmatprep.subr.mxu0 0.0
      %3364 = vmatpush1.msra.mxu0 0.0
      %3365 = vmatprep.subr.mxu0 0.0
      %3366 = vmatpush1.msra.mxu0 0.0
      %3367 = vmatprep.subr.mxu0 0.0
      %3368 = vmatpush1.msra.mxu0 0.0
      %3369 = vmatprep.subr.mxu0 0.0
      %3370 = vmatpush1.msra.mxu0 0.0
      %3371 = vmatprep.mubr.f32.mxu0 0.0
      %3372 = vmatmul.mubr.f32.gmra.mrb[0].mxu0 %v3228
      %v3373 = vpop.f32.mrb[0].mxu0
      %v3374 = vadd.f32 0.0, %v3373
      %v3375 = vpop.f32.mrb[0].mxu0
      %3376 = vdwg.mxu0
      %v3377 = vadd.f32 %v3209, %v3303
      %v3378 = vadd.f32 %v3210, %v3305
      %v3379 = vadd.f32 %v3211, %v3374
      %v3380 = vsel %vm1715, %v3377, 0.0
      %v3381 = vsel %vm1716, %v3378, 0.0
      %v3382 = vsel %vm1717, %v3379, 0.0
      %v3383 = vsel %vm221, %v3380, 0.0
      %v3384 = vsel %vm221, %v3381, 0.0
      %v3385 = vadd.f32 %v3383, %v3384
      %v3386 = vsel %vm1724, %v3382, 0.0
      %v3387 = vadd.f32 %v3385, %v3386
      %3388 = vadd.xlane.f32.xlu0 %v3387
      %v3389 = vpop.xlane.xlu0 %3388
      %v3390 = vmul.f32 %v3380, %v3380
      %v3391 = vmul.f32 %v3381, %v3381
      %v3392 = vmul.f32 %v3382, %v3382
      %v3393 = vsel %vm221, %v3390, 0.0
      %v3394 = vsel %vm221, %v3391, 0.0
      %v3395 = vadd.f32 %v3393, %v3394
      %v3396 = vsel %vm1724, %v3392, 0.0
      %v3397 = vadd.f32 %v3395, %v3396
      %3398 = vadd.xlane.f32.xlu0 %v3397
      %v3399 = vpop.xlane.xlu0 %3398
      %v3400 = vmul.f32 %v3389, 0.00390625
      %v3401 = vmul.f32 %v3399, 0.00390625
      %v3402 = vmul.f32 %v3400, %v3400
      %v3403 = vsub.f32 %v3401, %v3402
      %v3404 = vsub.f32 %v3377, %v3400
      %v3405 = vsub.f32 %v3378, %v3400
      %v3406 = vsub.f32 %v3379, %v3400
      %v3407 = vadd.f32 %v3403, 1e-05
      %v3408 = vrsqrt.pop %v3407
      %v3409 = vmul.f32 %v3404, %v3408
      %v3410 = vmul.f32 %v3405, %v3408
      %v3411 = vmul.f32 %v3406, %v3408
      %v3412 = vld [vmem:[%s192] sm:$0xff]
      %v3413 = vld [vmem:[%s192 + $0x8] sm:$0xf]
      %v3417 = vcombine.low %v3409, %v3410
      %3418 = vrot.lane.b32.xlu0 %v3417, 19
      %v3419 = vpop.permute.xlu0 %3418
      %3420 = vrot.lane.b32.xlu0 %v3411, 19
      %v3421 = vpop.permute.xlu0 %3420
      %v3422 = vrot.slane %v3419, 4
      %v3423 = vsel %vm1765, %v3422, %v3419
      %v3424 = vsel %vm1765, %v3422, %v3421
      %v3427 = vadd.f32 %v3412, %v3423
      %v3428 = vadd.f32 %v3413, %v3424
      %3431 = vrot.lane.b32.xlu0 %v3427, 109
      %v3432 = vpop.permute.xlu0 %3431
      %3433 = vrot.lane.b32.xlu0 %v3428, 109
      %v3434 = vpop.permute.xlu0 %3433
      %v3435 = vrot.slane %v3432, 4
      %v3436 = vrot.slane %v3434, 4
      %v3437 = vsel %vm221, %v3435, %v3436
      %v3438 = vsel %vm870, %v3432, %v3437
      %3441 = vst [vmem:[%s197] sm:$0xff] %v3438
      %3442 = vst.msk [vmem:[%s197 + $0x8] sm:$0xf] %vm1724, %v3434
      %p3443 = scmp.lt.s32.totalorder %s15, 1
      %s3444 = scalar_select %p3443, %s15, 1
      %s3445 = smul.addr %s3444, 3
      %s3446 = smul.addr %s3445, 4
      %s3447 = scalar_lea.vmem %s4, %s3446
      // Predicated region
      $region37: #{residual_block.1} parent=35 // pred_check
        %p3448 = pneg %p122
      $region38: #{residual_block.1} parent=35 // pred_check_branch
        %3450 = sbr.rel (%p3448) target = $region40
      $region39: #{residual_block.1} parent=35 // pred_region
        _
      $region40: #{residual_block.1} parent=35 // pred_fallthru
        _
    $region36: #{residual_block.1} parent=5 // pred_fallthru
      _
    %p3451 = scmp.le.s32.totalorder 2, %s10
    // Predicated region
    $region41: #{residual_block.1} parent=5 // pred_check
      %p3452 = pneg %p3451
    $region42: #{residual_block.1} parent=5 // pred_check_branch
      %3454 = sbr.rel (%p3452) target = $region44
    $region43: #{residual_block.1} parent=5 // pred_region
      %s3455 = ssub.s32 %s10, 2
      // Predicated region
      $region45: #{residual_block.1} parent=43 // pred_check
        %p3456 = pneg %p128
      $region46: #{residual_block.1} parent=43 // pred_check_branch
        %3458 = sbr.rel (%p3456) target = $region48
      $region47: #{residual_block.1} parent=43 // pred_region
        %p3459 = scmp.lt.s32.totalorder %s16, 1
        %s3460 = scalar_select %p3459, %s16, 1
        %s3461 = smul.addr %s3460, 3
        %s3462 = smul.addr %s3461, 4
        %s3463 = scalar_lea.vmem %s4, %s3462
      $region48: #{residual_block.1} parent=43 // pred_fallthru
        _
    $region44: #{residual_block.1} parent=5 // pred_fallthru
      _
  $region6: #{residual_block.1} parent=0 // loop_footer
    %s14 = sadd.s32 1, %s10
  $region7: #{residual_block.1} parent=0 // loop_footer_branch
    %9 = sbr.rel target = $region3
  $region8: #{residual_block.1} parent=0 // loop_exit
    _

</llo_original>
